<compile_context>
chip_gen: v6e
topology: v6e:2x2x1
jax: 0.10.0
libtpu: 0.0.40
codegen_flags: <defaults>
</compile_context>

<pallas_src>
import functools
import jax
import jax.numpy as jnp
from jax import lax
from jax.experimental import pallas as pl
from jax.experimental.pallas import tpu as pltpu


# ----------------------------------------------------------------------------
# Fused per-chunk kernel: graph construction + AKGCN + HIGRU
# ----------------------------------------------------------------------------
def _dakgnn_kernel(x_ref, gx_ref, wstack_ref, btile_ref, rf_ref, rft_ref, mf_ref,
                   wih_ref, bih_ref, whh_ref, bhh_ref, wo_ref, bo_ref,
                   out_ref, gi_ref, *, bandwidth, K, hid):
    f32 = jnp.float32
    bf16 = jnp.bfloat16
    Bc, T, NF = x_ref.shape
    N = gx_ref.shape[1]

    # ---- hoisted grid-invariant loads / constants ----
    rf = rf_ref[...]                                   # (NF, N)
    rft = rft_ref[...]                                 # (N, NF)
    mf = mf_ref[...]                                   # (NF, NF)
    eye = (lax.broadcasted_iota(jnp.int32, (N, N), 0) ==
           lax.broadcasted_iota(jnp.int32, (N, N), 1)).astype(f32)
    inv_bw = -1.0 / bandwidth

    # ---- per example: graph construction + K-hop propagation (chunk loop) ----
    zcat_list = []
    for e in range(Bc):                                # static, small chunk
        gx = gx_ref[e].astype(f32)                     # (N, F)
        # Gaussian-kernel adjacency, row-normalised
        gram = lax.dot_general(gx, gx, (((1,), (1,)), ((), ())),   # gx @ gx.T
                               preferred_element_type=f32)         # (N, N)
        diag = gram * eye
        sq_col = jnp.sum(diag, axis=-1, keepdims=True)             # ||x_i||^2 (N,1)
        sq_row = jnp.sum(diag, axis=-2, keepdims=True)             # ||x_j||^2 (1,N)
        d2 = jnp.maximum(sq_col + sq_row - 2.0 * gram, 0.0)
        a = jnp.exp(d2 * inv_bw)                                   # diag == 1 (self loop)
        adj = a * pl.reciprocal(jnp.sum(a, axis=-1, keepdims=True), approx=True)

        # Bbig = kron(adj^T, I_F) = (R @ adj^T @ R^T) * M   (no in-kernel reshapes)
        rfa = lax.dot_general(rf, adj, (((1,), (1,)), ((), ())),   # rf @ adj^T -> (NF, N)
                              preferred_element_type=f32)
        bbig = jnp.dot(rfa, rft, preferred_element_type=f32) * mf  # (NF, NF)

        # K-hop states in packed (T, NF) layout; z @ bbig == A @ X_t per time step
        z = x_ref[e].astype(f32)                                   # (T, NF)
        hops = [z]
        for _ in range(1, K):
            z = jnp.dot(z, bbig, preferred_element_type=f32)
            hops.append(z)
        zcat_list.append(jnp.concatenate(hops, axis=-1))           # (T, K*NF)

    zcat = zcat_list[0] if Bc == 1 else jnp.concatenate(zcat_list, axis=0)  # (Bc*T, K*NF)

    # ---- AKGCN projection + GRU gate-input projection, batched over the chunk ----
    seq = jnp.maximum(
        jnp.dot(zcat.astype(bf16), wstack_ref[...], preferred_element_type=f32)
        + btile_ref[...], 0.0)                                     # (Bc*T, N*O) ReLU
    gi = jnp.dot(seq.astype(bf16), wih_ref[...],
                 preferred_element_type=f32) + bih_ref[...]        # (Bc*T, 3H)
    for e in range(Bc):
        gi_ref[e] = gi[e * T:(e + 1) * T, :]                       # (T, 3H) per example

    # ---- HIGRU recurrence, batched over the chunk (state is (Bc, H)) ----
    whh = whh_ref[...]                                             # (H, 3H)
    bhh = bhh_ref[...]                                             # (1, 3H) hoisted
    h = jnp.zeros((Bc, hid), f32)
    for t in range(T):                                 # static small T; use fori_loop for large T
        gi_t = gi_ref[:, t, :]                                     # (Bc, 3H)
        gh = jnp.dot(h, whh, preferred_element_type=f32) + bhh     # (Bc, 3H)
        r = jax.nn.sigmoid(gi_t[:, 0:hid] + gh[:, 0:hid])
        zg = jax.nn.sigmoid(gi_t[:, hid:2 * hid] + gh[:, hid:2 * hid])
        n = jnp.tanh(gi_t[:, 2 * hid:3 * hid] + r * gh[:, 2 * hid:3 * hid])
        h = (1.0 - zg) * n + zg * h

    # ---- output head: one (Bc, H) @ (H, Ho) + one (Bc, Ho) store per step ----
    out = jnp.dot(h, wo_ref[...], preferred_element_type=f32) + bo_ref[...]
    out_ref[...] = out.astype(out_ref.dtype)


# ----------------------------------------------------------------------------
# Wrapper: layout plumbing in plain JAX, one fused pallas_call, grid=(B//Bc,)
# ----------------------------------------------------------------------------
def dakgnn_forward(x, params, bandwidth, chunk=None):
    B, T, N, F = x.shape
    K, _, O = params["gcn_w"].shape
    H = params["whh"].shape[0]
    Ho = params["wo"].shape[1]
    NF, NO = N * F, N * O

    f32 = jnp.float32
    bf16 = jnp.bfloat16

    if chunk is None:
        # Even grid length of 2 keeps both v7x TensorCores busy; on single-TC
        # chips (v5e/v6e) pass chunk=B to collapse to a single grid step.
        chunk = B // 2 if (B % 2 == 0 and B >= 2) else B
    assert B % chunk == 0
    n_chunks = B // chunk

    x_flat = x.reshape(B, T, NF).astype(f32)                       # (B, T, N*F)
    gx = x[:, T // 2, :, :].astype(f32)                            # (B, N, F)

    eye_n = jnp.eye(N, dtype=f32)
    # stacked kron(I_N, W_k): one (K*NF, NO) projection for all hops (bf16 MXU operand)
    wstack = jnp.concatenate(
        [jnp.kron(eye_n, params["gcn_w"][k].astype(f32)) for k in range(K)],
        axis=0).astype(bf16)                                       # (K*NF, NO)
    b_tile = jnp.tile(params["gcn_b"].astype(f32), N)[None, :]     # (1, NO)
    # static helpers so kron(adj^T, I_F) is built in-kernel with matmuls only
    rf = jnp.kron(eye_n, jnp.ones((F, 1), f32))                    # (NF, N)
    rft = rf.T                                                     # (N, NF)
    mf = jnp.kron(jnp.ones((N, N), f32), jnp.eye(F, dtype=f32))    # (NF, NF)

    wih = params["wih"].astype(bf16)                               # (NO, 3H) packed [r|z|n]
    bih = params["bih"].astype(f32)[None, :]                       # (1, 3H)
    whh = params["whh"].astype(f32)                                # (H, 3H)
    bhh = params["bhh"].astype(f32)[None, :]                       # (1, 3H)
    wo = params["wo"].astype(f32)                                  # (H, Ho)
    bo = params["bo"].astype(f32)[None, :]                         # (1, Ho)

    flops = int(B * (2 * N * N * F + 2 * NF * N * N + 2 * NF * NF * N
                     + 2 * (K - 1) * T * NF * NF + 2 * T * K * NF * NO
                     + 2 * T * NO * 3 * H + 2 * T * H * 3 * H + 2 * H * Ho))
    bytes_accessed = int((x_flat.size + gx.size) * 4 + wstack.size * 2 + wih.size * 2
                         + (mf.size + rf.size + rft.size + b_tile.size + whh.size
                            + bhh.size + bih.size + wo.size + bo.size) * 4 + B * Ho * 4)
    cost = pl.CostEstimate(flops=flops,
                           transcendentals=int(B * (N * N + 3 * T * 3 * H)),
                           bytes_accessed=bytes_accessed)

    kernel = functools.partial(_dakgnn_kernel, bandwidth=float(bandwidth), K=K, hid=H)
    out = pl.pallas_call(
        kernel,
        out_shape=jax.ShapeDtypeStruct((n_chunks, chunk, Ho), jnp.float32),
        grid=(n_chunks,),
        in_specs=[
            pl.BlockSpec((chunk, T, NF), lambda c: (c, 0, 0)),     # x packed (Bc, T, N*F)
            pl.BlockSpec((chunk, N, F), lambda c: (c, 0, 0)),      # graph slice x[:, T//2]
            pl.BlockSpec((K * NF, NO), lambda c: (0, 0)),          # stacked kron(I_N, W_k)
            pl.BlockSpec((1, NO), lambda c: (0, 0)),               # tiled gcn bias
            pl.BlockSpec((NF, N), lambda c: (0, 0)),               # R
            pl.BlockSpec((N, NF), lambda c: (0, 0)),               # R^T
            pl.BlockSpec((NF, NF), lambda c: (0, 0)),              # kron mask
            pl.BlockSpec((NO, 3 * H), lambda c: (0, 0)),           # Wih (packed gates)
            pl.BlockSpec((1, 3 * H), lambda c: (0, 0)),            # bih
            pl.BlockSpec((H, 3 * H), lambda c: (0, 0)),            # Whh (packed gates)
            pl.BlockSpec((1, 3 * H), lambda c: (0, 0)),            # bhh
            pl.BlockSpec((H, Ho), lambda c: (0, 0)),               # output head W
            pl.BlockSpec((1, Ho), lambda c: (0, 0)),               # output head b
        ],
        out_specs=pl.BlockSpec((None, chunk, Ho), lambda c: (c, 0, 0)),
        scratch_shapes=[pltpu.VMEM((chunk, T, 3 * H), jnp.float32)],
        compiler_params=pltpu.CompilerParams(dimension_semantics=("parallel",)),
        cost_estimate=cost,
    )(x_flat, gx, wstack, b_tile, rf, rft, mf, wih, bih, whh, bhh, wo, bo)
    return out.reshape(B, Ho)


def init_params(key, K, in_dim, out_dim, num_nodes, higru_hid, higru_out):
    D = num_nodes * out_dim
    ks = jax.random.split(key, 4)
    return dict(
        gcn_w=0.1 * jax.random.normal(ks[0], (K, in_dim, out_dim), jnp.float32),
        gcn_b=jnp.zeros((out_dim,), jnp.float32),
        wih=0.1 * jax.random.normal(ks[1], (D, 3 * higru_hid), jnp.float32),   # gates [r|z|n]
        whh=0.1 * jax.random.normal(ks[2], (higru_hid, 3 * higru_hid), jnp.float32),
        bih=jnp.zeros((3 * higru_hid,), jnp.float32),
        bhh=jnp.zeros((3 * higru_hid,), jnp.float32),
        wo=0.1 * jax.random.normal(ks[3], (higru_hid, higru_out), jnp.float32),
        bo=jnp.zeros((higru_out,), jnp.float32),
    )


if __name__ == "__main__":
    # DAKGNN hyperparams
    bandwidth = 1.0
    K = 3
    in_dim = 4
    out_dim = 8
    num_of_nodes = 16        # N*out_dim = 128 -> lane-dense GRU input
    higru_hid = 16
    higru_out = 4

    B, T = 4, 8              # B=4 -> chunk=2, grid=(2,): exercises chunking + even grid
    key = jax.random.PRNGKey(0)
    kx, kp = jax.random.split(key)
    x = jax.random.normal(kx, (B, T, num_of_nodes, in_dim), jnp.float32)
    params = init_params(kp, K, in_dim, out_dim, num_of_nodes, higru_hid, higru_out)

    out = dakgnn_forward(x, params, bandwidth)
    jax.block_until_ready(out)
    assert out.shape == (B, higru_out)
    print("KERNEL_OK")
</pallas_src>

<mosaic_0001>
module attributes {stable_mosaic.version = 11 : i64} {
  func.func @_dakgnn_kernel(%arg0: i32, %arg1: memref<2x8x64xf32, #tpu.memory_space<vmem>>, %arg2: memref<2x16x4xf32, #tpu.memory_space<vmem>>, %arg3: memref<192x128xbf16, #tpu.memory_space<vmem>>, %arg4: memref<1x128xf32, #tpu.memory_space<vmem>>, %arg5: memref<64x16xf32, #tpu.memory_space<vmem>>, %arg6: memref<16x64xf32, #tpu.memory_space<vmem>>, %arg7: memref<64x64xf32, #tpu.memory_space<vmem>>, %arg8: memref<128x48xbf16, #tpu.memory_space<vmem>>, %arg9: memref<1x48xf32, #tpu.memory_space<vmem>>, %arg10: memref<16x48xf32, #tpu.memory_space<vmem>>, %arg11: memref<1x48xf32, #tpu.memory_space<vmem>>, %arg12: memref<16x4xf32, #tpu.memory_space<vmem>>, %arg13: memref<1x4xf32, #tpu.memory_space<vmem>>, %arg14: memref<1x2x4xf32, #tpu.memory_space<vmem>>, %arg15: memref<2x8x48xf32, #tpu.memory_space<vmem>>) attributes {dimension_semantics = [#tpu.dimension_semantics<parallel>], iteration_bounds = array<i64: 2>, scalar_prefetch = 0 : i64, scratch_operands = 1 : i64, tpu.core_type = #tpu.core_type<tc>, window_params = [{transform_indices = @transform_0, window_bounds = array<i64: 2, 8, 64>}, {transform_indices = @transform_1, window_bounds = array<i64: 2, 16, 4>}, {pipeline_mode = #tpu.pipeline_mode<synchronous>, transform_indices = @transform_2, window_bounds = array<i64: 192, 128>}, {pipeline_mode = #tpu.pipeline_mode<synchronous>, transform_indices = @transform_3, window_bounds = array<i64: 1, 128>}, {pipeline_mode = #tpu.pipeline_mode<synchronous>, transform_indices = @transform_4, window_bounds = array<i64: 64, 16>}, {pipeline_mode = #tpu.pipeline_mode<synchronous>, transform_indices = @transform_5, window_bounds = array<i64: 16, 64>}, {pipeline_mode = #tpu.pipeline_mode<synchronous>, transform_indices = @transform_6, window_bounds = array<i64: 64, 64>}, {pipeline_mode = #tpu.pipeline_mode<synchronous>, transform_indices = @transform_7, window_bounds = array<i64: 128, 48>}, {pipeline_mode = #tpu.pipeline_mode<synchronous>, transform_indices = @transform_8, window_bounds = array<i64: 1, 48>}, {pipeline_mode = #tpu.pipeline_mode<synchronous>, transform_indices = @transform_9, window_bounds = array<i64: 16, 48>}, {pipeline_mode = #tpu.pipeline_mode<synchronous>, transform_indices = @transform_10, window_bounds = array<i64: 1, 48>}, {pipeline_mode = #tpu.pipeline_mode<synchronous>, transform_indices = @transform_11, window_bounds = array<i64: 16, 4>}, {pipeline_mode = #tpu.pipeline_mode<synchronous>, transform_indices = @transform_12, window_bounds = array<i64: 1, 4>}, {transform_indices = @transform_13, window_bounds = array<i64: 1, 2, 4>}]} {
    %c0 = arith.constant 0 : index
    %c0_0 = arith.constant 0 : index
    %0 = vector.load %arg5[%c0, %c0_0] : memref<64x16xf32, #tpu.memory_space<vmem>>, vector<64x16xf32>
    %c0_1 = arith.constant 0 : index
    %c0_2 = arith.constant 0 : index
    %1 = vector.load %arg6[%c0_1, %c0_2] : memref<16x64xf32, #tpu.memory_space<vmem>>, vector<16x64xf32>
    %c0_3 = arith.constant 0 : index
    %c0_4 = arith.constant 0 : index
    %2 = vector.load %arg7[%c0_3, %c0_4] : memref<64x64xf32, #tpu.memory_space<vmem>>, vector<64x64xf32>
    %3 = tpu.iota {dimensions = array<i32: 0>} : vector<16x16xi32>
    %4 = tpu.iota {dimensions = array<i32: 1>} : vector<16x16xi32>
    %5 = arith.cmpi eq, %3, %4 : vector<16x16xi32>
    %6 = arith.extui %5 : vector<16x16xi1> to vector<16x16xi32>
    %7 = arith.sitofp %6 : vector<16x16xi32> to vector<16x16xf32>
    %c0_5 = arith.constant 0 : index
    %c0_6 = arith.constant 0 : index
    %c0_7 = arith.constant 0 : index
    %8 = vector.load %arg2[%c0_5, %c0_6, %c0_7] : memref<2x16x4xf32, #tpu.memory_space<vmem>>, vector<1x16x4xf32>
    %9 = vector.shape_cast %8 : vector<1x16x4xf32> to vector<16x4xf32>
    %cst = arith.constant dense<0.000000e+00> : vector<16x16xf32>
    %10 = tpu.matmul %9, %9, %cst {dimension_numbers = #tpu.dot_dimension_numbers<[1], [1], [0], [0], [0, 0, 1, 0], [], []>} : vector<16x4xf32>, vector<16x4xf32>, vector<16x16xf32> -> vector<16x16xf32>
    %11 = arith.mulf %10, %7 : vector<16x16xf32>
    %cst_8 = arith.constant dense<0.000000e+00> : vector<16xf32>
    %12 = vector.multi_reduction <add>, %11, %cst_8 [1] : vector<16x16xf32> to vector<16xf32>
    %13 = vector.shape_cast %12 : vector<16xf32> to vector<16x1xf32>
    %cst_9 = arith.constant dense<0.000000e+00> : vector<16xf32>
    %14 = vector.multi_reduction <add>, %11, %cst_9 [0] : vector<16x16xf32> to vector<16xf32>
    %15 = vector.shape_cast %14 : vector<16xf32> to vector<1x16xf32>
    %16 = vector.broadcast %13 : vector<16x1xf32> to vector<16x16xf32>
    %17 = vector.broadcast %15 : vector<1x16xf32> to vector<16x16xf32>
    %18 = arith.addf %16, %17 : vector<16x16xf32>
    %cst_10 = arith.constant 2.000000e+00 : f32
    %19 = vector.broadcast %cst_10 : f32 to vector<16x16xf32>
    %20 = arith.mulf %19, %10 : vector<16x16xf32>
    %21 = arith.subf %18, %20 : vector<16x16xf32>
    %cst_11 = arith.constant 0.000000e+00 : f32
    %22 = vector.broadcast %cst_11 : f32 to vector<16x16xf32>
    %23 = arith.maximumf %21, %22 : vector<16x16xf32>
    %cst_12 = arith.constant -1.000000e+00 : f32
    %24 = vector.broadcast %cst_12 : f32 to vector<16x16xf32>
    %25 = arith.mulf %23, %24 : vector<16x16xf32>
    %26 = math.exp %25 : vector<16x16xf32>
    %cst_13 = arith.constant dense<0.000000e+00> : vector<16xf32>
    %27 = vector.multi_reduction <add>, %26, %cst_13 [1] : vector<16x16xf32> to vector<16xf32>
    %28 = vector.shape_cast %27 : vector<16xf32> to vector<16x1xf32>
    %29 = tpu.reciprocal %28 {approx = true} : vector<16x1xf32> -> vector<16x1xf32>
    %30 = vector.broadcast %29 : vector<16x1xf32> to vector<16x16xf32>
    %31 = arith.mulf %26, %30 : vector<16x16xf32>
    %cst_14 = arith.constant dense<0.000000e+00> : vector<64x16xf32>
    %32 = tpu.matmul %0, %31, %cst_14 {dimension_numbers = #tpu.dot_dimension_numbers<[1], [1], [0], [0], [0, 0, 1, 0], [], []>} : vector<64x16xf32>, vector<16x16xf32>, vector<64x16xf32> -> vector<64x16xf32>
    %cst_15 = arith.constant dense<0.000000e+00> : vector<64x64xf32>
    %33 = tpu.matmul %32, %1, %cst_15 {dimension_numbers = #tpu.dot_dimension_numbers<[1], [0], [0], [1], [0, 0, 1, 1], [], []>} : vector<64x16xf32>, vector<16x64xf32>, vector<64x64xf32> -> vector<64x64xf32>
    %34 = arith.mulf %33, %2 : vector<64x64xf32>
    %c0_16 = arith.constant 0 : index
    %c0_17 = arith.constant 0 : index
    %c0_18 = arith.constant 0 : index
    %35 = vector.load %arg1[%c0_16, %c0_17, %c0_18] : memref<2x8x64xf32, #tpu.memory_space<vmem>>, vector<1x8x64xf32>
    %36 = vector.shape_cast %35 : vector<1x8x64xf32> to vector<8x64xf32>
    %cst_19 = arith.constant dense<0.000000e+00> : vector<8x64xf32>
    %37 = tpu.matmul %36, %34, %cst_19 {dimension_numbers = #tpu.dot_dimension_numbers<[1], [0], [0], [1], [0, 0, 1, 1], [], []>} : vector<8x64xf32>, vector<64x64xf32>, vector<8x64xf32> -> vector<8x64xf32>
    %cst_20 = arith.constant dense<0.000000e+00> : vector<8x64xf32>
    %38 = tpu.matmul %37, %34, %cst_20 {dimension_numbers = #tpu.dot_dimension_numbers<[1], [0], [0], [1], [0, 0, 1, 1], [], []>} : vector<8x64xf32>, vector<64x64xf32>, vector<8x64xf32> -> vector<8x64xf32>
    %39 = tpu.concatenate %36, %37, %38 in 1 : vector<8x64xf32>, vector<8x64xf32>, vector<8x64xf32> -> vector<8x192xf32>
    %c1 = arith.constant 1 : index
    %c0_21 = arith.constant 0 : index
    %c0_22 = arith.constant 0 : index
    %40 = vector.load %arg2[%c1, %c0_21, %c0_22] : memref<2x16x4xf32, #tpu.memory_space<vmem>>, vector<1x16x4xf32>
    %41 = vector.shape_cast %40 : vector<1x16x4xf32> to vector<16x4xf32>
    %cst_23 = arith.constant dense<0.000000e+00> : vector<16x16xf32>
    %42 = tpu.matmul %41, %41, %cst_23 {dimension_numbers = #tpu.dot_dimension_numbers<[1], [1], [0], [0], [0, 0, 1, 0], [], []>} : vector<16x4xf32>, vector<16x4xf32>, vector<16x16xf32> -> vector<16x16xf32>
    %43 = arith.mulf %42, %7 : vector<16x16xf32>
    %cst_24 = arith.constant dense<0.000000e+00> : vector<16xf32>
    %44 = vector.multi_reduction <add>, %43, %cst_24 [1] : vector<16x16xf32> to vector<16xf32>
    %45 = vector.shape_cast %44 : vector<16xf32> to vector<16x1xf32>
    %cst_25 = arith.constant dense<0.000000e+00> : vector<16xf32>
    %46 = vector.multi_reduction <add>, %43, %cst_25 [0] : vector<16x16xf32> to vector<16xf32>
    %47 = vector.shape_cast %46 : vector<16xf32> to vector<1x16xf32>
    %48 = vector.broadcast %45 : vector<16x1xf32> to vector<16x16xf32>
    %49 = vector.broadcast %47 : vector<1x16xf32> to vector<16x16xf32>
    %50 = arith.addf %48, %49 : vector<16x16xf32>
    %cst_26 = arith.constant 2.000000e+00 : f32
    %51 = vector.broadcast %cst_26 : f32 to vector<16x16xf32>
    %52 = arith.mulf %51, %42 : vector<16x16xf32>
    %53 = arith.subf %50, %52 : vector<16x16xf32>
    %cst_27 = arith.constant 0.000000e+00 : f32
    %54 = vector.broadcast %cst_27 : f32 to vector<16x16xf32>
    %55 = arith.maximumf %53, %54 : vector<16x16xf32>
    %cst_28 = arith.constant -1.000000e+00 : f32
    %56 = vector.broadcast %cst_28 : f32 to vector<16x16xf32>
    %57 = arith.mulf %55, %56 : vector<16x16xf32>
    %58 = math.exp %57 : vector<16x16xf32>
    %cst_29 = arith.constant dense<0.000000e+00> : vector<16xf32>
    %59 = vector.multi_reduction <add>, %58, %cst_29 [1] : vector<16x16xf32> to vector<16xf32>
    %60 = vector.shape_cast %59 : vector<16xf32> to vector<16x1xf32>
    %61 = tpu.reciprocal %60 {approx = true} : vector<16x1xf32> -> vector<16x1xf32>
    %62 = vector.broadcast %61 : vector<16x1xf32> to vector<16x16xf32>
    %63 = arith.mulf %58, %62 : vector<16x16xf32>
    %cst_30 = arith.constant dense<0.000000e+00> : vector<64x16xf32>
    %64 = tpu.matmul %0, %63, %cst_30 {dimension_numbers = #tpu.dot_dimension_numbers<[1], [1], [0], [0], [0, 0, 1, 0], [], []>} : vector<64x16xf32>, vector<16x16xf32>, vector<64x16xf32> -> vector<64x16xf32>
    %cst_31 = arith.constant dense<0.000000e+00> : vector<64x64xf32>
    %65 = tpu.matmul %64, %1, %cst_31 {dimension_numbers = #tpu.dot_dimension_numbers<[1], [0], [0], [1], [0, 0, 1, 1], [], []>} : vector<64x16xf32>, vector<16x64xf32>, vector<64x64xf32> -> vector<64x64xf32>
    %66 = arith.mulf %65, %2 : vector<64x64xf32>
    %c1_32 = arith.constant 1 : index
    %c0_33 = arith.constant 0 : index
    %c0_34 = arith.constant 0 : index
    %67 = vector.load %arg1[%c1_32, %c0_33, %c0_34] : memref<2x8x64xf32, #tpu.memory_space<vmem>>, vector<1x8x64xf32>
    %68 = vector.shape_cast %67 : vector<1x8x64xf32> to vector<8x64xf32>
    %cst_35 = arith.constant dense<0.000000e+00> : vector<8x64xf32>
    %69 = tpu.matmul %68, %66, %cst_35 {dimension_numbers = #tpu.dot_dimension_numbers<[1], [0], [0], [1], [0, 0, 1, 1], [], []>} : vector<8x64xf32>, vector<64x64xf32>, vector<8x64xf32> -> vector<8x64xf32>
    %cst_36 = arith.constant dense<0.000000e+00> : vector<8x64xf32>
    %70 = tpu.matmul %69, %66, %cst_36 {dimension_numbers = #tpu.dot_dimension_numbers<[1], [0], [0], [1], [0, 0, 1, 1], [], []>} : vector<8x64xf32>, vector<64x64xf32>, vector<8x64xf32> -> vector<8x64xf32>
    %71 = tpu.concatenate %68, %69, %70 in 1 : vector<8x64xf32>, vector<8x64xf32>, vector<8x64xf32> -> vector<8x192xf32>
    %72 = tpu.concatenate %39, %71 in 0 : vector<8x192xf32>, vector<8x192xf32> -> vector<16x192xf32>
    %73 = arith.truncf %72 : vector<16x192xf32> to vector<16x192xbf16>
    %c0_37 = arith.constant 0 : index
    %c0_38 = arith.constant 0 : index
    %74 = vector.load %arg3[%c0_37, %c0_38] : memref<192x128xbf16, #tpu.memory_space<vmem>>, vector<192x128xbf16>
    %cst_39 = arith.constant dense<0.000000e+00> : vector<16x128xf32>
    %75 = tpu.matmul %73, %74, %cst_39 {dimension_numbers = #tpu.dot_dimension_numbers<[1], [0], [0], [1], [0, 0, 1, 1], [], []>} : vector<16x192xbf16>, vector<192x128xbf16>, vector<16x128xf32> -> vector<16x128xf32>
    %c0_40 = arith.constant 0 : index
    %c0_41 = arith.constant 0 : index
    %76 = vector.load %arg4[%c0_40, %c0_41] : memref<1x128xf32, #tpu.memory_space<vmem>>, vector<1x128xf32>
    %77 = vector.broadcast %76 : vector<1x128xf32> to vector<16x128xf32>
    %78 = arith.addf %75, %77 : vector<16x128xf32>
    %cst_42 = arith.constant 0.000000e+00 : f32
    %79 = vector.broadcast %cst_42 : f32 to vector<16x128xf32>
    %80 = arith.maximumf %78, %79 : vector<16x128xf32>
    %81 = arith.truncf %80 : vector<16x128xf32> to vector<16x128xbf16>
    %c0_43 = arith.constant 0 : index
    %c0_44 = arith.constant 0 : index
    %82 = vector.load %arg8[%c0_43, %c0_44] : memref<128x48xbf16, #tpu.memory_space<vmem>>, vector<128x48xbf16>
    %cst_45 = arith.constant dense<0.000000e+00> : vector<16x48xf32>
    %83 = tpu.matmul %81, %82, %cst_45 {dimension_numbers = #tpu.dot_dimension_numbers<[1], [0], [0], [1], [0, 0, 1, 1], [], []>} : vector<16x128xbf16>, vector<128x48xbf16>, vector<16x48xf32> -> vector<16x48xf32>
    %c0_46 = arith.constant 0 : index
    %c0_47 = arith.constant 0 : index
    %84 = vector.load %arg9[%c0_46, %c0_47] : memref<1x48xf32, #tpu.memory_space<vmem>>, vector<1x48xf32>
    %85 = vector.broadcast %84 : vector<1x48xf32> to vector<16x48xf32>
    %86 = arith.addf %83, %85 : vector<16x48xf32>
    %87 = vector.extract_strided_slice %86 {offsets = [0, 0], sizes = [8, 48], strides = [1, 1]} : vector<16x48xf32> to vector<8x48xf32>
    %c0_48 = arith.constant 0 : index
    %c0_49 = arith.constant 0 : index
    %c0_50 = arith.constant 0 : index
    %88 = vector.load %arg15[%c0_48, %c0_49, %c0_50] : memref<2x8x48xf32, #tpu.memory_space<vmem>>, vector<1x8x48xf32>
    %89 = vector.shape_cast %88 : vector<1x8x48xf32> to vector<8x48xf32>
    %90 = vector.shape_cast %87 : vector<8x48xf32> to vector<1x8x48xf32>
    tpu.vector_store %arg15[%c0_48, %c0_49, %c0_50], %90 {strides = array<i32>} : memref<2x8x48xf32, #tpu.memory_space<vmem>>, vector<1x8x48xf32>,
    %91 = vector.extract_strided_slice %86 {offsets = [8, 0], sizes = [8, 48], strides = [1, 1]} : vector<16x48xf32> to vector<8x48xf32>
    %c1_51 = arith.constant 1 : index
    %c0_52 = arith.constant 0 : index
    %c0_53 = arith.constant 0 : index
    %92 = vector.load %arg15[%c1_51, %c0_52, %c0_53] : memref<2x8x48xf32, #tpu.memory_space<vmem>>, vector<1x8x48xf32>
    %93 = vector.shape_cast %92 : vector<1x8x48xf32> to vector<8x48xf32>
    %94 = vector.shape_cast %91 : vector<8x48xf32> to vector<1x8x48xf32>
    tpu.vector_store %arg15[%c1_51, %c0_52, %c0_53], %94 {strides = array<i32>} : memref<2x8x48xf32, #tpu.memory_space<vmem>>, vector<1x8x48xf32>,
    %c0_54 = arith.constant 0 : index
    %c0_55 = arith.constant 0 : index
    %95 = vector.load %arg10[%c0_54, %c0_55] : memref<16x48xf32, #tpu.memory_space<vmem>>, vector<16x48xf32>
    %c0_56 = arith.constant 0 : index
    %c0_57 = arith.constant 0 : index
    %96 = vector.load %arg11[%c0_56, %c0_57] : memref<1x48xf32, #tpu.memory_space<vmem>>, vector<1x48xf32>
    %cst_58 = arith.constant 0.000000e+00 : f32
    %97 = vector.broadcast %cst_58 : f32 to vector<2x16xf32>
    %c0_59 = arith.constant 0 : index
    %c0_60 = arith.constant 0 : index
    %c0_61 = arith.constant 0 : index
    %98 = vector.load %arg15[%c0_59, %c0_60, %c0_61] : memref<2x8x48xf32, #tpu.memory_space<vmem>>, vector<2x1x48xf32>
    %99 = vector.shape_cast %98 : vector<2x1x48xf32> to vector<2x48xf32>
    %cst_62 = arith.constant dense<0.000000e+00> : vector<2x48xf32>
    %100 = tpu.matmul %97, %95, %cst_62 {dimension_numbers = #tpu.dot_dimension_numbers<[1], [0], [0], [1], [0, 0, 1, 1], [], []>} : vector<2x16xf32>, vector<16x48xf32>, vector<2x48xf32> -> vector<2x48xf32>
    %101 = vector.broadcast %96 : vector<1x48xf32> to vector<2x48xf32>
    %102 = arith.addf %100, %101 : vector<2x48xf32>
    %103 = vector.extract_strided_slice %99 {offsets = [0, 0], sizes = [2, 16], strides = [1, 1]} : vector<2x48xf32> to vector<2x16xf32>
    %104 = vector.extract_strided_slice %102 {offsets = [0, 0], sizes = [2, 16], strides = [1, 1]} : vector<2x48xf32> to vector<2x16xf32>
    %105 = arith.addf %103, %104 : vector<2x16xf32>
    %106 = arith.negf %105 : vector<2x16xf32>
    %107 = math.exp %106 : vector<2x16xf32>
    %cst_63 = arith.constant 1.000000e+00 : f32
    %108 = vector.broadcast %cst_63 : f32 to vector<2x16xf32>
    %109 = arith.addf %108, %107 : vector<2x16xf32>
    %110 = arith.divf %108, %109 : vector<2x16xf32>
    %111 = vector.extract_strided_slice %99 {offsets = [0, 16], sizes = [2, 16], strides = [1, 1]} : vector<2x48xf32> to vector<2x16xf32>
    %112 = vector.extract_strided_slice %102 {offsets = [0, 16], sizes = [2, 16], strides = [1, 1]} : vector<2x48xf32> to vector<2x16xf32>
    %113 = arith.addf %111, %112 : vector<2x16xf32>
    %114 = arith.negf %113 : vector<2x16xf32>
    %115 = math.exp %114 : vector<2x16xf32>
    %cst_64 = arith.constant 1.000000e+00 : f32
    %116 = vector.broadcast %cst_64 : f32 to vector<2x16xf32>
    %117 = arith.addf %116, %115 : vector<2x16xf32>
    %118 = arith.divf %116, %117 : vector<2x16xf32>
    %119 = vector.extract_strided_slice %99 {offsets = [0, 32], sizes = [2, 16], strides = [1, 1]} : vector<2x48xf32> to vector<2x16xf32>
    %120 = vector.extract_strided_slice %102 {offsets = [0, 32], sizes = [2, 16], strides = [1, 1]} : vector<2x48xf32> to vector<2x16xf32>
    %121 = arith.mulf %110, %120 : vector<2x16xf32>
    %122 = arith.addf %119, %121 : vector<2x16xf32>
    %123 = math.tanh %122 : vector<2x16xf32>
    %cst_65 = arith.constant 1.000000e+00 : f32
    %124 = vector.broadcast %cst_65 : f32 to vector<2x16xf32>
    %125 = arith.subf %124, %118 : vector<2x16xf32>
    %126 = arith.mulf %125, %123 : vector<2x16xf32>
    %127 = arith.mulf %118, %97 : vector<2x16xf32>
    %128 = arith.addf %126, %127 : vector<2x16xf32>
    %c0_66 = arith.constant 0 : index
    %c1_67 = arith.constant 1 : index
    %c0_68 = arith.constant 0 : index
    %129 = vector.load %arg15[%c0_66, %c1_67, %c0_68] : memref<2x8x48xf32, #tpu.memory_space<vmem>>, vector<2x1x48xf32>
    %130 = vector.shape_cast %129 : vector<2x1x48xf32> to vector<2x48xf32>
    %cst_69 = arith.constant dense<0.000000e+00> : vector<2x48xf32>
    %131 = tpu.matmul %128, %95, %cst_69 {dimension_numbers = #tpu.dot_dimension_numbers<[1], [0], [0], [1], [0, 0, 1, 1], [], []>} : vector<2x16xf32>, vector<16x48xf32>, vector<2x48xf32> -> vector<2x48xf32>
    %132 = vector.broadcast %96 : vector<1x48xf32> to vector<2x48xf32>
    %133 = arith.addf %131, %132 : vector<2x48xf32>
    %134 = vector.extract_strided_slice %130 {offsets = [0, 0], sizes = [2, 16], strides = [1, 1]} : vector<2x48xf32> to vector<2x16xf32>
    %135 = vector.extract_strided_slice %133 {offsets = [0, 0], sizes = [2, 16], strides = [1, 1]} : vector<2x48xf32> to vector<2x16xf32>
    %136 = arith.addf %134, %135 : vector<2x16xf32>
    %137 = arith.negf %136 : vector<2x16xf32>
    %138 = math.exp %137 : vector<2x16xf32>
    %cst_70 = arith.constant 1.000000e+00 : f32
    %139 = vector.broadcast %cst_70 : f32 to vector<2x16xf32>
    %140 = arith.addf %139, %138 : vector<2x16xf32>
    %141 = arith.divf %139, %140 : vector<2x16xf32>
    %142 = vector.extract_strided_slice %130 {offsets = [0, 16], sizes = [2, 16], strides = [1, 1]} : vector<2x48xf32> to vector<2x16xf32>
    %143 = vector.extract_strided_slice %133 {offsets = [0, 16], sizes = [2, 16], strides = [1, 1]} : vector<2x48xf32> to vector<2x16xf32>
    %144 = arith.addf %142, %143 : vector<2x16xf32>
    %145 = arith.negf %144 : vector<2x16xf32>
    %146 = math.exp %145 : vector<2x16xf32>
    %cst_71 = arith.constant 1.000000e+00 : f32
    %147 = vector.broadcast %cst_71 : f32 to vector<2x16xf32>
    %148 = arith.addf %147, %146 : vector<2x16xf32>
    %149 = arith.divf %147, %148 : vector<2x16xf32>
    %150 = vector.extract_strided_slice %130 {offsets = [0, 32], sizes = [2, 16], strides = [1, 1]} : vector<2x48xf32> to vector<2x16xf32>
    %151 = vector.extract_strided_slice %133 {offsets = [0, 32], sizes = [2, 16], strides = [1, 1]} : vector<2x48xf32> to vector<2x16xf32>
    %152 = arith.mulf %141, %151 : vector<2x16xf32>
    %153 = arith.addf %150, %152 : vector<2x16xf32>
    %154 = math.tanh %153 : vector<2x16xf32>
    %cst_72 = arith.constant 1.000000e+00 : f32
    %155 = vector.broadcast %cst_72 : f32 to vector<2x16xf32>
    %156 = arith.subf %155, %149 : vector<2x16xf32>
    %157 = arith.mulf %156, %154 : vector<2x16xf32>
    %158 = arith.mulf %149, %128 : vector<2x16xf32>
    %159 = arith.addf %157, %158 : vector<2x16xf32>
    %c0_73 = arith.constant 0 : index
    %c2 = arith.constant 2 : index
    %c0_74 = arith.constant 0 : index
    %160 = vector.load %arg15[%c0_73, %c2, %c0_74] : memref<2x8x48xf32, #tpu.memory_space<vmem>>, vector<2x1x48xf32>
    %161 = vector.shape_cast %160 : vector<2x1x48xf32> to vector<2x48xf32>
    %cst_75 = arith.constant dense<0.000000e+00> : vector<2x48xf32>
    %162 = tpu.matmul %159, %95, %cst_75 {dimension_numbers = #tpu.dot_dimension_numbers<[1], [0], [0], [1], [0, 0, 1, 1], [], []>} : vector<2x16xf32>, vector<16x48xf32>, vector<2x48xf32> -> vector<2x48xf32>
    %163 = vector.broadcast %96 : vector<1x48xf32> to vector<2x48xf32>
    %164 = arith.addf %162, %163 : vector<2x48xf32>
    %165 = vector.extract_strided_slice %161 {offsets = [0, 0], sizes = [2, 16], strides = [1, 1]} : vector<2x48xf32> to vector<2x16xf32>
    %166 = vector.extract_strided_slice %164 {offsets = [0, 0], sizes = [2, 16], strides = [1, 1]} : vector<2x48xf32> to vector<2x16xf32>
    %167 = arith.addf %165, %166 : vector<2x16xf32>
    %168 = arith.negf %167 : vector<2x16xf32>
    %169 = math.exp %168 : vector<2x16xf32>
    %cst_76 = arith.constant 1.000000e+00 : f32
    %170 = vector.broadcast %cst_76 : f32 to vector<2x16xf32>
    %171 = arith.addf %170, %169 : vector<2x16xf32>
    %172 = arith.divf %170, %171 : vector<2x16xf32>
    %173 = vector.extract_strided_slice %161 {offsets = [0, 16], sizes = [2, 16], strides = [1, 1]} : vector<2x48xf32> to vector<2x16xf32>
    %174 = vector.extract_strided_slice %164 {offsets = [0, 16], sizes = [2, 16], strides = [1, 1]} : vector<2x48xf32> to vector<2x16xf32>
    %175 = arith.addf %173, %174 : vector<2x16xf32>
    %176 = arith.negf %175 : vector<2x16xf32>
    %177 = math.exp %176 : vector<2x16xf32>
    %cst_77 = arith.constant 1.000000e+00 : f32
    %178 = vector.broadcast %cst_77 : f32 to vector<2x16xf32>
    %179 = arith.addf %178, %177 : vector<2x16xf32>
    %180 = arith.divf %178, %179 : vector<2x16xf32>
    %181 = vector.extract_strided_slice %161 {offsets = [0, 32], sizes = [2, 16], strides = [1, 1]} : vector<2x48xf32> to vector<2x16xf32>
    %182 = vector.extract_strided_slice %164 {offsets = [0, 32], sizes = [2, 16], strides = [1, 1]} : vector<2x48xf32> to vector<2x16xf32>
    %183 = arith.mulf %172, %182 : vector<2x16xf32>
    %184 = arith.addf %181, %183 : vector<2x16xf32>
    %185 = math.tanh %184 : vector<2x16xf32>
    %cst_78 = arith.constant 1.000000e+00 : f32
    %186 = vector.broadcast %cst_78 : f32 to vector<2x16xf32>
    %187 = arith.subf %186, %180 : vector<2x16xf32>
    %188 = arith.mulf %187, %185 : vector<2x16xf32>
    %189 = arith.mulf %180, %159 : vector<2x16xf32>
    %190 = arith.addf %188, %189 : vector<2x16xf32>
    %c0_79 = arith.constant 0 : index
    %c3 = arith.constant 3 : index
    %c0_80 = arith.constant 0 : index
    %191 = vector.load %arg15[%c0_79, %c3, %c0_80] : memref<2x8x48xf32, #tpu.memory_space<vmem>>, vector<2x1x48xf32>
    %192 = vector.shape_cast %191 : vector<2x1x48xf32> to vector<2x48xf32>
    %cst_81 = arith.constant dense<0.000000e+00> : vector<2x48xf32>
    %193 = tpu.matmul %190, %95, %cst_81 {dimension_numbers = #tpu.dot_dimension_numbers<[1], [0], [0], [1], [0, 0, 1, 1], [], []>} : vector<2x16xf32>, vector<16x48xf32>, vector<2x48xf32> -> vector<2x48xf32>
    %194 = vector.broadcast %96 : vector<1x48xf32> to vector<2x48xf32>
    %195 = arith.addf %193, %194 : vector<2x48xf32>
    %196 = vector.extract_strided_slice %192 {offsets = [0, 0], sizes = [2, 16], strides = [1, 1]} : vector<2x48xf32> to vector<2x16xf32>
    %197 = vector.extract_strided_slice %195 {offsets = [0, 0], sizes = [2, 16], strides = [1, 1]} : vector<2x48xf32> to vector<2x16xf32>
    %198 = arith.addf %196, %197 : vector<2x16xf32>
    %199 = arith.negf %198 : vector<2x16xf32>
    %200 = math.exp %199 : vector<2x16xf32>
    %cst_82 = arith.constant 1.000000e+00 : f32
    %201 = vector.broadcast %cst_82 : f32 to vector<2x16xf32>
    %202 = arith.addf %201, %200 : vector<2x16xf32>
    %203 = arith.divf %201, %202 : vector<2x16xf32>
    %204 = vector.extract_strided_slice %192 {offsets = [0, 16], sizes = [2, 16], strides = [1, 1]} : vector<2x48xf32> to vector<2x16xf32>
    %205 = vector.extract_strided_slice %195 {offsets = [0, 16], sizes = [2, 16], strides = [1, 1]} : vector<2x48xf32> to vector<2x16xf32>
    %206 = arith.addf %204, %205 : vector<2x16xf32>
    %207 = arith.negf %206 : vector<2x16xf32>
    %208 = math.exp %207 : vector<2x16xf32>
    %cst_83 = arith.constant 1.000000e+00 : f32
    %209 = vector.broadcast %cst_83 : f32 to vector<2x16xf32>
    %210 = arith.addf %209, %208 : vector<2x16xf32>
    %211 = arith.divf %209, %210 : vector<2x16xf32>
    %212 = vector.extract_strided_slice %192 {offsets = [0, 32], sizes = [2, 16], strides = [1, 1]} : vector<2x48xf32> to vector<2x16xf32>
    %213 = vector.extract_strided_slice %195 {offsets = [0, 32], sizes = [2, 16], strides = [1, 1]} : vector<2x48xf32> to vector<2x16xf32>
    %214 = arith.mulf %203, %213 : vector<2x16xf32>
    %215 = arith.addf %212, %214 : vector<2x16xf32>
    %216 = math.tanh %215 : vector<2x16xf32>
    %cst_84 = arith.constant 1.000000e+00 : f32
    %217 = vector.broadcast %cst_84 : f32 to vector<2x16xf32>
    %218 = arith.subf %217, %211 : vector<2x16xf32>
    %219 = arith.mulf %218, %216 : vector<2x16xf32>
    %220 = arith.mulf %211, %190 : vector<2x16xf32>
    %221 = arith.addf %219, %220 : vector<2x16xf32>
    %c0_85 = arith.constant 0 : index
    %c4 = arith.constant 4 : index
    %c0_86 = arith.constant 0 : index
    %222 = vector.load %arg15[%c0_85, %c4, %c0_86] : memref<2x8x48xf32, #tpu.memory_space<vmem>>, vector<2x1x48xf32>
    %223 = vector.shape_cast %222 : vector<2x1x48xf32> to vector<2x48xf32>
    %cst_87 = arith.constant dense<0.000000e+00> : vector<2x48xf32>
    %224 = tpu.matmul %221, %95, %cst_87 {dimension_numbers = #tpu.dot_dimension_numbers<[1], [0], [0], [1], [0, 0, 1, 1], [], []>} : vector<2x16xf32>, vector<16x48xf32>, vector<2x48xf32> -> vector<2x48xf32>
    %225 = vector.broadcast %96 : vector<1x48xf32> to vector<2x48xf32>
    %226 = arith.addf %224, %225 : vector<2x48xf32>
    %227 = vector.extract_strided_slice %223 {offsets = [0, 0], sizes = [2, 16], strides = [1, 1]} : vector<2x48xf32> to vector<2x16xf32>
    %228 = vector.extract_strided_slice %226 {offsets = [0, 0], sizes = [2, 16], strides = [1, 1]} : vector<2x48xf32> to vector<2x16xf32>
    %229 = arith.addf %227, %228 : vector<2x16xf32>
    %230 = arith.negf %229 : vector<2x16xf32>
    %231 = math.exp %230 : vector<2x16xf32>
    %cst_88 = arith.constant 1.000000e+00 : f32
    %232 = vector.broadcast %cst_88 : f32 to vector<2x16xf32>
    %233 = arith.addf %232, %231 : vector<2x16xf32>
    %234 = arith.divf %232, %233 : vector<2x16xf32>
    %235 = vector.extract_strided_slice %223 {offsets = [0, 16], sizes = [2, 16], strides = [1, 1]} : vector<2x48xf32> to vector<2x16xf32>
    %236 = vector.extract_strided_slice %226 {offsets = [0, 16], sizes = [2, 16], strides = [1, 1]} : vector<2x48xf32> to vector<2x16xf32>
    %237 = arith.addf %235, %236 : vector<2x16xf32>
    %238 = arith.negf %237 : vector<2x16xf32>
    %239 = math.exp %238 : vector<2x16xf32>
    %cst_89 = arith.constant 1.000000e+00 : f32
    %240 = vector.broadcast %cst_89 : f32 to vector<2x16xf32>
    %241 = arith.addf %240, %239 : vector<2x16xf32>
    %242 = arith.divf %240, %241 : vector<2x16xf32>
    %243 = vector.extract_strided_slice %223 {offsets = [0, 32], sizes = [2, 16], strides = [1, 1]} : vector<2x48xf32> to vector<2x16xf32>
    %244 = vector.extract_strided_slice %226 {offsets = [0, 32], sizes = [2, 16], strides = [1, 1]} : vector<2x48xf32> to vector<2x16xf32>
    %245 = arith.mulf %234, %244 : vector<2x16xf32>
    %246 = arith.addf %243, %245 : vector<2x16xf32>
    %247 = math.tanh %246 : vector<2x16xf32>
    %cst_90 = arith.constant 1.000000e+00 : f32
    %248 = vector.broadcast %cst_90 : f32 to vector<2x16xf32>
    %249 = arith.subf %248, %242 : vector<2x16xf32>
    %250 = arith.mulf %249, %247 : vector<2x16xf32>
    %251 = arith.mulf %242, %221 : vector<2x16xf32>
    %252 = arith.addf %250, %251 : vector<2x16xf32>
    %c0_91 = arith.constant 0 : index
    %c5 = arith.constant 5 : index
    %c0_92 = arith.constant 0 : index
    %253 = vector.load %arg15[%c0_91, %c5, %c0_92] : memref<2x8x48xf32, #tpu.memory_space<vmem>>, vector<2x1x48xf32>
    %254 = vector.shape_cast %253 : vector<2x1x48xf32> to vector<2x48xf32>
    %cst_93 = arith.constant dense<0.000000e+00> : vector<2x48xf32>
    %255 = tpu.matmul %252, %95, %cst_93 {dimension_numbers = #tpu.dot_dimension_numbers<[1], [0], [0], [1], [0, 0, 1, 1], [], []>} : vector<2x16xf32>, vector<16x48xf32>, vector<2x48xf32> -> vector<2x48xf32>
    %256 = vector.broadcast %96 : vector<1x48xf32> to vector<2x48xf32>
    %257 = arith.addf %255, %256 : vector<2x48xf32>
    %258 = vector.extract_strided_slice %254 {offsets = [0, 0], sizes = [2, 16], strides = [1, 1]} : vector<2x48xf32> to vector<2x16xf32>
    %259 = vector.extract_strided_slice %257 {offsets = [0, 0], sizes = [2, 16], strides = [1, 1]} : vector<2x48xf32> to vector<2x16xf32>
    %260 = arith.addf %258, %259 : vector<2x16xf32>
    %261 = arith.negf %260 : vector<2x16xf32>
    %262 = math.exp %261 : vector<2x16xf32>
    %cst_94 = arith.constant 1.000000e+00 : f32
    %263 = vector.broadcast %cst_94 : f32 to vector<2x16xf32>
    %264 = arith.addf %263, %262 : vector<2x16xf32>
    %265 = arith.divf %263, %264 : vector<2x16xf32>
    %266 = vector.extract_strided_slice %254 {offsets = [0, 16], sizes = [2, 16], strides = [1, 1]} : vector<2x48xf32> to vector<2x16xf32>
    %267 = vector.extract_strided_slice %257 {offsets = [0, 16], sizes = [2, 16], strides = [1, 1]} : vector<2x48xf32> to vector<2x16xf32>
    %268 = arith.addf %266, %267 : vector<2x16xf32>
    %269 = arith.negf %268 : vector<2x16xf32>
    %270 = math.exp %269 : vector<2x16xf32>
    %cst_95 = arith.constant 1.000000e+00 : f32
    %271 = vector.broadcast %cst_95 : f32 to vector<2x16xf32>
    %272 = arith.addf %271, %270 : vector<2x16xf32>
    %273 = arith.divf %271, %272 : vector<2x16xf32>
    %274 = vector.extract_strided_slice %254 {offsets = [0, 32], sizes = [2, 16], strides = [1, 1]} : vector<2x48xf32> to vector<2x16xf32>
    %275 = vector.extract_strided_slice %257 {offsets = [0, 32], sizes = [2, 16], strides = [1, 1]} : vector<2x48xf32> to vector<2x16xf32>
    %276 = arith.mulf %265, %275 : vector<2x16xf32>
    %277 = arith.addf %274, %276 : vector<2x16xf32>
    %278 = math.tanh %277 : vector<2x16xf32>
    %cst_96 = arith.constant 1.000000e+00 : f32
    %279 = vector.broadcast %cst_96 : f32 to vector<2x16xf32>
    %280 = arith.subf %279, %273 : vector<2x16xf32>
    %281 = arith.mulf %280, %278 : vector<2x16xf32>
    %282 = arith.mulf %273, %252 : vector<2x16xf32>
    %283 = arith.addf %281, %282 : vector<2x16xf32>
    %c0_97 = arith.constant 0 : index
    %c6 = arith.constant 6 : index
    %c0_98 = arith.constant 0 : index
    %284 = vector.load %arg15[%c0_97, %c6, %c0_98] : memref<2x8x48xf32, #tpu.memory_space<vmem>>, vector<2x1x48xf32>
    %285 = vector.shape_cast %284 : vector<2x1x48xf32> to vector<2x48xf32>
    %cst_99 = arith.constant dense<0.000000e+00> : vector<2x48xf32>
    %286 = tpu.matmul %283, %95, %cst_99 {dimension_numbers = #tpu.dot_dimension_numbers<[1], [0], [0], [1], [0, 0, 1, 1], [], []>} : vector<2x16xf32>, vector<16x48xf32>, vector<2x48xf32> -> vector<2x48xf32>
    %287 = vector.broadcast %96 : vector<1x48xf32> to vector<2x48xf32>
    %288 = arith.addf %286, %287 : vector<2x48xf32>
    %289 = vector.extract_strided_slice %285 {offsets = [0, 0], sizes = [2, 16], strides = [1, 1]} : vector<2x48xf32> to vector<2x16xf32>
    %290 = vector.extract_strided_slice %288 {offsets = [0, 0], sizes = [2, 16], strides = [1, 1]} : vector<2x48xf32> to vector<2x16xf32>
    %291 = arith.addf %289, %290 : vector<2x16xf32>
    %292 = arith.negf %291 : vector<2x16xf32>
    %293 = math.exp %292 : vector<2x16xf32>
    %cst_100 = arith.constant 1.000000e+00 : f32
    %294 = vector.broadcast %cst_100 : f32 to vector<2x16xf32>
    %295 = arith.addf %294, %293 : vector<2x16xf32>
    %296 = arith.divf %294, %295 : vector<2x16xf32>
    %297 = vector.extract_strided_slice %285 {offsets = [0, 16], sizes = [2, 16], strides = [1, 1]} : vector<2x48xf32> to vector<2x16xf32>
    %298 = vector.extract_strided_slice %288 {offsets = [0, 16], sizes = [2, 16], strides = [1, 1]} : vector<2x48xf32> to vector<2x16xf32>
    %299 = arith.addf %297, %298 : vector<2x16xf32>
    %300 = arith.negf %299 : vector<2x16xf32>
    %301 = math.exp %300 : vector<2x16xf32>
    %cst_101 = arith.constant 1.000000e+00 : f32
    %302 = vector.broadcast %cst_101 : f32 to vector<2x16xf32>
    %303 = arith.addf %302, %301 : vector<2x16xf32>
    %304 = arith.divf %302, %303 : vector<2x16xf32>
    %305 = vector.extract_strided_slice %285 {offsets = [0, 32], sizes = [2, 16], strides = [1, 1]} : vector<2x48xf32> to vector<2x16xf32>
    %306 = vector.extract_strided_slice %288 {offsets = [0, 32], sizes = [2, 16], strides = [1, 1]} : vector<2x48xf32> to vector<2x16xf32>
    %307 = arith.mulf %296, %306 : vector<2x16xf32>
    %308 = arith.addf %305, %307 : vector<2x16xf32>
    %309 = math.tanh %308 : vector<2x16xf32>
    %cst_102 = arith.constant 1.000000e+00 : f32
    %310 = vector.broadcast %cst_102 : f32 to vector<2x16xf32>
    %311 = arith.subf %310, %304 : vector<2x16xf32>
    %312 = arith.mulf %311, %309 : vector<2x16xf32>
    %313 = arith.mulf %304, %283 : vector<2x16xf32>
    %314 = arith.addf %312, %313 : vector<2x16xf32>
    %c0_103 = arith.constant 0 : index
    %c7 = arith.constant 7 : index
    %c0_104 = arith.constant 0 : index
    %315 = vector.load %arg15[%c0_103, %c7, %c0_104] : memref<2x8x48xf32, #tpu.memory_space<vmem>>, vector<2x1x48xf32>
    %316 = vector.shape_cast %315 : vector<2x1x48xf32> to vector<2x48xf32>
    %cst_105 = arith.constant dense<0.000000e+00> : vector<2x48xf32>
    %317 = tpu.matmul %314, %95, %cst_105 {dimension_numbers = #tpu.dot_dimension_numbers<[1], [0], [0], [1], [0, 0, 1, 1], [], []>} : vector<2x16xf32>, vector<16x48xf32>, vector<2x48xf32> -> vector<2x48xf32>
    %318 = vector.broadcast %96 : vector<1x48xf32> to vector<2x48xf32>
    %319 = arith.addf %317, %318 : vector<2x48xf32>
    %320 = vector.extract_strided_slice %316 {offsets = [0, 0], sizes = [2, 16], strides = [1, 1]} : vector<2x48xf32> to vector<2x16xf32>
    %321 = vector.extract_strided_slice %319 {offsets = [0, 0], sizes = [2, 16], strides = [1, 1]} : vector<2x48xf32> to vector<2x16xf32>
    %322 = arith.addf %320, %321 : vector<2x16xf32>
    %323 = arith.negf %322 : vector<2x16xf32>
    %324 = math.exp %323 : vector<2x16xf32>
    %cst_106 = arith.constant 1.000000e+00 : f32
    %325 = vector.broadcast %cst_106 : f32 to vector<2x16xf32>
    %326 = arith.addf %325, %324 : vector<2x16xf32>
    %327 = arith.divf %325, %326 : vector<2x16xf32>
    %328 = vector.extract_strided_slice %316 {offsets = [0, 16], sizes = [2, 16], strides = [1, 1]} : vector<2x48xf32> to vector<2x16xf32>
    %329 = vector.extract_strided_slice %319 {offsets = [0, 16], sizes = [2, 16], strides = [1, 1]} : vector<2x48xf32> to vector<2x16xf32>
    %330 = arith.addf %328, %329 : vector<2x16xf32>
    %331 = arith.negf %330 : vector<2x16xf32>
    %332 = math.exp %331 : vector<2x16xf32>
    %cst_107 = arith.constant 1.000000e+00 : f32
    %333 = vector.broadcast %cst_107 : f32 to vector<2x16xf32>
    %334 = arith.addf %333, %332 : vector<2x16xf32>
    %335 = arith.divf %333, %334 : vector<2x16xf32>
    %336 = vector.extract_strided_slice %316 {offsets = [0, 32], sizes = [2, 16], strides = [1, 1]} : vector<2x48xf32> to vector<2x16xf32>
    %337 = vector.extract_strided_slice %319 {offsets = [0, 32], sizes = [2, 16], strides = [1, 1]} : vector<2x48xf32> to vector<2x16xf32>
    %338 = arith.mulf %327, %337 : vector<2x16xf32>
    %339 = arith.addf %336, %338 : vector<2x16xf32>
    %340 = math.tanh %339 : vector<2x16xf32>
    %cst_108 = arith.constant 1.000000e+00 : f32
    %341 = vector.broadcast %cst_108 : f32 to vector<2x16xf32>
    %342 = arith.subf %341, %335 : vector<2x16xf32>
    %343 = arith.mulf %342, %340 : vector<2x16xf32>
    %344 = arith.mulf %335, %314 : vector<2x16xf32>
    %345 = arith.addf %343, %344 : vector<2x16xf32>
    %c0_109 = arith.constant 0 : index
    %c0_110 = arith.constant 0 : index
    %346 = vector.load %arg12[%c0_109, %c0_110] : memref<16x4xf32, #tpu.memory_space<vmem>>, vector<16x4xf32>
    %cst_111 = arith.constant dense<0.000000e+00> : vector<2x4xf32>
    %347 = tpu.matmul %345, %346, %cst_111 {dimension_numbers = #tpu.dot_dimension_numbers<[1], [0], [0], [1], [0, 0, 1, 1], [], []>} : vector<2x16xf32>, vector<16x4xf32>, vector<2x4xf32> -> vector<2x4xf32>
    %c0_112 = arith.constant 0 : index
    %c0_113 = arith.constant 0 : index
    %348 = vector.load %arg13[%c0_112, %c0_113] : memref<1x4xf32, #tpu.memory_space<vmem>>, vector<1x4xf32>
    %349 = vector.broadcast %348 : vector<1x4xf32> to vector<2x4xf32>
    %350 = arith.addf %347, %349 : vector<2x4xf32>
    %c0_114 = arith.constant 0 : index
    %c0_115 = arith.constant 0 : index
    %c0_116 = arith.constant 0 : index
    %351 = vector.load %arg14[%c0_114, %c0_115, %c0_116] : memref<1x2x4xf32, #tpu.memory_space<vmem>>, vector<1x2x4xf32>
    %352 = vector.shape_cast %351 : vector<1x2x4xf32> to vector<2x4xf32>
    %353 = vector.shape_cast %350 : vector<2x4xf32> to vector<1x2x4xf32>
    tpu.vector_store %arg14[%c0_114, %c0_115, %c0_116], %353 {strides = array<i32>} : memref<1x2x4xf32, #tpu.memory_space<vmem>>, vector<1x2x4xf32>,
    return
  }
  func.func @transform_0(%arg0: i32) -> (i32, i32, i32) {
    %c0_i32 = arith.constant 0 : i32
    %c0_i32_0 = arith.constant 0 : i32
    %c0_i32_1 = arith.constant 0 : i32
    return %arg0, %c0_i32, %c0_i32_0 : i32, i32, i32
  }
  func.func @transform_1(%arg0: i32) -> (i32, i32, i32) {
    %c0_i32 = arith.constant 0 : i32
    %c0_i32_0 = arith.constant 0 : i32
    %c0_i32_1 = arith.constant 0 : i32
    return %arg0, %c0_i32, %c0_i32_0 : i32, i32, i32
  }
  func.func @transform_2(%arg0: i32) -> (i32, i32) {
    %c0_i32 = arith.constant 0 : i32
    %c0_i32_0 = arith.constant 0 : i32
    %c0_i32_1 = arith.constant 0 : i32
    return %c0_i32, %c0_i32_0 : i32, i32
  }
  func.func @transform_3(%arg0: i32) -> (i32, i32) {
    %c0_i32 = arith.constant 0 : i32
    %c0_i32_0 = arith.constant 0 : i32
    %c0_i32_1 = arith.constant 0 : i32
    return %c0_i32, %c0_i32_0 : i32, i32
  }
  func.func @transform_4(%arg0: i32) -> (i32, i32) {
    %c0_i32 = arith.constant 0 : i32
    %c0_i32_0 = arith.constant 0 : i32
    %c0_i32_1 = arith.constant 0 : i32
    return %c0_i32, %c0_i32_0 : i32, i32
  }
  func.func @transform_5(%arg0: i32) -> (i32, i32) {
    %c0_i32 = arith.constant 0 : i32
    %c0_i32_0 = arith.constant 0 : i32
    %c0_i32_1 = arith.constant 0 : i32
    return %c0_i32, %c0_i32_0 : i32, i32
  }
  func.func @transform_6(%arg0: i32) -> (i32, i32) {
    %c0_i32 = arith.constant 0 : i32
    %c0_i32_0 = arith.constant 0 : i32
    %c0_i32_1 = arith.constant 0 : i32
    return %c0_i32, %c0_i32_0 : i32, i32
  }
  func.func @transform_7(%arg0: i32) -> (i32, i32) {
    %c0_i32 = arith.constant 0 : i32
    %c0_i32_0 = arith.constant 0 : i32
    %c0_i32_1 = arith.constant 0 : i32
    return %c0_i32, %c0_i32_0 : i32, i32
  }
  func.func @transform_8(%arg0: i32) -> (i32, i32) {
    %c0_i32 = arith.constant 0 : i32
    %c0_i32_0 = arith.constant 0 : i32
    %c0_i32_1 = arith.constant 0 : i32
    return %c0_i32, %c0_i32_0 : i32, i32
  }
  func.func @transform_9(%arg0: i32) -> (i32, i32) {
    %c0_i32 = arith.constant 0 : i32
    %c0_i32_0 = arith.constant 0 : i32
    %c0_i32_1 = arith.constant 0 : i32
    return %c0_i32, %c0_i32_0 : i32, i32
  }
  func.func @transform_10(%arg0: i32) -> (i32, i32) {
    %c0_i32 = arith.constant 0 : i32
    %c0_i32_0 = arith.constant 0 : i32
    %c0_i32_1 = arith.constant 0 : i32
    return %c0_i32, %c0_i32_0 : i32, i32
  }
  func.func @transform_11(%arg0: i32) -> (i32, i32) {
    %c0_i32 = arith.constant 0 : i32
    %c0_i32_0 = arith.constant 0 : i32
    %c0_i32_1 = arith.constant 0 : i32
    return %c0_i32, %c0_i32_0 : i32, i32
  }
  func.func @transform_12(%arg0: i32) -> (i32, i32) {
    %c0_i32 = arith.constant 0 : i32
    %c0_i32_0 = arith.constant 0 : i32
    %c0_i32_1 = arith.constant 0 : i32
    return %c0_i32, %c0_i32_0 : i32, i32
  }
  func.func @transform_13(%arg0: i32) -> (i32, i32, i32) {
    %c0_i32 = arith.constant 0 : i32
    %c0_i32_0 = arith.constant 0 : i32
    %c0_i32_1 = arith.constant 0 : i32
    return %arg0, %c0_i32, %c0_i32_0 : i32, i32, i32
  }
}

</mosaic_0001>

<llo_original>
// kernel: tpu_custom_call.1
$region0: #{tpu_custom_call.1}
  #allocation0 [shape = 'u32[]', space=smem, size = 0x4, offset = 0x4, fixed_abs, tag = 'smem constant byte address 0x4 - core index']
  #allocation1 [shape = 'u32[144,128]{1,0:T(1,128)}', space=vmem, size = 0x12000, scoped, tag = 'internal scratch']
  #allocation2 [shape = 'f32[2,8,48]{2,1,0:T(8,128)}', space=vmem, size = 0x2000, scoped, tag = 'scratch operand']
  %s0 = inlined_call_operand.vmem [shape: f32[4,8,64], index: 0, kind: input, shape index: {}]
  %s1 = inlined_call_operand.vmem [shape: f32[4,16,4], index: 1, kind: input, shape index: {}]
  %s2 = inlined_call_operand.vmem [shape: bf16[192,128], index: 2, kind: input, shape index: {}]
  %s3 = inlined_call_operand.hbm [shape: f32[1,128], index: 3, kind: input, shape index: {}]
  %s4 = inlined_call_operand.vmem [shape: f32[64,16], index: 4, kind: input, shape index: {}]
  %s5 = inlined_call_operand.vmem [shape: f32[16,64], index: 5, kind: input, shape index: {}]
  %s6 = inlined_call_operand.vmem [shape: f32[64,64], index: 6, kind: input, shape index: {}]
  %s7 = inlined_call_operand.vmem [shape: bf16[128,48], index: 7, kind: input, shape index: {}]
  %s8 = inlined_call_operand.hbm [shape: f32[1,48], index: 8, kind: input, shape index: {}]
  %s9 = inlined_call_operand.vmem [shape: f32[16,48], index: 9, kind: input, shape index: {}]
  %s10 = inlined_call_operand.vmem [shape: f32[1,48], index: 10, kind: input, shape index: {}]
  %s11 = inlined_call_operand.vmem [shape: f32[16,4], index: 11, kind: input, shape index: {}]
  %s12 = inlined_call_operand.vmem [shape: f32[1,4], index: 12, kind: input, shape index: {}]
  %s13 = inlined_call_operand.hbm [shape: f32[2,2,4], index: 13, kind: output, shape index: {}]
  %s14 = sld [smem:[#allocation0]]
  $region93: #{tpu_custom_call.1} parent=0
    _
  %s16 = ssub.s32 1, %s14
  %s17 = scalar_select 0, %s16, %s14
  $region1: #{tpu_custom_call.1} parent=0
    #allocation3 [shape = 'u8[512]{0}', space=vmem, size = 0x400, scoped, tag = 'input window, operand 3, single buffered']
    #allocation4 [shape = 's32[2]{0}', space=sflag, size = 0x8, scoped, tag = 'scoped memory for tpu_custom_call.1']
    #allocation5 [shape = 's32[2]{0}', space=sflag, size = 0x8, scoped, tag = 'scoped memory for tpu_custom_call.1']
    #allocation6 [shape = 'u8[512]{0}', space=vmem, size = 0x400, scoped, tag = 'input window, operand 8, single buffered']
    #allocation7 [shape = 's32[1]{0}', space=sflag, size = 0x4, scoped, tag = 'scoped memory for tpu_custom_call.1']
    #allocation8 [shape = 'u8[2048]{0}', space=vmem, size = 0x800, scoped, tag = 'output window, operand 0']
    %18 = vsyncpa [#allocation4], 0
    %19 = vsyncpa [#allocation7], 0
    %20 = vsyncpa [#allocation5], 0
    %s21 = scalar_lea.sflag [#allocation5], 1
    %22 = vsyncpa %s21, 0
    loop: start=0, step=1, limit=4
    $region2: #{tpu_custom_call.1} parent=1 // loop_pre_header
      _
    $region3: #{tpu_custom_call.1} parent=1 // loop_header
      %s24 = sphi 0, %s28
      %p25 = scmp.ge.s32.totalorder %s24, 4
      %s34 = sphi 0, %s36
      %s37 = sphi 0, %s34
      %s38 = sphi 0, %s37
      %s54 = sphi 0, %s38
      %s60 = sphi 0, %s62
      %s63 = sphi 0, %s60
      %s64 = sphi 0, %s63
      %s80 = sphi 0, %s64
      %s84 = sphi 0, %s84
      %s86 = sphi 0, %s84
      %s87 = sphi 0, %s86
      %s101 = sphi 0, %s87
      %s105 = sphi 0, %s105
      %s107 = sphi 0, %s105
      %s108 = sphi 0, %s107
      %s122 = sphi 0, %s108
      %s126 = sphi 0, %s126
      %s128 = sphi 0, %s126
      %s129 = sphi 0, %s128
      %s143 = sphi 0, %s129
      %s147 = sphi 0, %s147
      %s149 = sphi 0, %s147
      %s150 = sphi 0, %s149
      %s164 = sphi 0, %s150
      %s168 = sphi 0, %s168
      %s170 = sphi 0, %s168
      %s171 = sphi 0, %s170
      %s185 = sphi 0, %s171
      %s189 = sphi 0, %s189
      %s191 = sphi 0, %s189
      %s192 = sphi 0, %s191
      %s206 = sphi 0, %s192
      %s210 = sphi 0, %s210
      %s212 = sphi 0, %s210
      %s213 = sphi 0, %s212
      %s227 = sphi 0, %s213
      %s231 = sphi 0, %s231
      %s233 = sphi 0, %s231
      %s234 = sphi 0, %s233
      %s248 = sphi 0, %s234
      %s252 = sphi 0, %s252
      %s254 = sphi 0, %s252
      %s255 = sphi 0, %s254
      %s269 = sphi 0, %s255
      %s273 = sphi 0, %s273
      %s275 = sphi 0, %s273
      %s276 = sphi 0, %s275
      %s290 = sphi 0, %s276
      %s294 = sphi 0, %s294
      %s296 = sphi 0, %s294
      %s297 = sphi 0, %s296
      %s311 = sphi 0, %s297
      %s317 = sphi 0, %s319
      %s320 = sphi 0, %s317
      %s321 = sphi 0, %s320
      %s337 = sphi 0, %s321
    $region4: #{tpu_custom_call.1} parent=1 // loop_header_branch
      %27 = sbr.rel (%p25) target = $region8
    $region5: #{tpu_custom_call.1} parent=1 // loop_body
      %s29 = ssub.s32 %s24, 1
      %s30 = ssub.s32 %s24, 2
      %s31 = sadd.s32 %s24, 1
      %s32 = ssub.s32 %s24, %s31
      %p33 = scmp.eq.s32.totalorder %s32, 0
      %s35 = sadd.s32 %s34, 1
      %s36 = scalar_select %p33, %s34, %s35
      %p39 = pneg %p33
      %p40 = scmp.eq.s32.totalorder %s24, 1
      %p41 = por %p39, %p40
      %p42 = scmp.ne.s32.totalorder %s34, %s37
      %p43 = scmp.eq.s32.totalorder %s24, 0
      %p44 = por %p42, %p43
      %p45 = scmp.ne.s32.totalorder %s34, %s37
      %p46 = scmp.eq.s32.totalorder %s29, 1
      %p47 = por %p45, %p46
      %p48 = scmp.ne.s32.totalorder %s37, %s38
      %p49 = scmp.eq.s32.totalorder %s29, 0
      %p50 = por %p48, %p49
      %p51 = scmp.ne.s32.totalorder %s37, %s38
      %p52 = scmp.eq.s32.totalorder %s30, 1
      %p53 = por %p51, %p52
      %p55 = scmp.ne.s32.totalorder %s38, %s54
      %p56 = scmp.eq.s32.totalorder %s30, 0
      %p57 = por %p55, %p56
      %s58 = ssub.s32 %s24, %s31
      %p59 = scmp.eq.s32.totalorder %s58, 0
      %s61 = sadd.s32 %s60, 1
      %s62 = scalar_select %p59, %s60, %s61
      %p65 = pneg %p59
      %p66 = scmp.eq.s32.totalorder %s24, 1
      %p67 = por %p65, %p66
      %p68 = scmp.ne.s32.totalorder %s60, %s63
      %p69 = scmp.eq.s32.totalorder %s24, 0
      %p70 = por %p68, %p69
      %p71 = scmp.ne.s32.totalorder %s60, %s63
      %p72 = scmp.eq.s32.totalorder %s29, 1
      %p73 = por %p71, %p72
      %p74 = scmp.ne.s32.totalorder %s63, %s64
      %p75 = scmp.eq.s32.totalorder %s29, 0
      %p76 = por %p74, %p75
      %p77 = scmp.ne.s32.totalorder %s63, %s64
      %p78 = scmp.eq.s32.totalorder %s30, 1
      %p79 = por %p77, %p78
      %p81 = scmp.ne.s32.totalorder %s64, %s80
      %p82 = scmp.eq.s32.totalorder %s30, 0
      %p83 = por %p81, %p82
      %s85 = sadd.s32 %s84, 1
      %p88 = scmp.eq.s32.totalorder %s24, 1
      %p89 = scmp.ne.s32.totalorder %s84, %s86
      %p90 = scmp.eq.s32.totalorder %s24, 0
      %p91 = por %p89, %p90
      %p92 = scmp.ne.s32.totalorder %s84, %s86
      %p93 = scmp.eq.s32.totalorder %s29, 1
      %p94 = por %p92, %p93
      %p95 = scmp.ne.s32.totalorder %s86, %s87
      %p96 = scmp.eq.s32.totalorder %s29, 0
      %p97 = por %p95, %p96
      %p98 = scmp.ne.s32.totalorder %s86, %s87
      %p99 = scmp.eq.s32.totalorder %s30, 1
      %p100 = por %p98, %p99
      %p102 = scmp.ne.s32.totalorder %s87, %s101
      %p103 = scmp.eq.s32.totalorder %s30, 0
      %p104 = por %p102, %p103
      %s106 = sadd.s32 %s105, 1
      %p109 = scmp.eq.s32.totalorder %s24, 1
      %p110 = scmp.ne.s32.totalorder %s105, %s107
      %p111 = scmp.eq.s32.totalorder %s24, 0
      %p112 = por %p110, %p111
      %p113 = scmp.ne.s32.totalorder %s105, %s107
      %p114 = scmp.eq.s32.totalorder %s29, 1
      %p115 = por %p113, %p114
      %p116 = scmp.ne.s32.totalorder %s107, %s108
      %p117 = scmp.eq.s32.totalorder %s29, 0
      %p118 = por %p116, %p117
      %p119 = scmp.ne.s32.totalorder %s107, %s108
      %p120 = scmp.eq.s32.totalorder %s30, 1
      %p121 = por %p119, %p120
      %p123 = scmp.ne.s32.totalorder %s108, %s122
      %p124 = scmp.eq.s32.totalorder %s30, 0
      %p125 = por %p123, %p124
      %s127 = sadd.s32 %s126, 1
      %p130 = scmp.eq.s32.totalorder %s24, 1
      %p131 = scmp.ne.s32.totalorder %s126, %s128
      %p132 = scmp.eq.s32.totalorder %s24, 0
      %p133 = por %p131, %p132
      %p134 = scmp.ne.s32.totalorder %s126, %s128
      %p135 = scmp.eq.s32.totalorder %s29, 1
      %p136 = por %p134, %p135
      %p137 = scmp.ne.s32.totalorder %s128, %s129
      %p138 = scmp.eq.s32.totalorder %s29, 0
      %p139 = por %p137, %p138
      %p140 = scmp.ne.s32.totalorder %s128, %s129
      %p141 = scmp.eq.s32.totalorder %s30, 1
      %p142 = por %p140, %p141
      %p144 = scmp.ne.s32.totalorder %s129, %s143
      %p145 = scmp.eq.s32.totalorder %s30, 0
      %p146 = por %p144, %p145
      %s148 = sadd.s32 %s147, 1
      %p151 = scmp.eq.s32.totalorder %s24, 1
      %p152 = scmp.ne.s32.totalorder %s147, %s149
      %p153 = scmp.eq.s32.totalorder %s24, 0
      %p154 = por %p152, %p153
      %p155 = scmp.ne.s32.totalorder %s147, %s149
      %p156 = scmp.eq.s32.totalorder %s29, 1
      %p157 = por %p155, %p156
      %p158 = scmp.ne.s32.totalorder %s149, %s150
      %p159 = scmp.eq.s32.totalorder %s29, 0
      %p160 = por %p158, %p159
      %p161 = scmp.ne.s32.totalorder %s149, %s150
      %p162 = scmp.eq.s32.totalorder %s30, 1
      %p163 = por %p161, %p162
      %p165 = scmp.ne.s32.totalorder %s150, %s164
      %p166 = scmp.eq.s32.totalorder %s30, 0
      %p167 = por %p165, %p166
      %s169 = sadd.s32 %s168, 1
      %p172 = scmp.eq.s32.totalorder %s24, 1
      %p173 = scmp.ne.s32.totalorder %s168, %s170
      %p174 = scmp.eq.s32.totalorder %s24, 0
      %p175 = por %p173, %p174
      %p176 = scmp.ne.s32.totalorder %s168, %s170
      %p177 = scmp.eq.s32.totalorder %s29, 1
      %p178 = por %p176, %p177
      %p179 = scmp.ne.s32.totalorder %s170, %s171
      %p180 = scmp.eq.s32.totalorder %s29, 0
      %p181 = por %p179, %p180
      %p182 = scmp.ne.s32.totalorder %s170, %s171
      %p183 = scmp.eq.s32.totalorder %s30, 1
      %p184 = por %p182, %p183
      %p186 = scmp.ne.s32.totalorder %s171, %s185
      %p187 = scmp.eq.s32.totalorder %s30, 0
      %p188 = por %p186, %p187
      %s190 = sadd.s32 %s189, 1
      %p193 = scmp.eq.s32.totalorder %s24, 1
      %p194 = scmp.ne.s32.totalorder %s189, %s191
      %p195 = scmp.eq.s32.totalorder %s24, 0
      %p196 = por %p194, %p195
      %p197 = scmp.ne.s32.totalorder %s189, %s191
      %p198 = scmp.eq.s32.totalorder %s29, 1
      %p199 = por %p197, %p198
      %p200 = scmp.ne.s32.totalorder %s191, %s192
      %p201 = scmp.eq.s32.totalorder %s29, 0
      %p202 = por %p200, %p201
      %p203 = scmp.ne.s32.totalorder %s191, %s192
      %p204 = scmp.eq.s32.totalorder %s30, 1
      %p205 = por %p203, %p204
      %p207 = scmp.ne.s32.totalorder %s192, %s206
      %p208 = scmp.eq.s32.totalorder %s30, 0
      %p209 = por %p207, %p208
      %s211 = sadd.s32 %s210, 1
      %p214 = scmp.eq.s32.totalorder %s24, 1
      %p215 = scmp.ne.s32.totalorder %s210, %s212
      %p216 = scmp.eq.s32.totalorder %s24, 0
      %p217 = por %p215, %p216
      %p218 = scmp.ne.s32.totalorder %s210, %s212
      %p219 = scmp.eq.s32.totalorder %s29, 1
      %p220 = por %p218, %p219
      %p221 = scmp.ne.s32.totalorder %s212, %s213
      %p222 = scmp.eq.s32.totalorder %s29, 0
      %p223 = por %p221, %p222
      %p224 = scmp.ne.s32.totalorder %s212, %s213
      %p225 = scmp.eq.s32.totalorder %s30, 1
      %p226 = por %p224, %p225
      %p228 = scmp.ne.s32.totalorder %s213, %s227
      %p229 = scmp.eq.s32.totalorder %s30, 0
      %p230 = por %p228, %p229
      %s232 = sadd.s32 %s231, 1
      %p235 = scmp.eq.s32.totalorder %s24, 1
      %p236 = scmp.ne.s32.totalorder %s231, %s233
      %p237 = scmp.eq.s32.totalorder %s24, 0
      %p238 = por %p236, %p237
      %p239 = scmp.ne.s32.totalorder %s231, %s233
      %p240 = scmp.eq.s32.totalorder %s29, 1
      %p241 = por %p239, %p240
      %p242 = scmp.ne.s32.totalorder %s233, %s234
      %p243 = scmp.eq.s32.totalorder %s29, 0
      %p244 = por %p242, %p243
      %p245 = scmp.ne.s32.totalorder %s233, %s234
      %p246 = scmp.eq.s32.totalorder %s30, 1
      %p247 = por %p245, %p246
      %p249 = scmp.ne.s32.totalorder %s234, %s248
      %p250 = scmp.eq.s32.totalorder %s30, 0
      %p251 = por %p249, %p250
      %s253 = sadd.s32 %s252, 1
      %p256 = scmp.eq.s32.totalorder %s24, 1
      %p257 = scmp.ne.s32.totalorder %s252, %s254
      %p258 = scmp.eq.s32.totalorder %s24, 0
      %p259 = por %p257, %p258
      %p260 = scmp.ne.s32.totalorder %s252, %s254
      %p261 = scmp.eq.s32.totalorder %s29, 1
      %p262 = por %p260, %p261
      %p263 = scmp.ne.s32.totalorder %s254, %s255
      %p264 = scmp.eq.s32.totalorder %s29, 0
      %p265 = por %p263, %p264
      %p266 = scmp.ne.s32.totalorder %s254, %s255
      %p267 = scmp.eq.s32.totalorder %s30, 1
      %p268 = por %p266, %p267
      %p270 = scmp.ne.s32.totalorder %s255, %s269
      %p271 = scmp.eq.s32.totalorder %s30, 0
      %p272 = por %p270, %p271
      %s274 = sadd.s32 %s273, 1
      %p277 = scmp.eq.s32.totalorder %s24, 1
      %p278 = scmp.ne.s32.totalorder %s273, %s275
      %p279 = scmp.eq.s32.totalorder %s24, 0
      %p280 = por %p278, %p279
      %p281 = scmp.ne.s32.totalorder %s273, %s275
      %p282 = scmp.eq.s32.totalorder %s29, 1
      %p283 = por %p281, %p282
      %p284 = scmp.ne.s32.totalorder %s275, %s276
      %p285 = scmp.eq.s32.totalorder %s29, 0
      %p286 = por %p284, %p285
      %p287 = scmp.ne.s32.totalorder %s275, %s276
      %p288 = scmp.eq.s32.totalorder %s30, 1
      %p289 = por %p287, %p288
      %p291 = scmp.ne.s32.totalorder %s276, %s290
      %p292 = scmp.eq.s32.totalorder %s30, 0
      %p293 = por %p291, %p292
      %s295 = sadd.s32 %s294, 1
      %p298 = scmp.eq.s32.totalorder %s24, 1
      %p299 = scmp.ne.s32.totalorder %s294, %s296
      %p300 = scmp.eq.s32.totalorder %s24, 0
      %p301 = por %p299, %p300
      %p302 = scmp.ne.s32.totalorder %s294, %s296
      %p303 = scmp.eq.s32.totalorder %s29, 1
      %p304 = por %p302, %p303
      %p305 = scmp.ne.s32.totalorder %s296, %s297
      %p306 = scmp.eq.s32.totalorder %s29, 0
      %p307 = por %p305, %p306
      %p308 = scmp.ne.s32.totalorder %s296, %s297
      %p309 = scmp.eq.s32.totalorder %s30, 1
      %p310 = por %p308, %p309
      %p312 = scmp.ne.s32.totalorder %s297, %s311
      %p313 = scmp.eq.s32.totalorder %s30, 0
      %p314 = por %p312, %p313
      %s315 = ssub.s32 %s24, %s31
      %p316 = scmp.eq.s32.totalorder %s315, 0
      %s318 = sadd.s32 %s317, 1
      %s319 = scalar_select %p316, %s317, %s318
      %p322 = pneg %p316
      %p323 = scmp.eq.s32.totalorder %s24, 1
      %p324 = por %p322, %p323
      %p325 = scmp.ne.s32.totalorder %s317, %s320
      %p326 = scmp.eq.s32.totalorder %s24, 0
      %p327 = por %p325, %p326
      %p328 = scmp.ne.s32.totalorder %s317, %s320
      %p329 = scmp.eq.s32.totalorder %s29, 1
      %p330 = por %p328, %p329
      %p331 = scmp.ne.s32.totalorder %s320, %s321
      %p332 = scmp.eq.s32.totalorder %s29, 0
      %p333 = por %p331, %p332
      %p334 = scmp.ne.s32.totalorder %s320, %s321
      %p335 = scmp.eq.s32.totalorder %s30, 1
      %p336 = por %p334, %p335
      %p338 = scmp.ne.s32.totalorder %s321, %s337
      %p339 = scmp.eq.s32.totalorder %s30, 0
      %p340 = por %p338, %p339
      %p341 = scmp.le.s32.totalorder 1, %s24
      %p342 = scmp.lt.s32.totalorder %s24, 3
      %p343 = pnand %p341, %p342
      %p344 = pneg %p343
      // Predicated region
      $region9: #{tpu_custom_call.1} parent=5 // pred_check
        _
      $region10: #{tpu_custom_call.1} parent=5 // pred_check_branch
        %346 = sbr.rel (%p343) target = $region12
      $region11: #{tpu_custom_call.1} parent=5 // pred_region
        %s347 = ssub.s32 %s24, 1
        // Predicated region
        $region13: #{tpu_custom_call.1} parent=11 // pred_check
          %p348 = pneg %p97
        $region14: #{tpu_custom_call.1} parent=11 // pred_check_branch
          %350 = sbr.rel (%p348) target = $region16
        $region15: #{tpu_custom_call.1} parent=11 // pred_region
          _
        $region16: #{tpu_custom_call.1} parent=11 // pred_fallthru
          _
        // Predicated region
        $region17: #{tpu_custom_call.1} parent=11 // pred_check
          %p351 = pneg %p118
        $region18: #{tpu_custom_call.1} parent=11 // pred_check_branch
          %353 = sbr.rel (%p351) target = $region20
        $region19: #{tpu_custom_call.1} parent=11 // pred_region
          %s355 = ssub.s32 16, 16
          %356 = vsyncadd [#allocation4], %s355
          %s358 = sshll.u32 [#allocation3], 4
          %s359 = int_to_ptr.vmem [resolvable:$true] %s358
          %361 = dma.hbm_to_vmem [thread:$0]  %s3, 16, %s359, [#allocation4]
        $region20: #{tpu_custom_call.1} parent=11 // pred_fallthru
          _
        // Predicated region
        $region21: #{tpu_custom_call.1} parent=11 // pred_check
          %p362 = pneg %p139
        $region22: #{tpu_custom_call.1} parent=11 // pred_check_branch
          %364 = sbr.rel (%p362) target = $region24
        $region23: #{tpu_custom_call.1} parent=11 // pred_region
          _
        $region24: #{tpu_custom_call.1} parent=11 // pred_fallthru
          _
        // Predicated region
        $region25: #{tpu_custom_call.1} parent=11 // pred_check
          %p365 = pneg %p160
        $region26: #{tpu_custom_call.1} parent=11 // pred_check_branch
          %367 = sbr.rel (%p365) target = $region28
        $region27: #{tpu_custom_call.1} parent=11 // pred_region
          _
        $region28: #{tpu_custom_call.1} parent=11 // pred_fallthru
          _
        // Predicated region
        $region29: #{tpu_custom_call.1} parent=11 // pred_check
          %p368 = pneg %p181
        $region30: #{tpu_custom_call.1} parent=11 // pred_check_branch
          %370 = sbr.rel (%p368) target = $region32
        $region31: #{tpu_custom_call.1} parent=11 // pred_region
          _
        $region32: #{tpu_custom_call.1} parent=11 // pred_fallthru
          _
        // Predicated region
        $region33: #{tpu_custom_call.1} parent=11 // pred_check
          %p371 = pneg %p202
        $region34: #{tpu_custom_call.1} parent=11 // pred_check_branch
          %373 = sbr.rel (%p371) target = $region36
        $region35: #{tpu_custom_call.1} parent=11 // pred_region
          _
        $region36: #{tpu_custom_call.1} parent=11 // pred_fallthru
          _
        // Predicated region
        $region37: #{tpu_custom_call.1} parent=11 // pred_check
          %p374 = pneg %p223
        $region38: #{tpu_custom_call.1} parent=11 // pred_check_branch
          %376 = sbr.rel (%p374) target = $region40
        $region39: #{tpu_custom_call.1} parent=11 // pred_region
          %s378 = ssub.s32 16, 16
          %379 = vsyncadd [#allocation7], %s378
          %s381 = sshll.u32 [#allocation6], 4
          %s382 = int_to_ptr.vmem [resolvable:$true] %s381
          %384 = dma.hbm_to_vmem [thread:$0]  %s8, 16, %s382, [#allocation7]
        $region40: #{tpu_custom_call.1} parent=11 // pred_fallthru
          _
        // Predicated region
        $region41: #{tpu_custom_call.1} parent=11 // pred_check
          %p385 = pneg %p244
        $region42: #{tpu_custom_call.1} parent=11 // pred_check_branch
          %387 = sbr.rel (%p385) target = $region44
        $region43: #{tpu_custom_call.1} parent=11 // pred_region
          _
        $region44: #{tpu_custom_call.1} parent=11 // pred_fallthru
          _
        // Predicated region
        $region45: #{tpu_custom_call.1} parent=11 // pred_check
          %p388 = pneg %p265
        $region46: #{tpu_custom_call.1} parent=11 // pred_check_branch
          %390 = sbr.rel (%p388) target = $region48
        $region47: #{tpu_custom_call.1} parent=11 // pred_region
          _
        $region48: #{tpu_custom_call.1} parent=11 // pred_fallthru
          _
        // Predicated region
        $region49: #{tpu_custom_call.1} parent=11 // pred_check
          %p391 = pneg %p286
        $region50: #{tpu_custom_call.1} parent=11 // pred_check_branch
          %393 = sbr.rel (%p391) target = $region52
        $region51: #{tpu_custom_call.1} parent=11 // pred_region
          _
        $region52: #{tpu_custom_call.1} parent=11 // pred_fallthru
          _
        // Predicated region
        $region53: #{tpu_custom_call.1} parent=11 // pred_check
          %p394 = pneg %p307
        $region54: #{tpu_custom_call.1} parent=11 // pred_check_branch
          %396 = sbr.rel (%p394) target = $region56
        $region55: #{tpu_custom_call.1} parent=11 // pred_region
          _
        $region56: #{tpu_custom_call.1} parent=11 // pred_fallthru
          _
      $region12: #{tpu_custom_call.1} parent=5 // pred_fallthru
        _
      %p397 = scmp.lt.s32.totalorder %s24, 2
      // Predicated region
      $region57: #{tpu_custom_call.1} parent=5 // pred_check
        %p398 = pneg %p397
      $region58: #{tpu_custom_call.1} parent=5 // pred_check_branch
        %400 = sbr.rel (%p398) target = $region60
      $region59: #{tpu_custom_call.1} parent=5 // pred_region
        // Predicated region
        $region61: #{tpu_custom_call.1} parent=59 // pred_check
          %p401 = pneg %p44
        $region62: #{tpu_custom_call.1} parent=59 // pred_check_branch
          %403 = sbr.rel (%p401) target = $region64
        $region63: #{tpu_custom_call.1} parent=59 // pred_region
          %s404 = smul.u32 2, %s24
          %p405 = scmp.lt.s32.totalorder %s404, 3
          %s406 = scalar_select %p405, %s404, 3
          %s407 = smul.addr %s406, 8
          %s408 = scalar_lea.vmem %s0, %s407
          %s409 = smul.u32 2, %s24
        $region64: #{tpu_custom_call.1} parent=59 // pred_fallthru
          _
        // Predicated region
        $region65: #{tpu_custom_call.1} parent=59 // pred_check
          %p410 = pneg %p70
        $region66: #{tpu_custom_call.1} parent=59 // pred_check_branch
          %412 = sbr.rel (%p410) target = $region68
        $region67: #{tpu_custom_call.1} parent=59 // pred_region
          %s413 = smul.u32 2, %s24
          %p414 = scmp.lt.s32.totalorder %s413, 3
          %s415 = scalar_select %p414, %s413, 3
          %s416 = smul.addr %s415, 2
          %s417 = smul.addr %s416, 8
          %s418 = scalar_lea.vmem %s1, %s417
          %s419 = smul.u32 2, %s24
        $region68: #{tpu_custom_call.1} parent=59 // pred_fallthru
          _
      $region60: #{tpu_custom_call.1} parent=5 // pred_fallthru
        _
      %p420 = scmp.le.s32.totalorder 1, %s24
      %p421 = scmp.lt.s32.totalorder %s24, 3
      %p422 = pnand %p420, %p421
      %p423 = pneg %p422
      // Predicated region
      $region69: #{tpu_custom_call.1} parent=5 // pred_check
        _
      $region70: #{tpu_custom_call.1} parent=5 // pred_check_branch
        %425 = sbr.rel (%p422) target = $region72
      $region71: #{tpu_custom_call.1} parent=5 // pred_region
        %s426 = ssub.s32 %s24, 1
        // Predicated region
        $region73: #{tpu_custom_call.1} parent=71 // pred_check
          %p427 = pneg %p118
        $region74: #{tpu_custom_call.1} parent=71 // pred_check_branch
          %429 = sbr.rel (%p427) target = $region76
        $region75: #{tpu_custom_call.1} parent=71 // pred_region
          %430 = dma.done [#allocation4], 16
        $region76: #{tpu_custom_call.1} parent=71 // pred_fallthru
          _
        // Predicated region
        $region77: #{tpu_custom_call.1} parent=71 // pred_check
          %p431 = pneg %p223
        $region78: #{tpu_custom_call.1} parent=71 // pred_check_branch
          %433 = sbr.rel (%p431) target = $region80
        $region79: #{tpu_custom_call.1} parent=71 // pred_region
          %434 = dma.done [#allocation7], 16
        $region80: #{tpu_custom_call.1} parent=71 // pred_fallthru
          _
        %s435 = smul.u32 2, %s29
        %p436 = scmp.lt.s32.totalorder %s435, 3
        %s437 = scalar_select %p436, %s435, 3
        %s438 = smul.addr %s437, 8
        %s439 = scalar_lea.vmem %s0, %s438
        %p440 = pneg %p50
        %p441 = pneg %p47
        %s442 = smul.u32 2, %s29
        %p443 = scmp.lt.s32.totalorder %s442, 3
        %s444 = scalar_select %p443, %s442, 3
        %s445 = smul.addr %s444, 2
        %s446 = smul.addr %s445, 8
        %s447 = scalar_lea.vmem %s1, %s446
        %p448 = pneg %p76
        %p449 = pneg %p73
        %p450 = pneg %p97
        %p451 = pneg %p94
        %p452 = pneg %p118
        %p453 = pneg %p115
        %p454 = pneg %p139
        %p455 = pneg %p136
        %p456 = pneg %p160
        %p457 = pneg %p157
        %p458 = pneg %p181
        %p459 = pneg %p178
        %p460 = pneg %p202
        %p461 = pneg %p199
        %p462 = pneg %p223
        %p463 = pneg %p220
        %p464 = pneg %p244
        %p465 = pneg %p241
        %p466 = pneg %p265
        %p467 = pneg %p262
        %p468 = pneg %p286
        %p469 = pneg %p283
        %p470 = pneg %p307
        %p471 = pneg %p304
        %p472 = pneg %p333
        %p473 = pneg %p330
        %s474 = sand.u32 %s320, 1
        %s475 = scalar_lea.sflag [#allocation5], %s474
        %s476 = sand.u32 %s320, 1
        %s477 = smul.addr %s476, 2
        %s478 = scalar_lea.vmem [#allocation8], %s477
        %s479 = smul.u32 2, %s29
        %p480 = scmp.lt.s32.totalorder %s479, 3
        %s481 = scalar_select %p480, %s479, 3
        %s482 = smul.addr %s481, 8
        %s483 = scalar_lea.vmem %s0, %s482
        %s484 = smul.u32 2, %s29
        %s485 = smul.u32 2, %s29
        %p486 = scmp.lt.s32.totalorder %s485, 3
        %s487 = scalar_select %p486, %s485, 3
        %s488 = smul.addr %s487, 2
        %s489 = smul.addr %s488, 8
        %s490 = scalar_lea.vmem %s1, %s489
        %s491 = smul.u32 2, %s29
        %v493 = vld [vmem:[%s4] sm:$0xff]
        %v494 = vld [vmem:[%s4 + $0x8] sm:$0xff]
        %v495 = vld [vmem:[%s4 + $0x10] sm:$0xff]
        %v496 = vld [vmem:[%s4 + $0x18] sm:$0xff]
        %v497 = vld [vmem:[%s4 + $0x20] sm:$0xff]
        %v498 = vld [vmem:[%s4 + $0x28] sm:$0xff]
        %v499 = vld [vmem:[%s4 + $0x30] sm:$0xff]
        %v500 = vld [vmem:[%s4 + $0x38] sm:$0xff]
        %v501 = vld [vmem:[%s5] sm:$0xff]
        %v502 = vld [vmem:[%s5 + $0x8] sm:$0xff]
        %v503 = vld [vmem:[%s6] sm:$0xff]
        %v504 = vld [vmem:[%s6 + $0x8] sm:$0xff]
        %v505 = vld [vmem:[%s6 + $0x10] sm:$0xff]
        %v506 = vld [vmem:[%s6 + $0x18] sm:$0xff]
        %v507 = vld [vmem:[%s6 + $0x20] sm:$0xff]
        %v508 = vld [vmem:[%s6 + $0x28] sm:$0xff]
        %v509 = vld [vmem:[%s6 + $0x30] sm:$0xff]
        %v510 = vld [vmem:[%s6 + $0x38] sm:$0xff]
        %v511 = vlaneseq
        %v512 = vshrl.u32 %v511, 7
        %v513 = vadd.s32 %v512, 8
        %v514 = vlaneseq
        %v515 = vand.u32 %v514, 127
        %vm516 = vcmp.eq.s32.totalorder %v512, %v515
        %vm517 = vcmp.eq.s32.totalorder %v513, %v515
        %v518 = vsel %vm516, 1, 0
        %v519 = vsel %vm517, 1, 0
        %v520 = vcvt.s32.f32 %v518
        %v521 = vcvt.s32.f32 %v519
        %v522 = vld [vmem:[%s490] sm:$0xff]
        %v523 = vld [vmem:[%s490 + $0x8] sm:$0xff]
        %vm524 = vcmask 31744
        %v526 = vsel %vm524, %v522, 0
        %v529 = vsel %vm524, %v523, 0
        %531 = vmatprep.subr.mxu0 0.0
        %532 = vmatpush1.xpose.msra.mxu0 0.0
        %533 = vmatprep.subr.mxu0 0.0
        %534 = vmatpush1.xpose.msra.mxu0 0.0
        %535 = vmatprep.subr.mxu0 0.0
        %536 = vmatpush1.xpose.msra.mxu0 0.0
        %537 = vmatprep.subr.mxu0 0.0
        %538 = vmatpush1.xpose.msra.mxu0 0.0
        %539 = vmatprep.subr.mxu0 0.0
        %540 = vmatpush1.xpose.msra.mxu0 0.0
        %541 = vmatprep.subr.mxu0 0.0
        %542 = vmatpush1.xpose.msra.mxu0 0.0
        %543 = vmatprep.subr.mxu0 0.0
        %544 = vmatpush1.xpose.msra.mxu0 0.0
        %545 = vmatprep.subr.mxu0 0.0
        %546 = vmatpush1.xpose.msra.mxu0 0.0
        %547 = vmatprep.subr.mxu0 0.0
        %548 = vmatpush1.xpose.msra.mxu0 0.0
        %549 = vmatprep.subr.mxu0 0.0
        %550 = vmatpush1.xpose.msra.mxu0 0.0
        %551 = vmatprep.subr.mxu0 0.0
        %552 = vmatpush1.xpose.msra.mxu0 0.0
        %553 = vmatprep.subr.mxu0 0.0
        %554 = vmatpush1.xpose.msra.mxu0 0.0
        %555 = vmatprep.subr.mxu0 0.0
        %556 = vmatpush1.xpose.msra.mxu0 0.0
        %557 = vmatprep.subr.mxu0 0.0
        %558 = vmatpush1.xpose.msra.mxu0 0.0
        %559 = vmatprep.subr.mxu0 0.0
        %560 = vmatpush1.xpose.msra.mxu0 %v529
        %561 = vmatprep.subr.mxu0 0.0
        %562 = vmatpush1.xpose.msra.mxu0 %v526
        %563 = vmatprep.subr.mxu0 0.0
        %564 = vmatpush2.xpose.msra.mxu0 0.0
        %565 = vmatprep.subr.mxu0 0.0
        %566 = vmatpush2.xpose.msra.mxu0 0.0
        %567 = vmatprep.subr.mxu0 0.0
        %568 = vmatpush2.xpose.msra.mxu0 0.0
        %569 = vmatprep.subr.mxu0 0.0
        %570 = vmatpush2.xpose.msra.mxu0 0.0
        %571 = vmatprep.subr.mxu0 0.0
        %572 = vmatpush2.xpose.msra.mxu0 0.0
        %573 = vmatprep.subr.mxu0 0.0
        %574 = vmatpush2.xpose.msra.mxu0 0.0
        %575 = vmatprep.subr.mxu0 0.0
        %576 = vmatpush2.xpose.msra.mxu0 0.0
        %577 = vmatprep.subr.mxu0 0.0
        %578 = vmatpush2.xpose.msra.mxu0 0.0
        %579 = vmatprep.subr.mxu0 0.0
        %580 = vmatpush2.xpose.msra.mxu0 0.0
        %581 = vmatprep.subr.mxu0 0.0
        %582 = vmatpush2.xpose.msra.mxu0 0.0
        %583 = vmatprep.subr.mxu0 0.0
        %584 = vmatpush2.xpose.msra.mxu0 0.0
        %585 = vmatprep.subr.mxu0 0.0
        %586 = vmatpush2.xpose.msra.mxu0 0.0
        %587 = vmatprep.subr.mxu0 0.0
        %588 = vmatpush2.xpose.msra.mxu0 0.0
        %589 = vmatprep.subr.mxu0 0.0
        %590 = vmatpush2.xpose.msra.mxu0 0.0
        %591 = vmatprep.subr.mxu0 0.0
        %592 = vmatpush2.xpose.msra.mxu0 0.0
        %593 = vmatprep.subr.mxu0 0.0
        %594 = vmatpush2.xpose.msra.mxu0 0.0
        %595 = vmatprep.mubr.f32.mxu0 0.0
        %596 = vmatmul.mubr.f32.gmra.mxu0 %v526
        %v597 = vpop.f32.mrf.mxu0
        %v598 = vadd.f32 0.0, %v597
        %v599 = vpop.f32.mrf.mxu0
        %600 = vmatprep.mubr.f32.mxu0 0.0
        %601 = vmatmul.mubr.f32.gmra.mxu0 %v529
        %v602 = vpop.f32.mrf.mxu0
        %v603 = vadd.f32 0.0, %v602
        %v604 = vpop.f32.mrf.mxu0
        %605 = vdwg.mxu0
        %v606 = vmul.f32 %v598, %v520
        %v607 = vmul.f32 %v603, %v521
        %vm608 = vcmask 130048
        %v609 = vsel %vm608, %v606, 0.0
        %610 = vadd.xlane.f32.xlu0 %v609
        %v611 = vpop.xlane.xlu0 %610
        %v612 = vsel %vm608, %v607, 0.0
        %613 = vadd.xlane.f32.xlu0 %v612
        %v614 = vpop.xlane.xlu0 %613
        %v615 = vadd.f32 %v609, %v612
        %v616 = vrot.slane %v615, 4
        %v617 = vadd.f32 %v615, %v616
        %v618 = vrot.slane %v617, 2
        %v619 = vadd.f32 %v617, %v618
        %v620 = vrot.slane %v619, 1
        %v621 = vadd.f32 %v619, %v620
        %v622 = vadd.f32 %v611, %v621
        %v623 = vadd.f32 %v614, %v621
        %v624 = vmul.f32 %v598, 2.0
        %v625 = vmul.f32 %v603, 2.0
        %v626 = vsub.f32 %v622, %v624
        %v627 = vsub.f32 %v623, %v625
        %v628 = vmax.f32 %v626, 0.0
        %v629 = vmax.f32 %v627, 0.0
        %v630 = vmul.f32 %v628, -1.0
        %v631 = vmul.f32 %v629, -1.0
        %v632 = vmul.f32 %v630, 1.442695
        %v633 = vpow.pop %v632
        %v634 = vmul.f32 %v631, 1.442695
        %v635 = vpow.pop %v634
        %v636 = vsel %vm608, %v633, 0.0
        %637 = vadd.xlane.f32.xlu0 %v636
        %v638 = vpop.xlane.xlu0 %637
        %v639 = vsel %vm608, %v635, 0.0
        %640 = vadd.xlane.f32.xlu0 %v639
        %v641 = vpop.xlane.xlu0 %640
        %v642 = vrcp.pop %v638
        %v643 = vrcp.pop %v641
        %v644 = vmul.f32 %v633, %v642
        %v645 = vmul.f32 %v635, %v643
        %v647 = vsel %vm608, %v493, 0
        %v650 = vsel %vm608, %v494, 0
        %v653 = vsel %vm608, %v495, 0
        %v656 = vsel %vm608, %v496, 0
        %v659 = vsel %vm608, %v497, 0
        %v662 = vsel %vm608, %v498, 0
        %v665 = vsel %vm608, %v499, 0
        %v668 = vsel %vm608, %v500, 0
        %v671 = vsel %vm608, %v644, 0
        %v674 = vsel %vm608, %v645, 0
        %676 = vmatprep.subr.mxu0 0.0
        %677 = vmatpush1.xpose.msra.mxu0 0.0
        %678 = vmatprep.subr.mxu0 0.0
        %679 = vmatpush1.xpose.msra.mxu0 0.0
        %680 = vmatprep.subr.mxu0 0.0
        %681 = vmatpush1.xpose.msra.mxu0 0.0
        %682 = vmatprep.subr.mxu0 0.0
        %683 = vmatpush1.xpose.msra.mxu0 0.0
        %684 = vmatprep.subr.mxu0 0.0
        %685 = vmatpush1.xpose.msra.mxu0 0.0
        %686 = vmatprep.subr.mxu0 0.0
        %687 = vmatpush1.xpose.msra.mxu0 0.0
        %688 = vmatprep.subr.mxu0 0.0
        %689 = vmatpush1.xpose.msra.mxu0 0.0
        %690 = vmatprep.subr.mxu0 0.0
        %691 = vmatpush1.xpose.msra.mxu0 0.0
        %692 = vmatprep.subr.mxu0 0.0
        %693 = vmatpush1.xpose.msra.mxu0 0.0
        %694 = vmatprep.subr.mxu0 0.0
        %695 = vmatpush1.xpose.msra.mxu0 0.0
        %696 = vmatprep.subr.mxu0 0.0
        %697 = vmatpush1.xpose.msra.mxu0 0.0
        %698 = vmatprep.subr.mxu0 0.0
        %699 = vmatpush1.xpose.msra.mxu0 0.0
        %700 = vmatprep.subr.mxu0 0.0
        %701 = vmatpush1.xpose.msra.mxu0 0.0
        %702 = vmatprep.subr.mxu0 0.0
        %703 = vmatpush1.xpose.msra.mxu0 0.0
        %704 = vmatprep.subr.mxu0 0.0
        %705 = vmatpush1.xpose.msra.mxu0 %v674
        %706 = vmatprep.subr.mxu0 0.0
        %707 = vmatpush1.xpose.msra.mxu0 %v671
        %708 = vmatprep.subr.mxu0 0.0
        %709 = vmatpush2.xpose.msra.mxu0 0.0
        %710 = vmatprep.subr.mxu0 0.0
        %711 = vmatpush2.xpose.msra.mxu0 0.0
        %712 = vmatprep.subr.mxu0 0.0
        %713 = vmatpush2.xpose.msra.mxu0 0.0
        %714 = vmatprep.subr.mxu0 0.0
        %715 = vmatpush2.xpose.msra.mxu0 0.0
        %716 = vmatprep.subr.mxu0 0.0
        %717 = vmatpush2.xpose.msra.mxu0 0.0
        %718 = vmatprep.subr.mxu0 0.0
        %719 = vmatpush2.xpose.msra.mxu0 0.0
        %720 = vmatprep.subr.mxu0 0.0
        %721 = vmatpush2.xpose.msra.mxu0 0.0
        %722 = vmatprep.subr.mxu0 0.0
        %723 = vmatpush2.xpose.msra.mxu0 0.0
        %724 = vmatprep.subr.mxu0 0.0
        %725 = vmatpush2.xpose.msra.mxu0 0.0
        %726 = vmatprep.subr.mxu0 0.0
        %727 = vmatpush2.xpose.msra.mxu0 0.0
        %728 = vmatprep.subr.mxu0 0.0
        %729 = vmatpush2.xpose.msra.mxu0 0.0
        %730 = vmatprep.subr.mxu0 0.0
        %731 = vmatpush2.xpose.msra.mxu0 0.0
        %732 = vmatprep.subr.mxu0 0.0
        %733 = vmatpush2.xpose.msra.mxu0 0.0
        %734 = vmatprep.subr.mxu0 0.0
        %735 = vmatpush2.xpose.msra.mxu0 0.0
        %736 = vmatprep.subr.mxu0 0.0
        %737 = vmatpush2.xpose.msra.mxu0 0.0
        %738 = vmatprep.subr.mxu0 0.0
        %739 = vmatpush2.xpose.msra.mxu0 0.0
        %740 = vmatprep.mubr.f32.mxu0 0.0
        %741 = vmatmul.mubr.f32.gmra.mxu0 %v647
        %v742 = vpop.f32.mrf.mxu0
        %v743 = vadd.f32 0.0, %v742
        %v744 = vpop.f32.mrf.mxu0
        %745 = vmatprep.mubr.f32.mxu0 0.0
        %746 = vmatmul.mubr.f32.gmra.mxu0 %v650
        %v747 = vpop.f32.mrf.mxu0
        %v748 = vadd.f32 0.0, %v747
        %v749 = vpop.f32.mrf.mxu0
        %750 = vmatprep.mubr.f32.mxu0 0.0
        %751 = vmatmul.mubr.f32.gmra.mxu0 %v653
        %v752 = vpop.f32.mrf.mxu0
        %v753 = vadd.f32 0.0, %v752
        %v754 = vpop.f32.mrf.mxu0
        %755 = vmatprep.mubr.f32.mxu0 0.0
        %756 = vmatmul.mubr.f32.gmra.mxu0 %v656
        %v757 = vpop.f32.mrf.mxu0
        %v758 = vadd.f32 0.0, %v757
        %v759 = vpop.f32.mrf.mxu0
        %760 = vmatprep.mubr.f32.mxu0 0.0
        %761 = vmatmul.mubr.f32.gmra.mxu0 %v659
        %v762 = vpop.f32.mrf.mxu0
        %v763 = vadd.f32 0.0, %v762
        %v764 = vpop.f32.mrf.mxu0
        %765 = vmatprep.mubr.f32.mxu0 0.0
        %766 = vmatmul.mubr.f32.gmra.mxu0 %v662
        %v767 = vpop.f32.mrf.mxu0
        %v768 = vadd.f32 0.0, %v767
        %v769 = vpop.f32.mrf.mxu0
        %770 = vmatprep.mubr.f32.mxu0 0.0
        %771 = vmatmul.mubr.f32.gmra.mxu0 %v665
        %v772 = vpop.f32.mrf.mxu0
        %v773 = vadd.f32 0.0, %v772
        %v774 = vpop.f32.mrf.mxu0
        %775 = vmatprep.mubr.f32.mxu0 0.0
        %776 = vmatmul.mubr.f32.gmra.mxu0 %v668
        %v777 = vpop.f32.mrf.mxu0
        %v778 = vadd.f32 0.0, %v777
        %v779 = vpop.f32.mrf.mxu0
        %780 = vdwg.mxu0
        %v782 = vsel %vm608, %v743, 0
        %v785 = vsel %vm608, %v748, 0
        %v788 = vsel %vm608, %v753, 0
        %v791 = vsel %vm608, %v758, 0
        %v794 = vsel %vm608, %v763, 0
        %v797 = vsel %vm608, %v768, 0
        %v800 = vsel %vm608, %v773, 0
        %v803 = vsel %vm608, %v778, 0
        %805 = vmatprep.subr.mxu0 0.0
        %806 = vmatpush1.msra.mxu0 0.0
        %807 = vmatprep.subr.mxu0 0.0
        %808 = vmatpush1.msra.mxu0 0.0
        %809 = vmatprep.subr.mxu0 0.0
        %810 = vmatpush1.msra.mxu0 0.0
        %811 = vmatprep.subr.mxu0 0.0
        %812 = vmatpush1.msra.mxu0 0.0
        %813 = vmatprep.subr.mxu0 0.0
        %814 = vmatpush1.msra.mxu0 0.0
        %815 = vmatprep.subr.mxu0 0.0
        %816 = vmatpush1.msra.mxu0 0.0
        %817 = vmatprep.subr.mxu0 0.0
        %818 = vmatpush1.msra.mxu0 0.0
        %819 = vmatprep.subr.mxu0 0.0
        %820 = vmatpush1.msra.mxu0 0.0
        %821 = vmatprep.subr.mxu0 0.0
        %822 = vmatpush1.msra.mxu0 0.0
        %823 = vmatprep.subr.mxu0 0.0
        %824 = vmatpush1.msra.mxu0 0.0
        %825 = vmatprep.subr.mxu0 0.0
        %826 = vmatpush1.msra.mxu0 0.0
        %827 = vmatprep.subr.mxu0 0.0
        %828 = vmatpush1.msra.mxu0 0.0
        %829 = vmatprep.subr.mxu0 0.0
        %830 = vmatpush1.msra.mxu0 0.0
        %831 = vmatprep.subr.mxu0 0.0
        %832 = vmatpush1.msra.mxu0 0.0
        %833 = vmatprep.subr.mxu0 0.0
        %834 = vmatpush1.msra.mxu0 %v502
        %835 = vmatprep.subr.mxu0 0.0
        %836 = vmatpush1.msra.mxu0 %v501
        %837 = vmatprep.subr.mxu0 0.0
        %838 = vmatpush2.msra.mxu0 0.0
        %839 = vmatprep.subr.mxu0 0.0
        %840 = vmatpush2.msra.mxu0 0.0
        %841 = vmatprep.subr.mxu0 0.0
        %842 = vmatpush2.msra.mxu0 0.0
        %843 = vmatprep.subr.mxu0 0.0
        %844 = vmatpush2.msra.mxu0 0.0
        %845 = vmatprep.subr.mxu0 0.0
        %846 = vmatpush2.msra.mxu0 0.0
        %847 = vmatprep.subr.mxu0 0.0
        %848 = vmatpush2.msra.mxu0 0.0
        %849 = vmatprep.subr.mxu0 0.0
        %850 = vmatpush2.msra.mxu0 0.0
        %851 = vmatprep.subr.mxu0 0.0
        %852 = vmatpush2.msra.mxu0 0.0
        %853 = vmatprep.subr.mxu0 0.0
        %854 = vmatpush2.msra.mxu0 0.0
        %855 = vmatprep.subr.mxu0 0.0
        %856 = vmatpush2.msra.mxu0 0.0
        %857 = vmatprep.subr.mxu0 0.0
        %858 = vmatpush2.msra.mxu0 0.0
        %859 = vmatprep.subr.mxu0 0.0
        %860 = vmatpush2.msra.mxu0 0.0
        %861 = vmatprep.subr.mxu0 0.0
        %862 = vmatpush2.msra.mxu0 0.0
        %863 = vmatprep.subr.mxu0 0.0
        %864 = vmatpush2.msra.mxu0 0.0
        %865 = vmatprep.subr.mxu0 0.0
        %866 = vmatpush2.msra.mxu0 0.0
        %867 = vmatprep.subr.mxu0 0.0
        %868 = vmatpush2.msra.mxu0 0.0
        %869 = vmatprep.mubr.f32.mxu0 0.0
        %870 = vmatmul.mubr.f32.gmra.mxu0 %v782
        %v871 = vpop.f32.mrf.mxu0
        %v872 = vadd.f32 0.0, %v871
        %v873 = vpop.f32.mrf.mxu0
        %874 = vmatprep.mubr.f32.mxu0 0.0
        %875 = vmatmul.mubr.f32.gmra.mxu0 %v785
        %v876 = vpop.f32.mrf.mxu0
        %v877 = vadd.f32 0.0, %v876
        %v878 = vpop.f32.mrf.mxu0
        %879 = vmatprep.mubr.f32.mxu0 0.0
        %880 = vmatmul.mubr.f32.gmra.mxu0 %v788
        %v881 = vpop.f32.mrf.mxu0
        %v882 = vadd.f32 0.0, %v881
        %v883 = vpop.f32.mrf.mxu0
        %884 = vmatprep.mubr.f32.mxu0 0.0
        %885 = vmatmul.mubr.f32.gmra.mxu0 %v791
        %v886 = vpop.f32.mrf.mxu0
        %v887 = vadd.f32 0.0, %v886
        %v888 = vpop.f32.mrf.mxu0
        %889 = vmatprep.mubr.f32.mxu0 0.0
        %890 = vmatmul.mubr.f32.gmra.mxu0 %v794
        %v891 = vpop.f32.mrf.mxu0
        %v892 = vadd.f32 0.0, %v891
        %v893 = vpop.f32.mrf.mxu0
        %894 = vmatprep.mubr.f32.mxu0 0.0
        %895 = vmatmul.mubr.f32.gmra.mxu0 %v797
        %v896 = vpop.f32.mrf.mxu0
        %v897 = vadd.f32 0.0, %v896
        %v898 = vpop.f32.mrf.mxu0
        %899 = vmatprep.mubr.f32.mxu0 0.0
        %900 = vmatmul.mubr.f32.gmra.mxu0 %v800
        %v901 = vpop.f32.mrf.mxu0
        %v902 = vadd.f32 0.0, %v901
        %v903 = vpop.f32.mrf.mxu0
        %904 = vmatprep.mubr.f32.mxu0 0.0
        %905 = vmatmul.mubr.f32.gmra.mxu0 %v803
        %v906 = vpop.f32.mrf.mxu0
        %v907 = vadd.f32 0.0, %v906
        %v908 = vpop.f32.mrf.mxu0
        %909 = vdwg.mxu0
        %v910 = vmul.f32 %v872, %v503
        %v911 = vmul.f32 %v877, %v504
        %v912 = vmul.f32 %v882, %v505
        %v913 = vmul.f32 %v887, %v506
        %v914 = vmul.f32 %v892, %v507
        %v915 = vmul.f32 %v897, %v508
        %v916 = vmul.f32 %v902, %v509
        %v917 = vmul.f32 %v907, %v510
        %v918 = vld [vmem:[%s483] sm:$0xff]
        %vm919 = vcmask 523264
        %v921 = vsel %vm919, %v918, 0
        %923 = vmatprep.subr.mxu0 0.0
        %924 = vmatpush1.msra.mxu0 0.0
        %925 = vmatprep.subr.mxu0 0.0
        %926 = vmatpush1.msra.mxu0 0.0
        %927 = vmatprep.subr.mxu0 0.0
        %928 = vmatpush1.msra.mxu0 0.0
        %929 = vmatprep.subr.mxu0 0.0
        %930 = vmatpush1.msra.mxu0 0.0
        %931 = vmatprep.subr.mxu0 0.0
        %932 = vmatpush1.msra.mxu0 0.0
        %933 = vmatprep.subr.mxu0 0.0
        %934 = vmatpush1.msra.mxu0 0.0
        %935 = vmatprep.subr.mxu0 0.0
        %936 = vmatpush1.msra.mxu0 0.0
        %937 = vmatprep.subr.mxu0 0.0
        %938 = vmatpush1.msra.mxu0 0.0
        %939 = vmatprep.subr.mxu0 0.0
        %940 = vmatpush1.msra.mxu0 %v917
        %941 = vmatprep.subr.mxu0 0.0
        %942 = vmatpush1.msra.mxu0 %v916
        %943 = vmatprep.subr.mxu0 0.0
        %944 = vmatpush1.msra.mxu0 %v915
        %945 = vmatprep.subr.mxu0 0.0
        %946 = vmatpush1.msra.mxu0 %v914
        %947 = vmatprep.subr.mxu0 0.0
        %948 = vmatpush1.msra.mxu0 %v913
        %949 = vmatprep.subr.mxu0 0.0
        %950 = vmatpush1.msra.mxu0 %v912
        %951 = vmatprep.subr.mxu0 0.0
        %952 = vmatpush1.msra.mxu0 %v911
        %953 = vmatprep.subr.mxu0 0.0
        %954 = vmatpush1.msra.mxu0 %v910
        %955 = vmatprep.subr.mxu0 0.0
        %956 = vmatpush2.msra.mxu0 0.0
        %957 = vmatprep.subr.mxu0 0.0
        %958 = vmatpush2.msra.mxu0 0.0
        %959 = vmatprep.subr.mxu0 0.0
        %960 = vmatpush2.msra.mxu0 0.0
        %961 = vmatprep.subr.mxu0 0.0
        %962 = vmatpush2.msra.mxu0 0.0
        %963 = vmatprep.subr.mxu0 0.0
        %964 = vmatpush2.msra.mxu0 0.0
        %965 = vmatprep.subr.mxu0 0.0
        %966 = vmatpush2.msra.mxu0 0.0
        %967 = vmatprep.subr.mxu0 0.0
        %968 = vmatpush2.msra.mxu0 0.0
        %969 = vmatprep.subr.mxu0 0.0
        %970 = vmatpush2.msra.mxu0 0.0
        %971 = vmatprep.subr.mxu0 0.0
        %972 = vmatpush2.msra.mxu0 0.0
        %973 = vmatprep.subr.mxu0 0.0
        %974 = vmatpush2.msra.mxu0 0.0
        %975 = vmatprep.subr.mxu0 0.0
        %976 = vmatpush2.msra.mxu0 0.0
        %977 = vmatprep.subr.mxu0 0.0
        %978 = vmatpush2.msra.mxu0 0.0
        %979 = vmatprep.subr.mxu0 0.0
        %980 = vmatpush2.msra.mxu0 0.0
        %981 = vmatprep.subr.mxu0 0.0
        %982 = vmatpush2.msra.mxu0 0.0
        %983 = vmatprep.subr.mxu0 0.0
        %984 = vmatpush2.msra.mxu0 0.0
        %985 = vmatprep.subr.mxu0 0.0
        %986 = vmatpush2.msra.mxu0 0.0
        %987 = vmatprep.mubr.f32.mxu0 0.0
        %988 = vmatmul.mubr.f32.gmra.mxu0 %v921
        %v989 = vpop.f32.mrf.mxu0
        %v990 = vadd.f32 0.0, %v989
        %v991 = vpop.f32.mrf.mxu0
        %992 = vdwg.mxu0
        %v994 = vsel %vm919, %v990, 0
        %996 = vmatprep.subr.mxu0 0.0
        %997 = vmatpush1.msra.mxu0 0.0
        %998 = vmatprep.subr.mxu0 0.0
        %999 = vmatpush1.msra.mxu0 0.0
        %1000 = vmatprep.subr.mxu0 0.0
        %1001 = vmatpush1.msra.mxu0 0.0
        %1002 = vmatprep.subr.mxu0 0.0
        %1003 = vmatpush1.msra.mxu0 0.0
        %1004 = vmatprep.subr.mxu0 0.0
        %1005 = vmatpush1.msra.mxu0 0.0
        %1006 = vmatprep.subr.mxu0 0.0
        %1007 = vmatpush1.msra.mxu0 0.0
        %1008 = vmatprep.subr.mxu0 0.0
        %1009 = vmatpush1.msra.mxu0 0.0
        %1010 = vmatprep.subr.mxu0 0.0
        %1011 = vmatpush1.msra.mxu0 0.0
        %1012 = vmatprep.subr.mxu0 0.0
        %1013 = vmatpush1.msra.mxu0 %v917
        %1014 = vmatprep.subr.mxu0 0.0
        %1015 = vmatpush1.msra.mxu0 %v916
        %1016 = vmatprep.subr.mxu0 0.0
        %1017 = vmatpush1.msra.mxu0 %v915
        %1018 = vmatprep.subr.mxu0 0.0
        %1019 = vmatpush1.msra.mxu0 %v914
        %1020 = vmatprep.subr.mxu0 0.0
        %1021 = vmatpush1.msra.mxu0 %v913
        %1022 = vmatprep.subr.mxu0 0.0
        %1023 = vmatpush1.msra.mxu0 %v912
        %1024 = vmatprep.subr.mxu0 0.0
        %1025 = vmatpush1.msra.mxu0 %v911
        %1026 = vmatprep.subr.mxu0 0.0
        %1027 = vmatpush1.msra.mxu0 %v910
        %1028 = vmatprep.subr.mxu0 0.0
        %1029 = vmatpush2.msra.mxu0 0.0
        %1030 = vmatprep.subr.mxu0 0.0
        %1031 = vmatpush2.msra.mxu0 0.0
        %1032 = vmatprep.subr.mxu0 0.0
        %1033 = vmatpush2.msra.mxu0 0.0
        %1034 = vmatprep.subr.mxu0 0.0
        %1035 = vmatpush2.msra.mxu0 0.0
        %1036 = vmatprep.subr.mxu0 0.0
        %1037 = vmatpush2.msra.mxu0 0.0
        %1038 = vmatprep.subr.mxu0 0.0
        %1039 = vmatpush2.msra.mxu0 0.0
        %1040 = vmatprep.subr.mxu0 0.0
        %1041 = vmatpush2.msra.mxu0 0.0
        %1042 = vmatprep.subr.mxu0 0.0
        %1043 = vmatpush2.msra.mxu0 0.0
        %1044 = vmatprep.subr.mxu0 0.0
        %1045 = vmatpush2.msra.mxu0 0.0
        %1046 = vmatprep.subr.mxu0 0.0
        %1047 = vmatpush2.msra.mxu0 0.0
        %1048 = vmatprep.subr.mxu0 0.0
        %1049 = vmatpush2.msra.mxu0 0.0
        %1050 = vmatprep.subr.mxu0 0.0
        %1051 = vmatpush2.msra.mxu0 0.0
        %1052 = vmatprep.subr.mxu0 0.0
        %1053 = vmatpush2.msra.mxu0 0.0
        %1054 = vmatprep.subr.mxu0 0.0
        %1055 = vmatpush2.msra.mxu0 0.0
        %1056 = vmatprep.subr.mxu0 0.0
        %1057 = vmatpush2.msra.mxu0 0.0
        %1058 = vmatprep.subr.mxu0 0.0
        %1059 = vmatpush2.msra.mxu0 0.0
        %1060 = vmatprep.mubr.f32.mxu0 0.0
        %1061 = vmatmul.mubr.f32.gmra.mxu0 %v994
        %v1062 = vpop.f32.mrf.mxu0
        %v1063 = vadd.f32 0.0, %v1062
        %v1064 = vpop.f32.mrf.mxu0
        %1065 = vdwg.mxu0
        %1066 = vrot.lane.b32.xlu0 %v990, 64
        %v1067 = vpop.permute.xlu0 %1066
        %v1069 = vsel %vm919, %v918, %v1067
        %s1070 = scalar_lea.vmem %s490, 16
        %v1071 = vld [vmem:[%s1070] sm:$0xff]
        %v1072 = vld [vmem:[%s1070 + $0x8] sm:$0xff]
        %v1074 = vsel %vm524, %v1071, 0
        %v1077 = vsel %vm524, %v1072, 0
        %1079 = vmatprep.subr.mxu0 0.0
        %1080 = vmatpush1.xpose.msra.mxu0 0.0
        %1081 = vmatprep.subr.mxu0 0.0
        %1082 = vmatpush1.xpose.msra.mxu0 0.0
        %1083 = vmatprep.subr.mxu0 0.0
        %1084 = vmatpush1.xpose.msra.mxu0 0.0
        %1085 = vmatprep.subr.mxu0 0.0
        %1086 = vmatpush1.xpose.msra.mxu0 0.0
        %1087 = vmatprep.subr.mxu0 0.0
        %1088 = vmatpush1.xpose.msra.mxu0 0.0
        %1089 = vmatprep.subr.mxu0 0.0
        %1090 = vmatpush1.xpose.msra.mxu0 0.0
        %1091 = vmatprep.subr.mxu0 0.0
        %1092 = vmatpush1.xpose.msra.mxu0 0.0
        %1093 = vmatprep.subr.mxu0 0.0
        %1094 = vmatpush1.xpose.msra.mxu0 0.0
        %1095 = vmatprep.subr.mxu0 0.0
        %1096 = vmatpush1.xpose.msra.mxu0 0.0
        %1097 = vmatprep.subr.mxu0 0.0
        %1098 = vmatpush1.xpose.msra.mxu0 0.0
        %1099 = vmatprep.subr.mxu0 0.0
        %1100 = vmatpush1.xpose.msra.mxu0 0.0
        %1101 = vmatprep.subr.mxu0 0.0
        %1102 = vmatpush1.xpose.msra.mxu0 0.0
        %1103 = vmatprep.subr.mxu0 0.0
        %1104 = vmatpush1.xpose.msra.mxu0 0.0
        %1105 = vmatprep.subr.mxu0 0.0
        %1106 = vmatpush1.xpose.msra.mxu0 0.0
        %1107 = vmatprep.subr.mxu0 0.0
        %1108 = vmatpush1.xpose.msra.mxu0 %v1077
        %1109 = vmatprep.subr.mxu0 0.0
        %1110 = vmatpush1.xpose.msra.mxu0 %v1074
        %1111 = vmatprep.subr.mxu0 0.0
        %1112 = vmatpush2.xpose.msra.mxu0 0.0
        %1113 = vmatprep.subr.mxu0 0.0
        %1114 = vmatpush2.xpose.msra.mxu0 0.0
        %1115 = vmatprep.subr.mxu0 0.0
        %1116 = vmatpush2.xpose.msra.mxu0 0.0
        %1117 = vmatprep.subr.mxu0 0.0
        %1118 = vmatpush2.xpose.msra.mxu0 0.0
        %1119 = vmatprep.subr.mxu0 0.0
        %1120 = vmatpush2.xpose.msra.mxu0 0.0
        %1121 = vmatprep.subr.mxu0 0.0
        %1122 = vmatpush2.xpose.msra.mxu0 0.0
        %1123 = vmatprep.subr.mxu0 0.0
        %1124 = vmatpush2.xpose.msra.mxu0 0.0
        %1125 = vmatprep.subr.mxu0 0.0
        %1126 = vmatpush2.xpose.msra.mxu0 0.0
        %1127 = vmatprep.subr.mxu0 0.0
        %1128 = vmatpush2.xpose.msra.mxu0 0.0
        %1129 = vmatprep.subr.mxu0 0.0
        %1130 = vmatpush2.xpose.msra.mxu0 0.0
        %1131 = vmatprep.subr.mxu0 0.0
        %1132 = vmatpush2.xpose.msra.mxu0 0.0
        %1133 = vmatprep.subr.mxu0 0.0
        %1134 = vmatpush2.xpose.msra.mxu0 0.0
        %1135 = vmatprep.subr.mxu0 0.0
        %1136 = vmatpush2.xpose.msra.mxu0 0.0
        %1137 = vmatprep.subr.mxu0 0.0
        %1138 = vmatpush2.xpose.msra.mxu0 0.0
        %1139 = vmatprep.subr.mxu0 0.0
        %1140 = vmatpush2.xpose.msra.mxu0 0.0
        %1141 = vmatprep.subr.mxu0 0.0
        %1142 = vmatpush2.xpose.msra.mxu0 0.0
        %1143 = vmatprep.mubr.f32.mxu0 0.0
        %1144 = vmatmul.mubr.f32.gmra.mxu0 %v1074
        %v1145 = vpop.f32.mrf.mxu0
        %v1146 = vadd.f32 0.0, %v1145
        %v1147 = vpop.f32.mrf.mxu0
        %1148 = vmatprep.mubr.f32.mxu0 0.0
        %1149 = vmatmul.mubr.f32.gmra.mxu0 %v1077
        %v1150 = vpop.f32.mrf.mxu0
        %v1151 = vadd.f32 0.0, %v1150
        %v1152 = vpop.f32.mrf.mxu0
        %1153 = vdwg.mxu0
        %v1154 = vmul.f32 %v1146, %v520
        %v1155 = vmul.f32 %v1151, %v521
        %v1156 = vsel %vm608, %v1154, 0.0
        %1157 = vadd.xlane.f32.xlu0 %v1156
        %v1158 = vpop.xlane.xlu0 %1157
        %v1159 = vsel %vm608, %v1155, 0.0
        %1160 = vadd.xlane.f32.xlu0 %v1159
        %v1161 = vpop.xlane.xlu0 %1160
        %v1162 = vadd.f32 %v1156, %v1159
        %v1163 = vrot.slane %v1162, 4
        %v1164 = vadd.f32 %v1162, %v1163
        %v1165 = vrot.slane %v1164, 2
        %v1166 = vadd.f32 %v1164, %v1165
        %v1167 = vrot.slane %v1166, 1
        %v1168 = vadd.f32 %v1166, %v1167
        %v1169 = vadd.f32 %v1158, %v1168
        %v1170 = vadd.f32 %v1161, %v1168
        %v1171 = vmul.f32 %v1146, 2.0
        %v1172 = vmul.f32 %v1151, 2.0
        %v1173 = vsub.f32 %v1169, %v1171
        %v1174 = vsub.f32 %v1170, %v1172
        %v1175 = vmax.f32 %v1173, 0.0
        %v1176 = vmax.f32 %v1174, 0.0
        %v1177 = vmul.f32 %v1175, -1.0
        %v1178 = vmul.f32 %v1176, -1.0
        %v1179 = vmul.f32 %v1177, 1.442695
        %v1180 = vpow.pop %v1179
        %v1181 = vmul.f32 %v1178, 1.442695
        %v1182 = vpow.pop %v1181
        %v1183 = vsel %vm608, %v1180, 0.0
        %1184 = vadd.xlane.f32.xlu0 %v1183
        %v1185 = vpop.xlane.xlu0 %1184
        %v1186 = vsel %vm608, %v1182, 0.0
        %1187 = vadd.xlane.f32.xlu0 %v1186
        %v1188 = vpop.xlane.xlu0 %1187
        %v1189 = vrcp.pop %v1185
        %v1190 = vrcp.pop %v1188
        %v1191 = vmul.f32 %v1180, %v1189
        %v1192 = vmul.f32 %v1182, %v1190
        %v1194 = vsel %vm608, %v1191, 0
        %v1197 = vsel %vm608, %v1192, 0
        %1199 = vmatprep.subr.mxu0 0.0
        %1200 = vmatpush1.xpose.msra.mxu0 0.0
        %1201 = vmatprep.subr.mxu0 0.0
        %1202 = vmatpush1.xpose.msra.mxu0 0.0
        %1203 = vmatprep.subr.mxu0 0.0
        %1204 = vmatpush1.xpose.msra.mxu0 0.0
        %1205 = vmatprep.subr.mxu0 0.0
        %1206 = vmatpush1.xpose.msra.mxu0 0.0
        %1207 = vmatprep.subr.mxu0 0.0
        %1208 = vmatpush1.xpose.msra.mxu0 0.0
        %1209 = vmatprep.subr.mxu0 0.0
        %1210 = vmatpush1.xpose.msra.mxu0 0.0
        %1211 = vmatprep.subr.mxu0 0.0
        %1212 = vmatpush1.xpose.msra.mxu0 0.0
        %1213 = vmatprep.subr.mxu0 0.0
        %1214 = vmatpush1.xpose.msra.mxu0 0.0
        %1215 = vmatprep.subr.mxu0 0.0
        %1216 = vmatpush1.xpose.msra.mxu0 0.0
        %1217 = vmatprep.subr.mxu0 0.0
        %1218 = vmatpush1.xpose.msra.mxu0 0.0
        %1219 = vmatprep.subr.mxu0 0.0
        %1220 = vmatpush1.xpose.msra.mxu0 0.0
        %1221 = vmatprep.subr.mxu0 0.0
        %1222 = vmatpush1.xpose.msra.mxu0 0.0
        %1223 = vmatprep.subr.mxu0 0.0
        %1224 = vmatpush1.xpose.msra.mxu0 0.0
        %1225 = vmatprep.subr.mxu0 0.0
        %1226 = vmatpush1.xpose.msra.mxu0 0.0
        %1227 = vmatprep.subr.mxu0 0.0
        %1228 = vmatpush1.xpose.msra.mxu0 %v1197
        %1229 = vmatprep.subr.mxu0 0.0
        %1230 = vmatpush1.xpose.msra.mxu0 %v1194
        %1231 = vmatprep.subr.mxu0 0.0
        %1232 = vmatpush2.xpose.msra.mxu0 0.0
        %1233 = vmatprep.subr.mxu0 0.0
        %1234 = vmatpush2.xpose.msra.mxu0 0.0
        %1235 = vmatprep.subr.mxu0 0.0
        %1236 = vmatpush2.xpose.msra.mxu0 0.0
        %1237 = vmatprep.subr.mxu0 0.0
        %1238 = vmatpush2.xpose.msra.mxu0 0.0
        %1239 = vmatprep.subr.mxu0 0.0
        %1240 = vmatpush2.xpose.msra.mxu0 0.0
        %1241 = vmatprep.subr.mxu0 0.0
        %1242 = vmatpush2.xpose.msra.mxu0 0.0
        %1243 = vmatprep.subr.mxu0 0.0
        %1244 = vmatpush2.xpose.msra.mxu0 0.0
        %1245 = vmatprep.subr.mxu0 0.0
        %1246 = vmatpush2.xpose.msra.mxu0 0.0
        %1247 = vmatprep.subr.mxu0 0.0
        %1248 = vmatpush2.xpose.msra.mxu0 0.0
        %1249 = vmatprep.subr.mxu0 0.0
        %1250 = vmatpush2.xpose.msra.mxu0 0.0
        %1251 = vmatprep.subr.mxu0 0.0
        %1252 = vmatpush2.xpose.msra.mxu0 0.0
        %1253 = vmatprep.subr.mxu0 0.0
        %1254 = vmatpush2.xpose.msra.mxu0 0.0
        %1255 = vmatprep.subr.mxu0 0.0
        %1256 = vmatpush2.xpose.msra.mxu0 0.0
        %1257 = vmatprep.subr.mxu0 0.0
        %1258 = vmatpush2.xpose.msra.mxu0 0.0
        %1259 = vmatprep.subr.mxu0 0.0
        %1260 = vmatpush2.xpose.msra.mxu0 0.0
        %1261 = vmatprep.subr.mxu0 0.0
        %1262 = vmatpush2.xpose.msra.mxu0 0.0
        %1263 = vmatprep.mubr.f32.mxu0 0.0
        %1264 = vmatmul.mubr.f32.gmra.mxu0 %v647
        %v1265 = vpop.f32.mrf.mxu0
        %v1266 = vadd.f32 0.0, %v1265
        %v1267 = vpop.f32.mrf.mxu0
        %1268 = vmatprep.mubr.f32.mxu0 0.0
        %1269 = vmatmul.mubr.f32.gmra.mxu0 %v650
        %v1270 = vpop.f32.mrf.mxu0
        %v1271 = vadd.f32 0.0, %v1270
        %v1272 = vpop.f32.mrf.mxu0
        %1273 = vmatprep.mubr.f32.mxu0 0.0
        %1274 = vmatmul.mubr.f32.gmra.mxu0 %v653
        %v1275 = vpop.f32.mrf.mxu0
        %v1276 = vadd.f32 0.0, %v1275
        %v1277 = vpop.f32.mrf.mxu0
        %1278 = vmatprep.mubr.f32.mxu0 0.0
        %1279 = vmatmul.mubr.f32.gmra.mxu0 %v656
        %v1280 = vpop.f32.mrf.mxu0
        %v1281 = vadd.f32 0.0, %v1280
        %v1282 = vpop.f32.mrf.mxu0
        %1283 = vmatprep.mubr.f32.mxu0 0.0
        %1284 = vmatmul.mubr.f32.gmra.mxu0 %v659
        %v1285 = vpop.f32.mrf.mxu0
        %v1286 = vadd.f32 0.0, %v1285
        %v1287 = vpop.f32.mrf.mxu0
        %1288 = vmatprep.mubr.f32.mxu0 0.0
        %1289 = vmatmul.mubr.f32.gmra.mxu0 %v662
        %v1290 = vpop.f32.mrf.mxu0
        %v1291 = vadd.f32 0.0, %v1290
        %v1292 = vpop.f32.mrf.mxu0
        %1293 = vmatprep.mubr.f32.mxu0 0.0
        %1294 = vmatmul.mubr.f32.gmra.mxu0 %v665
        %v1295 = vpop.f32.mrf.mxu0
        %v1296 = vadd.f32 0.0, %v1295
        %v1297 = vpop.f32.mrf.mxu0
        %1298 = vmatprep.mubr.f32.mxu0 0.0
        %1299 = vmatmul.mubr.f32.gmra.mxu0 %v668
        %v1300 = vpop.f32.mrf.mxu0
        %v1301 = vadd.f32 0.0, %v1300
        %v1302 = vpop.f32.mrf.mxu0
        %1303 = vdwg.mxu0
        %v1305 = vsel %vm608, %v1266, 0
        %v1308 = vsel %vm608, %v1271, 0
        %v1311 = vsel %vm608, %v1276, 0
        %v1314 = vsel %vm608, %v1281, 0
        %v1317 = vsel %vm608, %v1286, 0
        %v1320 = vsel %vm608, %v1291, 0
        %v1323 = vsel %vm608, %v1296, 0
        %v1326 = vsel %vm608, %v1301, 0
        %1328 = vmatprep.subr.mxu0 0.0
        %1329 = vmatpush1.msra.mxu0 0.0
        %1330 = vmatprep.subr.mxu0 0.0
        %1331 = vmatpush1.msra.mxu0 0.0
        %1332 = vmatprep.subr.mxu0 0.0
        %1333 = vmatpush1.msra.mxu0 0.0
        %1334 = vmatprep.subr.mxu0 0.0
        %1335 = vmatpush1.msra.mxu0 0.0
        %1336 = vmatprep.subr.mxu0 0.0
        %1337 = vmatpush1.msra.mxu0 0.0
        %1338 = vmatprep.subr.mxu0 0.0
        %1339 = vmatpush1.msra.mxu0 0.0
        %1340 = vmatprep.subr.mxu0 0.0
        %1341 = vmatpush1.msra.mxu0 0.0
        %1342 = vmatprep.subr.mxu0 0.0
        %1343 = vmatpush1.msra.mxu0 0.0
        %1344 = vmatprep.subr.mxu0 0.0
        %1345 = vmatpush1.msra.mxu0 0.0
        %1346 = vmatprep.subr.mxu0 0.0
        %1347 = vmatpush1.msra.mxu0 0.0
        %1348 = vmatprep.subr.mxu0 0.0
        %1349 = vmatpush1.msra.mxu0 0.0
        %1350 = vmatprep.subr.mxu0 0.0
        %1351 = vmatpush1.msra.mxu0 0.0
        %1352 = vmatprep.subr.mxu0 0.0
        %1353 = vmatpush1.msra.mxu0 0.0
        %1354 = vmatprep.subr.mxu0 0.0
        %1355 = vmatpush1.msra.mxu0 0.0
        %1356 = vmatprep.subr.mxu0 0.0
        %1357 = vmatpush1.msra.mxu0 %v502
        %1358 = vmatprep.subr.mxu0 0.0
        %1359 = vmatpush1.msra.mxu0 %v501
        %1360 = vmatprep.subr.mxu0 0.0
        %1361 = vmatpush2.msra.mxu0 0.0
        %1362 = vmatprep.subr.mxu0 0.0
        %1363 = vmatpush2.msra.mxu0 0.0
        %1364 = vmatprep.subr.mxu0 0.0
        %1365 = vmatpush2.msra.mxu0 0.0
        %1366 = vmatprep.subr.mxu0 0.0
        %1367 = vmatpush2.msra.mxu0 0.0
        %1368 = vmatprep.subr.mxu0 0.0
        %1369 = vmatpush2.msra.mxu0 0.0
        %1370 = vmatprep.subr.mxu0 0.0
        %1371 = vmatpush2.msra.mxu0 0.0
        %1372 = vmatprep.subr.mxu0 0.0
        %1373 = vmatpush2.msra.mxu0 0.0
        %1374 = vmatprep.subr.mxu0 0.0
        %1375 = vmatpush2.msra.mxu0 0.0
        %1376 = vmatprep.subr.mxu0 0.0
        %1377 = vmatpush2.msra.mxu0 0.0
        %1378 = vmatprep.subr.mxu0 0.0
        %1379 = vmatpush2.msra.mxu0 0.0
        %1380 = vmatprep.subr.mxu0 0.0
        %1381 = vmatpush2.msra.mxu0 0.0
        %1382 = vmatprep.subr.mxu0 0.0
        %1383 = vmatpush2.msra.mxu0 0.0
        %1384 = vmatprep.subr.mxu0 0.0
        %1385 = vmatpush2.msra.mxu0 0.0
        %1386 = vmatprep.subr.mxu0 0.0
        %1387 = vmatpush2.msra.mxu0 0.0
        %1388 = vmatprep.subr.mxu0 0.0
        %1389 = vmatpush2.msra.mxu0 0.0
        %1390 = vmatprep.subr.mxu0 0.0
        %1391 = vmatpush2.msra.mxu0 0.0
        %1392 = vmatprep.mubr.f32.mxu0 0.0
        %1393 = vmatmul.mubr.f32.gmra.mxu0 %v1305
        %v1394 = vpop.f32.mrf.mxu0
        %v1395 = vadd.f32 0.0, %v1394
        %v1396 = vpop.f32.mrf.mxu0
        %1397 = vmatprep.mubr.f32.mxu0 0.0
        %1398 = vmatmul.mubr.f32.gmra.mxu0 %v1308
        %v1399 = vpop.f32.mrf.mxu0
        %v1400 = vadd.f32 0.0, %v1399
        %v1401 = vpop.f32.mrf.mxu0
        %1402 = vmatprep.mubr.f32.mxu0 0.0
        %1403 = vmatmul.mubr.f32.gmra.mxu0 %v1311
        %v1404 = vpop.f32.mrf.mxu0
        %v1405 = vadd.f32 0.0, %v1404
        %v1406 = vpop.f32.mrf.mxu0
        %1407 = vmatprep.mubr.f32.mxu0 0.0
        %1408 = vmatmul.mubr.f32.gmra.mxu0 %v1314
        %v1409 = vpop.f32.mrf.mxu0
        %v1410 = vadd.f32 0.0, %v1409
        %v1411 = vpop.f32.mrf.mxu0
        %1412 = vmatprep.mubr.f32.mxu0 0.0
        %1413 = vmatmul.mubr.f32.gmra.mxu0 %v1317
        %v1414 = vpop.f32.mrf.mxu0
        %v1415 = vadd.f32 0.0, %v1414
        %v1416 = vpop.f32.mrf.mxu0
        %1417 = vmatprep.mubr.f32.mxu0 0.0
        %1418 = vmatmul.mubr.f32.gmra.mxu0 %v1320
        %v1419 = vpop.f32.mrf.mxu0
        %v1420 = vadd.f32 0.0, %v1419
        %v1421 = vpop.f32.mrf.mxu0
        %1422 = vmatprep.mubr.f32.mxu0 0.0
        %1423 = vmatmul.mubr.f32.gmra.mxu0 %v1323
        %v1424 = vpop.f32.mrf.mxu0
        %v1425 = vadd.f32 0.0, %v1424
        %v1426 = vpop.f32.mrf.mxu0
        %1427 = vmatprep.mubr.f32.mxu0 0.0
        %1428 = vmatmul.mubr.f32.gmra.mxu0 %v1326
        %v1429 = vpop.f32.mrf.mxu0
        %v1430 = vadd.f32 0.0, %v1429
        %v1431 = vpop.f32.mrf.mxu0
        %1432 = vdwg.mxu0
        %v1433 = vmul.f32 %v1395, %v503
        %v1434 = vmul.f32 %v1400, %v504
        %v1435 = vmul.f32 %v1405, %v505
        %v1436 = vmul.f32 %v1410, %v506
        %v1437 = vmul.f32 %v1415, %v507
        %v1438 = vmul.f32 %v1420, %v508
        %v1439 = vmul.f32 %v1425, %v509
        %v1440 = vmul.f32 %v1430, %v510
        %s1441 = scalar_lea.vmem %s483, 8
        %v1442 = vld [vmem:[%s1441] sm:$0xff]
        %v1444 = vsel %vm919, %v1442, 0
        %1446 = vmatprep.subr.mxu0 0.0
        %1447 = vmatpush1.msra.mxu0 0.0
        %1448 = vmatprep.subr.mxu0 0.0
        %1449 = vmatpush1.msra.mxu0 0.0
        %1450 = vmatprep.subr.mxu0 0.0
        %1451 = vmatpush1.msra.mxu0 0.0
        %1452 = vmatprep.subr.mxu0 0.0
        %1453 = vmatpush1.msra.mxu0 0.0
        %1454 = vmatprep.subr.mxu0 0.0
        %1455 = vmatpush1.msra.mxu0 0.0
        %1456 = vmatprep.subr.mxu0 0.0
        %1457 = vmatpush1.msra.mxu0 0.0
        %1458 = vmatprep.subr.mxu0 0.0
        %1459 = vmatpush1.msra.mxu0 0.0
        %1460 = vmatprep.subr.mxu0 0.0
        %1461 = vmatpush1.msra.mxu0 0.0
        %1462 = vmatprep.subr.mxu0 0.0
        %1463 = vmatpush1.msra.mxu0 %v1440
        %1464 = vmatprep.subr.mxu0 0.0
        %1465 = vmatpush1.msra.mxu0 %v1439
        %1466 = vmatprep.subr.mxu0 0.0
        %1467 = vmatpush1.msra.mxu0 %v1438
        %1468 = vmatprep.subr.mxu0 0.0
        %1469 = vmatpush1.msra.mxu0 %v1437
        %1470 = vmatprep.subr.mxu0 0.0
        %1471 = vmatpush1.msra.mxu0 %v1436
        %1472 = vmatprep.subr.mxu0 0.0
        %1473 = vmatpush1.msra.mxu0 %v1435
        %1474 = vmatprep.subr.mxu0 0.0
        %1475 = vmatpush1.msra.mxu0 %v1434
        %1476 = vmatprep.subr.mxu0 0.0
        %1477 = vmatpush1.msra.mxu0 %v1433
        %1478 = vmatprep.subr.mxu0 0.0
        %1479 = vmatpush2.msra.mxu0 0.0
        %1480 = vmatprep.subr.mxu0 0.0
        %1481 = vmatpush2.msra.mxu0 0.0
        %1482 = vmatprep.subr.mxu0 0.0
        %1483 = vmatpush2.msra.mxu0 0.0
        %1484 = vmatprep.subr.mxu0 0.0
        %1485 = vmatpush2.msra.mxu0 0.0
        %1486 = vmatprep.subr.mxu0 0.0
        %1487 = vmatpush2.msra.mxu0 0.0
        %1488 = vmatprep.subr.mxu0 0.0
        %1489 = vmatpush2.msra.mxu0 0.0
        %1490 = vmatprep.subr.mxu0 0.0
        %1491 = vmatpush2.msra.mxu0 0.0
        %1492 = vmatprep.subr.mxu0 0.0
        %1493 = vmatpush2.msra.mxu0 0.0
        %1494 = vmatprep.subr.mxu0 0.0
        %1495 = vmatpush2.msra.mxu0 0.0
        %1496 = vmatprep.subr.mxu0 0.0
        %1497 = vmatpush2.msra.mxu0 0.0
        %1498 = vmatprep.subr.mxu0 0.0
        %1499 = vmatpush2.msra.mxu0 0.0
        %1500 = vmatprep.subr.mxu0 0.0
        %1501 = vmatpush2.msra.mxu0 0.0
        %1502 = vmatprep.subr.mxu0 0.0
        %1503 = vmatpush2.msra.mxu0 0.0
        %1504 = vmatprep.subr.mxu0 0.0
        %1505 = vmatpush2.msra.mxu0 0.0
        %1506 = vmatprep.subr.mxu0 0.0
        %1507 = vmatpush2.msra.mxu0 0.0
        %1508 = vmatprep.subr.mxu0 0.0
        %1509 = vmatpush2.msra.mxu0 0.0
        %1510 = vmatprep.mubr.f32.mxu0 0.0
        %1511 = vmatmul.mubr.f32.gmra.mxu0 %v1444
        %v1512 = vpop.f32.mrf.mxu0
        %v1513 = vadd.f32 0.0, %v1512
        %v1514 = vpop.f32.mrf.mxu0
        %1515 = vdwg.mxu0
        %v1517 = vsel %vm919, %v1513, 0
        %1519 = vmatprep.subr.mxu0 0.0
        %1520 = vmatpush1.msra.mxu0 0.0
        %1521 = vmatprep.subr.mxu0 0.0
        %1522 = vmatpush1.msra.mxu0 0.0
        %1523 = vmatprep.subr.mxu0 0.0
        %1524 = vmatpush1.msra.mxu0 0.0
        %1525 = vmatprep.subr.mxu0 0.0
        %1526 = vmatpush1.msra.mxu0 0.0
        %1527 = vmatprep.subr.mxu0 0.0
        %1528 = vmatpush1.msra.mxu0 0.0
        %1529 = vmatprep.subr.mxu0 0.0
        %1530 = vmatpush1.msra.mxu0 0.0
        %1531 = vmatprep.subr.mxu0 0.0
        %1532 = vmatpush1.msra.mxu0 0.0
        %1533 = vmatprep.subr.mxu0 0.0
        %1534 = vmatpush1.msra.mxu0 0.0
        %1535 = vmatprep.subr.mxu0 0.0
        %1536 = vmatpush1.msra.mxu0 %v1440
        %1537 = vmatprep.subr.mxu0 0.0
        %1538 = vmatpush1.msra.mxu0 %v1439
        %1539 = vmatprep.subr.mxu0 0.0
        %1540 = vmatpush1.msra.mxu0 %v1438
        %1541 = vmatprep.subr.mxu0 0.0
        %1542 = vmatpush1.msra.mxu0 %v1437
        %1543 = vmatprep.subr.mxu0 0.0
        %1544 = vmatpush1.msra.mxu0 %v1436
        %1545 = vmatprep.subr.mxu0 0.0
        %1546 = vmatpush1.msra.mxu0 %v1435
        %1547 = vmatprep.subr.mxu0 0.0
        %1548 = vmatpush1.msra.mxu0 %v1434
        %1549 = vmatprep.subr.mxu0 0.0
        %1550 = vmatpush1.msra.mxu0 %v1433
        %1551 = vmatprep.subr.mxu0 0.0
        %1552 = vmatpush2.msra.mxu0 0.0
        %1553 = vmatprep.subr.mxu0 0.0
        %1554 = vmatpush2.msra.mxu0 0.0
        %1555 = vmatprep.subr.mxu0 0.0
        %1556 = vmatpush2.msra.mxu0 0.0
        %1557 = vmatprep.subr.mxu0 0.0
        %1558 = vmatpush2.msra.mxu0 0.0
        %1559 = vmatprep.subr.mxu0 0.0
        %1560 = vmatpush2.msra.mxu0 0.0
        %1561 = vmatprep.subr.mxu0 0.0
        %1562 = vmatpush2.msra.mxu0 0.0
        %1563 = vmatprep.subr.mxu0 0.0
        %1564 = vmatpush2.msra.mxu0 0.0
        %1565 = vmatprep.subr.mxu0 0.0
        %1566 = vmatpush2.msra.mxu0 0.0
        %1567 = vmatprep.subr.mxu0 0.0
        %1568 = vmatpush2.msra.mxu0 0.0
        %1569 = vmatprep.subr.mxu0 0.0
        %1570 = vmatpush2.msra.mxu0 0.0
        %1571 = vmatprep.subr.mxu0 0.0
        %1572 = vmatpush2.msra.mxu0 0.0
        %1573 = vmatprep.subr.mxu0 0.0
        %1574 = vmatpush2.msra.mxu0 0.0
        %1575 = vmatprep.subr.mxu0 0.0
        %1576 = vmatpush2.msra.mxu0 0.0
        %1577 = vmatprep.subr.mxu0 0.0
        %1578 = vmatpush2.msra.mxu0 0.0
        %1579 = vmatprep.subr.mxu0 0.0
        %1580 = vmatpush2.msra.mxu0 0.0
        %1581 = vmatprep.subr.mxu0 0.0
        %1582 = vmatpush2.msra.mxu0 0.0
        %1583 = vmatprep.mubr.f32.mxu0 0.0
        %1584 = vmatmul.mubr.f32.gmra.mxu0 %v1517
        %v1585 = vpop.f32.mrf.mxu0
        %v1586 = vadd.f32 0.0, %v1585
        %v1587 = vpop.f32.mrf.mxu0
        %1588 = vdwg.mxu0
        %1589 = vrot.lane.b32.xlu0 %v1513, 64
        %v1590 = vpop.permute.xlu0 %1589
        %v1592 = vsel %vm919, %v1442, %v1590
        %v1593 = vpack.c.bf16 %v1592, %v1069
        %v1594 = vpack.c.bf16 %v1586, %v1063
        %v1595 = vld [vmem:[%s2] sm:$0xf]
        %v1596 = vld [vmem:[%s2 + $0x4] sm:$0xf]
        %v1597 = vld [vmem:[%s2 + $0x8] sm:$0xf]
        %v1598 = vld [vmem:[%s2 + $0xc] sm:$0xf]
        %v1599 = vld [vmem:[%s2 + $0x10] sm:$0xf]
        %v1600 = vld [vmem:[%s2 + $0x14] sm:$0xf]
        %v1601 = vld [vmem:[%s2 + $0x18] sm:$0xf]
        %v1602 = vld [vmem:[%s2 + $0x1c] sm:$0xf]
        %v1603 = vld [vmem:[%s2 + $0x20] sm:$0xf]
        %v1604 = vld [vmem:[%s2 + $0x24] sm:$0xf]
        %v1605 = vld [vmem:[%s2 + $0x28] sm:$0xf]
        %v1606 = vld [vmem:[%s2 + $0x2c] sm:$0xf]
        %v1607 = vld [vmem:[%s2 + $0x30] sm:$0xf]
        %v1608 = vld [vmem:[%s2 + $0x34] sm:$0xf]
        %v1609 = vld [vmem:[%s2 + $0x38] sm:$0xf]
        %v1610 = vld [vmem:[%s2 + $0x3c] sm:$0xf]
        %v1611 = vld [vmem:[%s2 + $0x40] sm:$0xf]
        %v1612 = vld [vmem:[%s2 + $0x44] sm:$0xf]
        %v1613 = vld [vmem:[%s2 + $0x48] sm:$0xf]
        %v1614 = vld [vmem:[%s2 + $0x4c] sm:$0xf]
        %v1615 = vld [vmem:[%s2 + $0x50] sm:$0xf]
        %v1616 = vld [vmem:[%s2 + $0x54] sm:$0xf]
        %v1617 = vld [vmem:[%s2 + $0x58] sm:$0xf]
        %v1618 = vld [vmem:[%s2 + $0x5c] sm:$0xf]
        %v1619 = vld [vmem:[#allocation3] sm:$0x1]
        %v1621 = vlaneseq
        %v1622 = vshrl.u32 %v1621, 7
        %v1623 = vsub.s32 0, %v1622
        %v1624 = vrot.slane %v1619, %v1623
        %v1650 = vunpack.c.l.b16 %v1595
        %v1651 = vunpack.c.l.b16 %v1596
        %v1652 = vunpack.c.l.b16 %v1597
        %v1653 = vunpack.c.l.b16 %v1598
        %v1654 = vunpack.c.l.b16 %v1599
        %v1655 = vunpack.c.l.b16 %v1600
        %v1656 = vunpack.c.l.b16 %v1601
        %v1657 = vunpack.c.l.b16 %v1602
        %v1658 = vunpack.c.l.b16 %v1603
        %v1659 = vunpack.c.l.b16 %v1604
        %v1660 = vunpack.c.l.b16 %v1605
        %v1661 = vunpack.c.l.b16 %v1606
        %v1662 = vunpack.c.l.b16 %v1607
        %v1663 = vunpack.c.l.b16 %v1608
        %v1664 = vunpack.c.l.b16 %v1609
        %v1665 = vunpack.c.l.b16 %v1610
        %v1666 = vunpack.c.l.b16 %v1611
        %v1667 = vunpack.c.l.b16 %v1612
        %v1668 = vunpack.c.l.b16 %v1613
        %v1669 = vunpack.c.l.b16 %v1614
        %v1670 = vunpack.c.l.b16 %v1615
        %v1671 = vunpack.c.l.b16 %v1616
        %v1672 = vunpack.c.l.b16 %v1617
        %v1673 = vunpack.c.l.b16 %v1618
        %v1674 = vpack.c.b16 %v1651, %v1650
        %v1675 = vpack.c.b16 %v1653, %v1652
        %v1676 = vpack.c.b16 %v1655, %v1654
        %v1677 = vpack.c.b16 %v1657, %v1656
        %v1678 = vpack.c.b16 %v1659, %v1658
        %v1679 = vpack.c.b16 %v1661, %v1660
        %v1680 = vpack.c.b16 %v1663, %v1662
        %v1681 = vpack.c.b16 %v1665, %v1664
        %v1682 = vpack.c.b16 %v1667, %v1666
        %v1683 = vpack.c.b16 %v1669, %v1668
        %v1684 = vpack.c.b16 %v1671, %v1670
        %v1685 = vpack.c.b16 %v1673, %v1672
        %v1699 = vsel %vm919, %v1594, 0
        %1701 = vmatprep.subr.bf16.mxu0 0
        %1702 = vmatpush1.bf16.msra.mxu0 %v1681
        %1703 = vmatprep.subr.bf16.mxu0 0
        %1704 = vmatpush1.bf16.msra.mxu0 %v1680
        %1705 = vmatprep.subr.bf16.mxu0 0
        %1706 = vmatpush1.bf16.msra.mxu0 %v1679
        %1707 = vmatprep.subr.bf16.mxu0 0
        %1708 = vmatpush1.bf16.msra.mxu0 %v1678
        %1709 = vmatprep.subr.bf16.mxu0 0
        %1710 = vmatpush1.bf16.msra.mxu0 %v1677
        %1711 = vmatprep.subr.bf16.mxu0 0
        %1712 = vmatpush1.bf16.msra.mxu0 %v1676
        %1713 = vmatprep.subr.bf16.mxu0 0
        %1714 = vmatpush1.bf16.msra.mxu0 %v1675
        %1715 = vmatprep.subr.bf16.mxu0 0
        %1716 = vmatpush1.bf16.msra.mxu0 %v1674
        %1717 = vmatprep.subr.bf16.mxu0 0
        %1718 = vmatpush2.bf16.msra.mxu0 0
        %1719 = vmatprep.subr.bf16.mxu0 0
        %1720 = vmatpush2.bf16.msra.mxu0 0
        %1721 = vmatprep.subr.bf16.mxu0 0
        %1722 = vmatpush2.bf16.msra.mxu0 0
        %1723 = vmatprep.subr.bf16.mxu0 0
        %1724 = vmatpush2.bf16.msra.mxu0 0
        %1725 = vmatprep.subr.bf16.mxu0 0
        %1726 = vmatpush2.bf16.msra.mxu0 %v1685
        %1727 = vmatprep.subr.bf16.mxu0 0
        %1728 = vmatpush2.bf16.msra.mxu0 %v1684
        %1729 = vmatprep.subr.bf16.mxu0 0
        %1730 = vmatpush2.bf16.msra.mxu0 %v1683
        %1731 = vmatprep.subr.bf16.mxu0 0
        %1732 = vmatpush2.bf16.msra.mxu0 %v1682
        %1733 = vmatprep.mubr.bf16.mxu0 %v1699
        %1734 = vmatmul.mubr.bf16.gmra.mxu0 %v1593
        %v1735 = vpop.f32.mrf.mxu0
        %v1736 = vadd.f32 %v1624, %v1735
        %v1737 = vpop.f32.mrf.mxu0
        %v1738 = vpop.f32.mrf.mxu0
        %v1739 = vadd.f32 %v1624, %v1738
        %v1740 = vpop.f32.mrf.mxu0
        %1741 = vdwg.mxu0
        %v1742 = vmax.f32 %v1736, 0.0
        %v1743 = vmax.f32 %v1739, 0.0
        %v1744 = vpack.c.bf16 %v1743, %v1742
        %v1745 = vld [vmem:[%s7] sm:$0xf]
        %v1746 = vld [vmem:[%s7 + $0x4] sm:$0xf]
        %v1747 = vld [vmem:[%s7 + $0x8] sm:$0xf]
        %v1748 = vld [vmem:[%s7 + $0xc] sm:$0xf]
        %v1749 = vld [vmem:[%s7 + $0x10] sm:$0xf]
        %v1750 = vld [vmem:[%s7 + $0x14] sm:$0xf]
        %v1751 = vld [vmem:[%s7 + $0x18] sm:$0xf]
        %v1752 = vld [vmem:[%s7 + $0x1c] sm:$0xf]
        %v1753 = vld [vmem:[%s7 + $0x20] sm:$0xf]
        %v1754 = vld [vmem:[%s7 + $0x24] sm:$0xf]
        %v1755 = vld [vmem:[%s7 + $0x28] sm:$0xf]
        %v1756 = vld [vmem:[%s7 + $0x2c] sm:$0xf]
        %v1757 = vld [vmem:[%s7 + $0x30] sm:$0xf]
        %v1758 = vld [vmem:[%s7 + $0x34] sm:$0xf]
        %v1759 = vld [vmem:[%s7 + $0x38] sm:$0xf]
        %v1760 = vld [vmem:[%s7 + $0x3c] sm:$0xf]
        %v1761 = vld [vmem:[#allocation6] sm:$0x1]
        %v1763 = vlaneseq
        %v1764 = vshrl.u32 %v1763, 7
        %v1765 = vsub.s32 0, %v1764
        %v1766 = vrot.slane %v1761, %v1765
        %v1784 = vunpack.c.l.b16 %v1745
        %v1785 = vunpack.c.l.b16 %v1746
        %v1786 = vunpack.c.l.b16 %v1747
        %v1787 = vunpack.c.l.b16 %v1748
        %v1788 = vunpack.c.l.b16 %v1749
        %v1789 = vunpack.c.l.b16 %v1750
        %v1790 = vunpack.c.l.b16 %v1751
        %v1791 = vunpack.c.l.b16 %v1752
        %v1792 = vunpack.c.l.b16 %v1753
        %v1793 = vunpack.c.l.b16 %v1754
        %v1794 = vunpack.c.l.b16 %v1755
        %v1795 = vunpack.c.l.b16 %v1756
        %v1796 = vunpack.c.l.b16 %v1757
        %v1797 = vunpack.c.l.b16 %v1758
        %v1798 = vunpack.c.l.b16 %v1759
        %v1799 = vunpack.c.l.b16 %v1760
        %v1800 = vpack.c.b16 %v1785, %v1784
        %v1801 = vpack.c.b16 %v1787, %v1786
        %v1802 = vpack.c.b16 %v1789, %v1788
        %v1803 = vpack.c.b16 %v1791, %v1790
        %v1804 = vpack.c.b16 %v1793, %v1792
        %v1805 = vpack.c.b16 %v1795, %v1794
        %v1806 = vpack.c.b16 %v1797, %v1796
        %v1807 = vpack.c.b16 %v1799, %v1798
        %1816 = vmatprep.subr.bf16.mxu0 0
        %1817 = vmatpush1.bf16.msra.mxu0 %v1807
        %1818 = vmatprep.subr.bf16.mxu0 0
        %1819 = vmatpush1.bf16.msra.mxu0 %v1806
        %1820 = vmatprep.subr.bf16.mxu0 0
        %1821 = vmatpush1.bf16.msra.mxu0 %v1805
        %1822 = vmatprep.subr.bf16.mxu0 0
        %1823 = vmatpush1.bf16.msra.mxu0 %v1804
        %1824 = vmatprep.subr.bf16.mxu0 0
        %1825 = vmatpush1.bf16.msra.mxu0 %v1803
        %1826 = vmatprep.subr.bf16.mxu0 0
        %1827 = vmatpush1.bf16.msra.mxu0 %v1802
        %1828 = vmatprep.subr.bf16.mxu0 0
        %1829 = vmatpush1.bf16.msra.mxu0 %v1801
        %1830 = vmatprep.subr.bf16.mxu0 0
        %1831 = vmatpush1.bf16.msra.mxu0 %v1800
        %1832 = vmatprep.subr.bf16.mxu0 0
        %1833 = vmatpush2.bf16.msra.mxu0 0
        %1834 = vmatprep.subr.bf16.mxu0 0
        %1835 = vmatpush2.bf16.msra.mxu0 0
        %1836 = vmatprep.subr.bf16.mxu0 0
        %1837 = vmatpush2.bf16.msra.mxu0 0
        %1838 = vmatprep.subr.bf16.mxu0 0
        %1839 = vmatpush2.bf16.msra.mxu0 0
        %1840 = vmatprep.subr.bf16.mxu0 0
        %1841 = vmatpush2.bf16.msra.mxu0 0
        %1842 = vmatprep.subr.bf16.mxu0 0
        %1843 = vmatpush2.bf16.msra.mxu0 0
        %1844 = vmatprep.subr.bf16.mxu0 0
        %1845 = vmatpush2.bf16.msra.mxu0 0
        %1846 = vmatprep.subr.bf16.mxu0 0
        %1847 = vmatpush2.bf16.msra.mxu0 0
        %1848 = vmatprep.mubr.bf16.mxu0 0
        %1849 = vmatmul.mubr.bf16.gmra.mxu0 %v1744
        %v1850 = vpop.f32.mrf.mxu0
        %v1851 = vadd.f32 %v1766, %v1850
        %v1852 = vpop.f32.mrf.mxu0
        %v1853 = vpop.f32.mrf.mxu0
        %v1854 = vadd.f32 %v1766, %v1853
        %v1855 = vpop.f32.mrf.mxu0
        %1856 = vdwg.mxu0
        %vm1857 = vcmask 392192
        %1858 = vst.msk [vmem:[#allocation2] sm:$0xff] %vm1857, %v1851
        %s1859 = scalar_lea.vmem [#allocation2], 8
        %1860 = vst.msk [vmem:[%s1859] sm:$0xff] %vm1857, %v1854
        %v1861 = vld [vmem:[%s9] sm:$0xff]
        %v1862 = vld [vmem:[%s9 + $0x8] sm:$0xff]
        %v1863 = vld [vmem:[%s10] sm:$0x1]
        %v1864 = vld [vmem:[#allocation2] sm:$0x1]
        %v1865 = vld [vmem:[#allocation2 + $0x8] sm:$0x1]
        %v1867 = vlaneseq
        %v1868 = vshrl.u32 %v1867, 7
        %v1869 = vsub.s32 0, %v1868
        %v1870 = vrot.slane %v1863, %v1869
        %v1873 = vsel %vm608, 0.0, 0
        %1875 = vmatprep.subr.mxu0 0.0
        %1876 = vmatpush1.msra.mxu0 0.0
        %1877 = vmatprep.subr.mxu0 0.0
        %1878 = vmatpush1.msra.mxu0 0.0
        %1879 = vmatprep.subr.mxu0 0.0
        %1880 = vmatpush1.msra.mxu0 0.0
        %1881 = vmatprep.subr.mxu0 0.0
        %1882 = vmatpush1.msra.mxu0 0.0
        %1883 = vmatprep.subr.mxu0 0.0
        %1884 = vmatpush1.msra.mxu0 0.0
        %1885 = vmatprep.subr.mxu0 0.0
        %1886 = vmatpush1.msra.mxu0 0.0
        %1887 = vmatprep.subr.mxu0 0.0
        %1888 = vmatpush1.msra.mxu0 0.0
        %1889 = vmatprep.subr.mxu0 0.0
        %1890 = vmatpush1.msra.mxu0 0.0
        %1891 = vmatprep.subr.mxu0 0.0
        %1892 = vmatpush1.msra.mxu0 0.0
        %1893 = vmatprep.subr.mxu0 0.0
        %1894 = vmatpush1.msra.mxu0 0.0
        %1895 = vmatprep.subr.mxu0 0.0
        %1896 = vmatpush1.msra.mxu0 0.0
        %1897 = vmatprep.subr.mxu0 0.0
        %1898 = vmatpush1.msra.mxu0 0.0
        %1899 = vmatprep.subr.mxu0 0.0
        %1900 = vmatpush1.msra.mxu0 0.0
        %1901 = vmatprep.subr.mxu0 0.0
        %1902 = vmatpush1.msra.mxu0 0.0
        %1903 = vmatprep.subr.mxu0 0.0
        %1904 = vmatpush1.msra.mxu0 %v1862
        %1905 = vmatprep.subr.mxu0 0.0
        %1906 = vmatpush1.msra.mxu0 %v1861
        %1907 = vmatprep.subr.mxu0 0.0
        %1908 = vmatpush2.msra.mxu0 0.0
        %1909 = vmatprep.subr.mxu0 0.0
        %1910 = vmatpush2.msra.mxu0 0.0
        %1911 = vmatprep.subr.mxu0 0.0
        %1912 = vmatpush2.msra.mxu0 0.0
        %1913 = vmatprep.subr.mxu0 0.0
        %1914 = vmatpush2.msra.mxu0 0.0
        %1915 = vmatprep.subr.mxu0 0.0
        %1916 = vmatpush2.msra.mxu0 0.0
        %1917 = vmatprep.subr.mxu0 0.0
        %1918 = vmatpush2.msra.mxu0 0.0
        %1919 = vmatprep.subr.mxu0 0.0
        %1920 = vmatpush2.msra.mxu0 0.0
        %1921 = vmatprep.subr.mxu0 0.0
        %1922 = vmatpush2.msra.mxu0 0.0
        %1923 = vmatprep.subr.mxu0 0.0
        %1924 = vmatpush2.msra.mxu0 0.0
        %1925 = vmatprep.subr.mxu0 0.0
        %1926 = vmatpush2.msra.mxu0 0.0
        %1927 = vmatprep.subr.mxu0 0.0
        %1928 = vmatpush2.msra.mxu0 0.0
        %1929 = vmatprep.subr.mxu0 0.0
        %1930 = vmatpush2.msra.mxu0 0.0
        %1931 = vmatprep.subr.mxu0 0.0
        %1932 = vmatpush2.msra.mxu0 0.0
        %1933 = vmatprep.subr.mxu0 0.0
        %1934 = vmatpush2.msra.mxu0 0.0
        %1935 = vmatprep.subr.mxu0 0.0
        %1936 = vmatpush2.msra.mxu0 0.0
        %1937 = vmatprep.subr.mxu0 0.0
        %1938 = vmatpush2.msra.mxu0 0.0
        %1939 = vmatprep.mubr.f32.mxu0 0.0
        %1940 = vmatmul.mubr.f32.gmra.mxu0 %v1873
        %v1941 = vpop.f32.mrf.mxu0
        %v1942 = vadd.f32 %v1870, %v1941
        %v1943 = vpop.f32.mrf.mxu0
        %1944 = vdwg.mxu0
        %v1946 = vrot.slane %v1942, 1
        %v1949 = vadd.f32 %v1864, %v1942
        %v1950 = vadd.f32 %v1865, %v1946
        %v1951 = vxor.u32 %v1949, 2147483648
        %v1952 = vxor.u32 %v1950, 2147483648
        %v1953 = vmul.f32 %v1951, 1.442695
        %v1954 = vpow.pop %v1953
        %v1955 = vmul.f32 %v1952, 1.442695
        %v1956 = vpow.pop %v1955
        %v1957 = vadd.f32 %v1954, 1.0
        %v1958 = vadd.f32 %v1956, 1.0
        %v1959 = vrcp.pop %v1957
        %v1960 = vmul.f32 1.0, %v1959
        %v1961 = vrcp.pop %v1958
        %v1962 = vmul.f32 1.0, %v1961
        %1963 = vrot.lane.b32.xlu0 %v1942, 96
        %v1964 = vpop.permute.xlu0 %1963
        %1965 = vrot.lane.b32.xlu0 %v1946, 96
        %v1966 = vpop.permute.xlu0 %1965
        %v1969 = vmul.f32 %v1960, %v1964
        %v1970 = vmul.f32 %v1962, %v1966
        %1973 = vrot.lane.b32.xlu0 %v1969, 32
        %v1974 = vpop.permute.xlu0 %1973
        %1975 = vrot.lane.b32.xlu0 %v1970, 32
        %v1976 = vpop.permute.xlu0 %1975
        %v1979 = vadd.f32 %v1864, %v1974
        %v1980 = vadd.f32 %v1865, %v1976
        %v1981 = vtanh.pop %v1979
        %v1982 = vtanh.pop %v1980
        %v1983 = vsub.f32 1.0, %v1960
        %v1984 = vsub.f32 1.0, %v1962
        %1987 = vrot.lane.b32.xlu0 %v1981, 112
        %v1988 = vpop.permute.xlu0 %1987
        %1989 = vrot.lane.b32.xlu0 %v1982, 112
        %v1990 = vpop.permute.xlu0 %1989
        %v1993 = vmul.f32 %v1983, %v1988
        %v1994 = vmul.f32 %v1984, %v1990
        %v1995 = vmul.f32 %v1960, 0.0
        %v1996 = vmul.f32 %v1962, 0.0
        %v1997 = vadd.f32 %v1993, %v1995
        %v1998 = vadd.f32 %v1994, %v1996
        %v1999 = vld [vmem:[#allocation2 + $0x1] sm:$0x1]
        %v2000 = vld [vmem:[#allocation2 + $0x9] sm:$0x1]
        %v2003 = vrot.slane %v1998, 7
        %vm2004 = vcmask 1041409
        %v2005 = vsel %vm2004, %v2003, %v1997
        %2006 = vrot.lane.b32.xlu0 %v2005, 112
        %v2007 = vpop.permute.xlu0 %2006
        %v2008 = vsel %vm608, %v2007, 0
        %2010 = vmatprep.subr.mxu0 0.0
        %2011 = vmatpush1.msra.mxu0 0.0
        %2012 = vmatprep.subr.mxu0 0.0
        %2013 = vmatpush1.msra.mxu0 0.0
        %2014 = vmatprep.subr.mxu0 0.0
        %2015 = vmatpush1.msra.mxu0 0.0
        %2016 = vmatprep.subr.mxu0 0.0
        %2017 = vmatpush1.msra.mxu0 0.0
        %2018 = vmatprep.subr.mxu0 0.0
        %2019 = vmatpush1.msra.mxu0 0.0
        %2020 = vmatprep.subr.mxu0 0.0
        %2021 = vmatpush1.msra.mxu0 0.0
        %2022 = vmatprep.subr.mxu0 0.0
        %2023 = vmatpush1.msra.mxu0 0.0
        %2024 = vmatprep.subr.mxu0 0.0
        %2025 = vmatpush1.msra.mxu0 0.0
        %2026 = vmatprep.subr.mxu0 0.0
        %2027 = vmatpush1.msra.mxu0 0.0
        %2028 = vmatprep.subr.mxu0 0.0
        %2029 = vmatpush1.msra.mxu0 0.0
        %2030 = vmatprep.subr.mxu0 0.0
        %2031 = vmatpush1.msra.mxu0 0.0
        %2032 = vmatprep.subr.mxu0 0.0
        %2033 = vmatpush1.msra.mxu0 0.0
        %2034 = vmatprep.subr.mxu0 0.0
        %2035 = vmatpush1.msra.mxu0 0.0
        %2036 = vmatprep.subr.mxu0 0.0
        %2037 = vmatpush1.msra.mxu0 0.0
        %2038 = vmatprep.subr.mxu0 0.0
        %2039 = vmatpush1.msra.mxu0 %v1862
        %2040 = vmatprep.subr.mxu0 0.0
        %2041 = vmatpush1.msra.mxu0 %v1861
        %2042 = vmatprep.subr.mxu0 0.0
        %2043 = vmatpush2.msra.mxu0 0.0
        %2044 = vmatprep.subr.mxu0 0.0
        %2045 = vmatpush2.msra.mxu0 0.0
        %2046 = vmatprep.subr.mxu0 0.0
        %2047 = vmatpush2.msra.mxu0 0.0
        %2048 = vmatprep.subr.mxu0 0.0
        %2049 = vmatpush2.msra.mxu0 0.0
        %2050 = vmatprep.subr.mxu0 0.0
        %2051 = vmatpush2.msra.mxu0 0.0
        %2052 = vmatprep.subr.mxu0 0.0
        %2053 = vmatpush2.msra.mxu0 0.0
        %2054 = vmatprep.subr.mxu0 0.0
        %2055 = vmatpush2.msra.mxu0 0.0
        %2056 = vmatprep.subr.mxu0 0.0
        %2057 = vmatpush2.msra.mxu0 0.0
        %2058 = vmatprep.subr.mxu0 0.0
        %2059 = vmatpush2.msra.mxu0 0.0
        %2060 = vmatprep.subr.mxu0 0.0
        %2061 = vmatpush2.msra.mxu0 0.0
        %2062 = vmatprep.subr.mxu0 0.0
        %2063 = vmatpush2.msra.mxu0 0.0
        %2064 = vmatprep.subr.mxu0 0.0
        %2065 = vmatpush2.msra.mxu0 0.0
        %2066 = vmatprep.subr.mxu0 0.0
        %2067 = vmatpush2.msra.mxu0 0.0
        %2068 = vmatprep.subr.mxu0 0.0
        %2069 = vmatpush2.msra.mxu0 0.0
        %2070 = vmatprep.subr.mxu0 0.0
        %2071 = vmatpush2.msra.mxu0 0.0
        %2072 = vmatprep.subr.mxu0 0.0
        %2073 = vmatpush2.msra.mxu0 0.0
        %2074 = vmatprep.mubr.f32.mxu0 0.0
        %2075 = vmatmul.mubr.f32.gmra.mxu0 %v2008
        %v2076 = vpop.f32.mrf.mxu0
        %v2077 = vadd.f32 %v1870, %v2076
        %v2078 = vpop.f32.mrf.mxu0
        %2079 = vdwg.mxu0
        %v2081 = vrot.slane %v2077, 1
        %v2084 = vadd.f32 %v1999, %v2077
        %v2085 = vadd.f32 %v2000, %v2081
        %v2086 = vxor.u32 %v2084, 2147483648
        %v2087 = vxor.u32 %v2085, 2147483648
        %v2088 = vmul.f32 %v2086, 1.442695
        %v2089 = vpow.pop %v2088
        %v2090 = vmul.f32 %v2087, 1.442695
        %v2091 = vpow.pop %v2090
        %v2092 = vadd.f32 %v2089, 1.0
        %v2093 = vadd.f32 %v2091, 1.0
        %v2094 = vrcp.pop %v2092
        %v2095 = vmul.f32 1.0, %v2094
        %v2096 = vrcp.pop %v2093
        %v2097 = vmul.f32 1.0, %v2096
        %2098 = vrot.lane.b32.xlu0 %v2077, 96
        %v2099 = vpop.permute.xlu0 %2098
        %2100 = vrot.lane.b32.xlu0 %v2081, 96
        %v2101 = vpop.permute.xlu0 %2100
        %v2104 = vmul.f32 %v2095, %v2099
        %v2105 = vmul.f32 %v2097, %v2101
        %2108 = vrot.lane.b32.xlu0 %v2104, 32
        %v2109 = vpop.permute.xlu0 %2108
        %2110 = vrot.lane.b32.xlu0 %v2105, 32
        %v2111 = vpop.permute.xlu0 %2110
        %v2114 = vadd.f32 %v1999, %v2109
        %v2115 = vadd.f32 %v2000, %v2111
        %v2116 = vtanh.pop %v2114
        %v2117 = vtanh.pop %v2115
        %v2118 = vsub.f32 1.0, %v2095
        %v2119 = vsub.f32 1.0, %v2097
        %2122 = vrot.lane.b32.xlu0 %v2116, 112
        %v2123 = vpop.permute.xlu0 %2122
        %2124 = vrot.lane.b32.xlu0 %v2117, 112
        %v2125 = vpop.permute.xlu0 %2124
        %v2128 = vmul.f32 %v2118, %v2123
        %v2129 = vmul.f32 %v2119, %v2125
        %v2130 = vmul.f32 %v2095, %v1997
        %v2131 = vmul.f32 %v2097, %v1998
        %v2132 = vadd.f32 %v2128, %v2130
        %v2133 = vadd.f32 %v2129, %v2131
        %v2134 = vld [vmem:[#allocation2 + $0x2] sm:$0x1]
        %v2135 = vld [vmem:[#allocation2 + $0xa] sm:$0x1]
        %v2138 = vrot.slane %v2133, 7
        %v2139 = vsel %vm2004, %v2138, %v2132
        %2140 = vrot.lane.b32.xlu0 %v2139, 112
        %v2141 = vpop.permute.xlu0 %2140
        %v2142 = vsel %vm608, %v2141, 0
        %2144 = vmatprep.subr.mxu0 0.0
        %2145 = vmatpush1.msra.mxu0 0.0
        %2146 = vmatprep.subr.mxu0 0.0
        %2147 = vmatpush1.msra.mxu0 0.0
        %2148 = vmatprep.subr.mxu0 0.0
        %2149 = vmatpush1.msra.mxu0 0.0
        %2150 = vmatprep.subr.mxu0 0.0
        %2151 = vmatpush1.msra.mxu0 0.0
        %2152 = vmatprep.subr.mxu0 0.0
        %2153 = vmatpush1.msra.mxu0 0.0
        %2154 = vmatprep.subr.mxu0 0.0
        %2155 = vmatpush1.msra.mxu0 0.0
        %2156 = vmatprep.subr.mxu0 0.0
        %2157 = vmatpush1.msra.mxu0 0.0
        %2158 = vmatprep.subr.mxu0 0.0
        %2159 = vmatpush1.msra.mxu0 0.0
        %2160 = vmatprep.subr.mxu0 0.0
        %2161 = vmatpush1.msra.mxu0 0.0
        %2162 = vmatprep.subr.mxu0 0.0
        %2163 = vmatpush1.msra.mxu0 0.0
        %2164 = vmatprep.subr.mxu0 0.0
        %2165 = vmatpush1.msra.mxu0 0.0
        %2166 = vmatprep.subr.mxu0 0.0
        %2167 = vmatpush1.msra.mxu0 0.0
        %2168 = vmatprep.subr.mxu0 0.0
        %2169 = vmatpush1.msra.mxu0 0.0
        %2170 = vmatprep.subr.mxu0 0.0
        %2171 = vmatpush1.msra.mxu0 0.0
        %2172 = vmatprep.subr.mxu0 0.0
        %2173 = vmatpush1.msra.mxu0 %v1862
        %2174 = vmatprep.subr.mxu0 0.0
        %2175 = vmatpush1.msra.mxu0 %v1861
        %2176 = vmatprep.subr.mxu0 0.0
        %2177 = vmatpush2.msra.mxu0 0.0
        %2178 = vmatprep.subr.mxu0 0.0
        %2179 = vmatpush2.msra.mxu0 0.0
        %2180 = vmatprep.subr.mxu0 0.0
        %2181 = vmatpush2.msra.mxu0 0.0
        %2182 = vmatprep.subr.mxu0 0.0
        %2183 = vmatpush2.msra.mxu0 0.0
        %2184 = vmatprep.subr.mxu0 0.0
        %2185 = vmatpush2.msra.mxu0 0.0
        %2186 = vmatprep.subr.mxu0 0.0
        %2187 = vmatpush2.msra.mxu0 0.0
        %2188 = vmatprep.subr.mxu0 0.0
        %2189 = vmatpush2.msra.mxu0 0.0
        %2190 = vmatprep.subr.mxu0 0.0
        %2191 = vmatpush2.msra.mxu0 0.0
        %2192 = vmatprep.subr.mxu0 0.0
        %2193 = vmatpush2.msra.mxu0 0.0
        %2194 = vmatprep.subr.mxu0 0.0
        %2195 = vmatpush2.msra.mxu0 0.0
        %2196 = vmatprep.subr.mxu0 0.0
        %2197 = vmatpush2.msra.mxu0 0.0
        %2198 = vmatprep.subr.mxu0 0.0
        %2199 = vmatpush2.msra.mxu0 0.0
        %2200 = vmatprep.subr.mxu0 0.0
        %2201 = vmatpush2.msra.mxu0 0.0
        %2202 = vmatprep.subr.mxu0 0.0
        %2203 = vmatpush2.msra.mxu0 0.0
        %2204 = vmatprep.subr.mxu0 0.0
        %2205 = vmatpush2.msra.mxu0 0.0
        %2206 = vmatprep.subr.mxu0 0.0
        %2207 = vmatpush2.msra.mxu0 0.0
        %2208 = vmatprep.mubr.f32.mxu0 0.0
        %2209 = vmatmul.mubr.f32.gmra.mxu0 %v2142
        %v2210 = vpop.f32.mrf.mxu0
        %v2211 = vadd.f32 %v1870, %v2210
        %v2212 = vpop.f32.mrf.mxu0
        %2213 = vdwg.mxu0
        %v2215 = vrot.slane %v2211, 1
        %v2218 = vadd.f32 %v2134, %v2211
        %v2219 = vadd.f32 %v2135, %v2215
        %v2220 = vxor.u32 %v2218, 2147483648
        %v2221 = vxor.u32 %v2219, 2147483648
        %v2222 = vmul.f32 %v2220, 1.442695
        %v2223 = vpow.pop %v2222
        %v2224 = vmul.f32 %v2221, 1.442695
        %v2225 = vpow.pop %v2224
        %v2226 = vadd.f32 %v2223, 1.0
        %v2227 = vadd.f32 %v2225, 1.0
        %v2228 = vrcp.pop %v2226
        %v2229 = vmul.f32 1.0, %v2228
        %v2230 = vrcp.pop %v2227
        %v2231 = vmul.f32 1.0, %v2230
        %2232 = vrot.lane.b32.xlu0 %v2211, 96
        %v2233 = vpop.permute.xlu0 %2232
        %2234 = vrot.lane.b32.xlu0 %v2215, 96
        %v2235 = vpop.permute.xlu0 %2234
        %v2238 = vmul.f32 %v2229, %v2233
        %v2239 = vmul.f32 %v2231, %v2235
        %2242 = vrot.lane.b32.xlu0 %v2238, 32
        %v2243 = vpop.permute.xlu0 %2242
        %2244 = vrot.lane.b32.xlu0 %v2239, 32
        %v2245 = vpop.permute.xlu0 %2244
        %v2248 = vadd.f32 %v2134, %v2243
        %v2249 = vadd.f32 %v2135, %v2245
        %v2250 = vtanh.pop %v2248
        %v2251 = vtanh.pop %v2249
        %v2252 = vsub.f32 1.0, %v2229
        %v2253 = vsub.f32 1.0, %v2231
        %2256 = vrot.lane.b32.xlu0 %v2250, 112
        %v2257 = vpop.permute.xlu0 %2256
        %2258 = vrot.lane.b32.xlu0 %v2251, 112
        %v2259 = vpop.permute.xlu0 %2258
        %v2262 = vmul.f32 %v2252, %v2257
        %v2263 = vmul.f32 %v2253, %v2259
        %v2264 = vmul.f32 %v2229, %v2132
        %v2265 = vmul.f32 %v2231, %v2133
        %v2266 = vadd.f32 %v2262, %v2264
        %v2267 = vadd.f32 %v2263, %v2265
        %v2268 = vld [vmem:[#allocation2 + $0x3] sm:$0x1]
        %v2269 = vld [vmem:[#allocation2 + $0xb] sm:$0x1]
        %v2272 = vrot.slane %v2267, 7
        %v2273 = vsel %vm2004, %v2272, %v2266
        %2274 = vrot.lane.b32.xlu0 %v2273, 112
        %v2275 = vpop.permute.xlu0 %2274
        %v2276 = vsel %vm608, %v2275, 0
        %2278 = vmatprep.subr.mxu0 0.0
        %2279 = vmatpush1.msra.mxu0 0.0
        %2280 = vmatprep.subr.mxu0 0.0
        %2281 = vmatpush1.msra.mxu0 0.0
        %2282 = vmatprep.subr.mxu0 0.0
        %2283 = vmatpush1.msra.mxu0 0.0
        %2284 = vmatprep.subr.mxu0 0.0
        %2285 = vmatpush1.msra.mxu0 0.0
        %2286 = vmatprep.subr.mxu0 0.0
        %2287 = vmatpush1.msra.mxu0 0.0
        %2288 = vmatprep.subr.mxu0 0.0
        %2289 = vmatpush1.msra.mxu0 0.0
        %2290 = vmatprep.subr.mxu0 0.0
        %2291 = vmatpush1.msra.mxu0 0.0
        %2292 = vmatprep.subr.mxu0 0.0
        %2293 = vmatpush1.msra.mxu0 0.0
        %2294 = vmatprep.subr.mxu0 0.0
        %2295 = vmatpush1.msra.mxu0 0.0
        %2296 = vmatprep.subr.mxu0 0.0
        %2297 = vmatpush1.msra.mxu0 0.0
        %2298 = vmatprep.subr.mxu0 0.0
        %2299 = vmatpush1.msra.mxu0 0.0
        %2300 = vmatprep.subr.mxu0 0.0
        %2301 = vmatpush1.msra.mxu0 0.0
        %2302 = vmatprep.subr.mxu0 0.0
        %2303 = vmatpush1.msra.mxu0 0.0
        %2304 = vmatprep.subr.mxu0 0.0
        %2305 = vmatpush1.msra.mxu0 0.0
        %2306 = vmatprep.subr.mxu0 0.0
        %2307 = vmatpush1.msra.mxu0 %v1862
        %2308 = vmatprep.subr.mxu0 0.0
        %2309 = vmatpush1.msra.mxu0 %v1861
        %2310 = vmatprep.subr.mxu0 0.0
        %2311 = vmatpush2.msra.mxu0 0.0
        %2312 = vmatprep.subr.mxu0 0.0
        %2313 = vmatpush2.msra.mxu0 0.0
        %2314 = vmatprep.subr.mxu0 0.0
        %2315 = vmatpush2.msra.mxu0 0.0
        %2316 = vmatprep.subr.mxu0 0.0
        %2317 = vmatpush2.msra.mxu0 0.0
        %2318 = vmatprep.subr.mxu0 0.0
        %2319 = vmatpush2.msra.mxu0 0.0
        %2320 = vmatprep.subr.mxu0 0.0
        %2321 = vmatpush2.msra.mxu0 0.0
        %2322 = vmatprep.subr.mxu0 0.0
        %2323 = vmatpush2.msra.mxu0 0.0
        %2324 = vmatprep.subr.mxu0 0.0
        %2325 = vmatpush2.msra.mxu0 0.0
        %2326 = vmatprep.subr.mxu0 0.0
        %2327 = vmatpush2.msra.mxu0 0.0
        %2328 = vmatprep.subr.mxu0 0.0
        %2329 = vmatpush2.msra.mxu0 0.0
        %2330 = vmatprep.subr.mxu0 0.0
        %2331 = vmatpush2.msra.mxu0 0.0
        %2332 = vmatprep.subr.mxu0 0.0
        %2333 = vmatpush2.msra.mxu0 0.0
        %2334 = vmatprep.subr.mxu0 0.0
        %2335 = vmatpush2.msra.mxu0 0.0
        %2336 = vmatprep.subr.mxu0 0.0
        %2337 = vmatpush2.msra.mxu0 0.0
        %2338 = vmatprep.subr.mxu0 0.0
        %2339 = vmatpush2.msra.mxu0 0.0
        %2340 = vmatprep.subr.mxu0 0.0
        %2341 = vmatpush2.msra.mxu0 0.0
        %2342 = vmatprep.mubr.f32.mxu0 0.0
        %2343 = vmatmul.mubr.f32.gmra.mxu0 %v2276
        %v2344 = vpop.f32.mrf.mxu0
        %v2345 = vadd.f32 %v1870, %v2344
        %v2346 = vpop.f32.mrf.mxu0
        %2347 = vdwg.mxu0
        %v2349 = vrot.slane %v2345, 1
        %v2352 = vadd.f32 %v2268, %v2345
        %v2353 = vadd.f32 %v2269, %v2349
        %v2354 = vxor.u32 %v2352, 2147483648
        %v2355 = vxor.u32 %v2353, 2147483648
        %v2356 = vmul.f32 %v2354, 1.442695
        %v2357 = vpow.pop %v2356
        %v2358 = vmul.f32 %v2355, 1.442695
        %v2359 = vpow.pop %v2358
        %v2360 = vadd.f32 %v2357, 1.0
        %v2361 = vadd.f32 %v2359, 1.0
        %v2362 = vrcp.pop %v2360
        %v2363 = vmul.f32 1.0, %v2362
        %v2364 = vrcp.pop %v2361
        %v2365 = vmul.f32 1.0, %v2364
        %2366 = vrot.lane.b32.xlu0 %v2345, 96
        %v2367 = vpop.permute.xlu0 %2366
        %2368 = vrot.lane.b32.xlu0 %v2349, 96
        %v2369 = vpop.permute.xlu0 %2368
        %v2372 = vmul.f32 %v2363, %v2367
        %v2373 = vmul.f32 %v2365, %v2369
        %2376 = vrot.lane.b32.xlu0 %v2372, 32
        %v2377 = vpop.permute.xlu0 %2376
        %2378 = vrot.lane.b32.xlu0 %v2373, 32
        %v2379 = vpop.permute.xlu0 %2378
        %v2382 = vadd.f32 %v2268, %v2377
        %v2383 = vadd.f32 %v2269, %v2379
        %v2384 = vtanh.pop %v2382
        %v2385 = vtanh.pop %v2383
        %v2386 = vsub.f32 1.0, %v2363
        %v2387 = vsub.f32 1.0, %v2365
        %2390 = vrot.lane.b32.xlu0 %v2384, 112
        %v2391 = vpop.permute.xlu0 %2390
        %2392 = vrot.lane.b32.xlu0 %v2385, 112
        %v2393 = vpop.permute.xlu0 %2392
        %v2396 = vmul.f32 %v2386, %v2391
        %v2397 = vmul.f32 %v2387, %v2393
        %v2398 = vmul.f32 %v2363, %v2266
        %v2399 = vmul.f32 %v2365, %v2267
        %v2400 = vadd.f32 %v2396, %v2398
        %v2401 = vadd.f32 %v2397, %v2399
        %v2402 = vld [vmem:[#allocation2 + $0x4] sm:$0x1]
        %v2403 = vld [vmem:[#allocation2 + $0xc] sm:$0x1]
        %v2406 = vrot.slane %v2401, 7
        %v2407 = vsel %vm2004, %v2406, %v2400
        %2408 = vrot.lane.b32.xlu0 %v2407, 112
        %v2409 = vpop.permute.xlu0 %2408
        %v2410 = vsel %vm608, %v2409, 0
        %2412 = vmatprep.subr.mxu0 0.0
        %2413 = vmatpush1.msra.mxu0 0.0
        %2414 = vmatprep.subr.mxu0 0.0
        %2415 = vmatpush1.msra.mxu0 0.0
        %2416 = vmatprep.subr.mxu0 0.0
        %2417 = vmatpush1.msra.mxu0 0.0
        %2418 = vmatprep.subr.mxu0 0.0
        %2419 = vmatpush1.msra.mxu0 0.0
        %2420 = vmatprep.subr.mxu0 0.0
        %2421 = vmatpush1.msra.mxu0 0.0
        %2422 = vmatprep.subr.mxu0 0.0
        %2423 = vmatpush1.msra.mxu0 0.0
        %2424 = vmatprep.subr.mxu0 0.0
        %2425 = vmatpush1.msra.mxu0 0.0
        %2426 = vmatprep.subr.mxu0 0.0
        %2427 = vmatpush1.msra.mxu0 0.0
        %2428 = vmatprep.subr.mxu0 0.0
        %2429 = vmatpush1.msra.mxu0 0.0
        %2430 = vmatprep.subr.mxu0 0.0
        %2431 = vmatpush1.msra.mxu0 0.0
        %2432 = vmatprep.subr.mxu0 0.0
        %2433 = vmatpush1.msra.mxu0 0.0
        %2434 = vmatprep.subr.mxu0 0.0
        %2435 = vmatpush1.msra.mxu0 0.0
        %2436 = vmatprep.subr.mxu0 0.0
        %2437 = vmatpush1.msra.mxu0 0.0
        %2438 = vmatprep.subr.mxu0 0.0
        %2439 = vmatpush1.msra.mxu0 0.0
        %2440 = vmatprep.subr.mxu0 0.0
        %2441 = vmatpush1.msra.mxu0 %v1862
        %2442 = vmatprep.subr.mxu0 0.0
        %2443 = vmatpush1.msra.mxu0 %v1861
        %2444 = vmatprep.subr.mxu0 0.0
        %2445 = vmatpush2.msra.mxu0 0.0
        %2446 = vmatprep.subr.mxu0 0.0
        %2447 = vmatpush2.msra.mxu0 0.0
        %2448 = vmatprep.subr.mxu0 0.0
        %2449 = vmatpush2.msra.mxu0 0.0
        %2450 = vmatprep.subr.mxu0 0.0
        %2451 = vmatpush2.msra.mxu0 0.0
        %2452 = vmatprep.subr.mxu0 0.0
        %2453 = vmatpush2.msra.mxu0 0.0
        %2454 = vmatprep.subr.mxu0 0.0
        %2455 = vmatpush2.msra.mxu0 0.0
        %2456 = vmatprep.subr.mxu0 0.0
        %2457 = vmatpush2.msra.mxu0 0.0
        %2458 = vmatprep.subr.mxu0 0.0
        %2459 = vmatpush2.msra.mxu0 0.0
        %2460 = vmatprep.subr.mxu0 0.0
        %2461 = vmatpush2.msra.mxu0 0.0
        %2462 = vmatprep.subr.mxu0 0.0
        %2463 = vmatpush2.msra.mxu0 0.0
        %2464 = vmatprep.subr.mxu0 0.0
        %2465 = vmatpush2.msra.mxu0 0.0
        %2466 = vmatprep.subr.mxu0 0.0
        %2467 = vmatpush2.msra.mxu0 0.0
        %2468 = vmatprep.subr.mxu0 0.0
        %2469 = vmatpush2.msra.mxu0 0.0
        %2470 = vmatprep.subr.mxu0 0.0
        %2471 = vmatpush2.msra.mxu0 0.0
        %2472 = vmatprep.subr.mxu0 0.0
        %2473 = vmatpush2.msra.mxu0 0.0
        %2474 = vmatprep.subr.mxu0 0.0
        %2475 = vmatpush2.msra.mxu0 0.0
        %2476 = vmatprep.mubr.f32.mxu0 0.0
        %2477 = vmatmul.mubr.f32.gmra.mxu0 %v2410
        %v2478 = vpop.f32.mrf.mxu0
        %v2479 = vadd.f32 %v1870, %v2478
        %v2480 = vpop.f32.mrf.mxu0
        %2481 = vdwg.mxu0
        %v2483 = vrot.slane %v2479, 1
        %v2486 = vadd.f32 %v2402, %v2479
        %v2487 = vadd.f32 %v2403, %v2483
        %v2488 = vxor.u32 %v2486, 2147483648
        %v2489 = vxor.u32 %v2487, 2147483648
        %v2490 = vmul.f32 %v2488, 1.442695
        %v2491 = vpow.pop %v2490
        %v2492 = vmul.f32 %v2489, 1.442695
        %v2493 = vpow.pop %v2492
        %v2494 = vadd.f32 %v2491, 1.0
        %v2495 = vadd.f32 %v2493, 1.0
        %v2496 = vrcp.pop %v2494
        %v2497 = vmul.f32 1.0, %v2496
        %v2498 = vrcp.pop %v2495
        %v2499 = vmul.f32 1.0, %v2498
        %2500 = vrot.lane.b32.xlu0 %v2479, 96
        %v2501 = vpop.permute.xlu0 %2500
        %2502 = vrot.lane.b32.xlu0 %v2483, 96
        %v2503 = vpop.permute.xlu0 %2502
        %v2506 = vmul.f32 %v2497, %v2501
        %v2507 = vmul.f32 %v2499, %v2503
        %2510 = vrot.lane.b32.xlu0 %v2506, 32
        %v2511 = vpop.permute.xlu0 %2510
        %2512 = vrot.lane.b32.xlu0 %v2507, 32
        %v2513 = vpop.permute.xlu0 %2512
        %v2516 = vadd.f32 %v2402, %v2511
        %v2517 = vadd.f32 %v2403, %v2513
        %v2518 = vtanh.pop %v2516
        %v2519 = vtanh.pop %v2517
        %v2520 = vsub.f32 1.0, %v2497
        %v2521 = vsub.f32 1.0, %v2499
        %2524 = vrot.lane.b32.xlu0 %v2518, 112
        %v2525 = vpop.permute.xlu0 %2524
        %2526 = vrot.lane.b32.xlu0 %v2519, 112
        %v2527 = vpop.permute.xlu0 %2526
        %v2530 = vmul.f32 %v2520, %v2525
        %v2531 = vmul.f32 %v2521, %v2527
        %v2532 = vmul.f32 %v2497, %v2400
        %v2533 = vmul.f32 %v2499, %v2401
        %v2534 = vadd.f32 %v2530, %v2532
        %v2535 = vadd.f32 %v2531, %v2533
        %v2536 = vld [vmem:[#allocation2 + $0x5] sm:$0x1]
        %v2537 = vld [vmem:[#allocation2 + $0xd] sm:$0x1]
        %v2540 = vrot.slane %v2535, 7
        %v2541 = vsel %vm2004, %v2540, %v2534
        %2542 = vrot.lane.b32.xlu0 %v2541, 112
        %v2543 = vpop.permute.xlu0 %2542
        %v2544 = vsel %vm608, %v2543, 0
        %2546 = vmatprep.subr.mxu0 0.0
        %2547 = vmatpush1.msra.mxu0 0.0
        %2548 = vmatprep.subr.mxu0 0.0
        %2549 = vmatpush1.msra.mxu0 0.0
        %2550 = vmatprep.subr.mxu0 0.0
        %2551 = vmatpush1.msra.mxu0 0.0
        %2552 = vmatprep.subr.mxu0 0.0
        %2553 = vmatpush1.msra.mxu0 0.0
        %2554 = vmatprep.subr.mxu0 0.0
        %2555 = vmatpush1.msra.mxu0 0.0
        %2556 = vmatprep.subr.mxu0 0.0
        %2557 = vmatpush1.msra.mxu0 0.0
        %2558 = vmatprep.subr.mxu0 0.0
        %2559 = vmatpush1.msra.mxu0 0.0
        %2560 = vmatprep.subr.mxu0 0.0
        %2561 = vmatpush1.msra.mxu0 0.0
        %2562 = vmatprep.subr.mxu0 0.0
        %2563 = vmatpush1.msra.mxu0 0.0
        %2564 = vmatprep.subr.mxu0 0.0
        %2565 = vmatpush1.msra.mxu0 0.0
        %2566 = vmatprep.subr.mxu0 0.0
        %2567 = vmatpush1.msra.mxu0 0.0
        %2568 = vmatprep.subr.mxu0 0.0
        %2569 = vmatpush1.msra.mxu0 0.0
        %2570 = vmatprep.subr.mxu0 0.0
        %2571 = vmatpush1.msra.mxu0 0.0
        %2572 = vmatprep.subr.mxu0 0.0
        %2573 = vmatpush1.msra.mxu0 0.0
        %2574 = vmatprep.subr.mxu0 0.0
        %2575 = vmatpush1.msra.mxu0 %v1862
        %2576 = vmatprep.subr.mxu0 0.0
        %2577 = vmatpush1.msra.mxu0 %v1861
        %2578 = vmatprep.subr.mxu0 0.0
        %2579 = vmatpush2.msra.mxu0 0.0
        %2580 = vmatprep.subr.mxu0 0.0
        %2581 = vmatpush2.msra.mxu0 0.0
        %2582 = vmatprep.subr.mxu0 0.0
        %2583 = vmatpush2.msra.mxu0 0.0
        %2584 = vmatprep.subr.mxu0 0.0
        %2585 = vmatpush2.msra.mxu0 0.0
        %2586 = vmatprep.subr.mxu0 0.0
        %2587 = vmatpush2.msra.mxu0 0.0
        %2588 = vmatprep.subr.mxu0 0.0
        %2589 = vmatpush2.msra.mxu0 0.0
        %2590 = vmatprep.subr.mxu0 0.0
        %2591 = vmatpush2.msra.mxu0 0.0
        %2592 = vmatprep.subr.mxu0 0.0
        %2593 = vmatpush2.msra.mxu0 0.0
        %2594 = vmatprep.subr.mxu0 0.0
        %2595 = vmatpush2.msra.mxu0 0.0
        %2596 = vmatprep.subr.mxu0 0.0
        %2597 = vmatpush2.msra.mxu0 0.0
        %2598 = vmatprep.subr.mxu0 0.0
        %2599 = vmatpush2.msra.mxu0 0.0
        %2600 = vmatprep.subr.mxu0 0.0
        %2601 = vmatpush2.msra.mxu0 0.0
        %2602 = vmatprep.subr.mxu0 0.0
        %2603 = vmatpush2.msra.mxu0 0.0
        %2604 = vmatprep.subr.mxu0 0.0
        %2605 = vmatpush2.msra.mxu0 0.0
        %2606 = vmatprep.subr.mxu0 0.0
        %2607 = vmatpush2.msra.mxu0 0.0
        %2608 = vmatprep.subr.mxu0 0.0
        %2609 = vmatpush2.msra.mxu0 0.0
        %2610 = vmatprep.mubr.f32.mxu0 0.0
        %2611 = vmatmul.mubr.f32.gmra.mxu0 %v2544
        %v2612 = vpop.f32.mrf.mxu0
        %v2613 = vadd.f32 %v1870, %v2612
        %v2614 = vpop.f32.mrf.mxu0
        %2615 = vdwg.mxu0
        %v2617 = vrot.slane %v2613, 1
        %v2620 = vadd.f32 %v2536, %v2613
        %v2621 = vadd.f32 %v2537, %v2617
        %v2622 = vxor.u32 %v2620, 2147483648
        %v2623 = vxor.u32 %v2621, 2147483648
        %v2624 = vmul.f32 %v2622, 1.442695
        %v2625 = vpow.pop %v2624
        %v2626 = vmul.f32 %v2623, 1.442695
        %v2627 = vpow.pop %v2626
        %v2628 = vadd.f32 %v2625, 1.0
        %v2629 = vadd.f32 %v2627, 1.0
        %v2630 = vrcp.pop %v2628
        %v2631 = vmul.f32 1.0, %v2630
        %v2632 = vrcp.pop %v2629
        %v2633 = vmul.f32 1.0, %v2632
        %2634 = vrot.lane.b32.xlu0 %v2613, 96
        %v2635 = vpop.permute.xlu0 %2634
        %2636 = vrot.lane.b32.xlu0 %v2617, 96
        %v2637 = vpop.permute.xlu0 %2636
        %v2640 = vmul.f32 %v2631, %v2635
        %v2641 = vmul.f32 %v2633, %v2637
        %2644 = vrot.lane.b32.xlu0 %v2640, 32
        %v2645 = vpop.permute.xlu0 %2644
        %2646 = vrot.lane.b32.xlu0 %v2641, 32
        %v2647 = vpop.permute.xlu0 %2646
        %v2650 = vadd.f32 %v2536, %v2645
        %v2651 = vadd.f32 %v2537, %v2647
        %v2652 = vtanh.pop %v2650
        %v2653 = vtanh.pop %v2651
        %v2654 = vsub.f32 1.0, %v2631
        %v2655 = vsub.f32 1.0, %v2633
        %2658 = vrot.lane.b32.xlu0 %v2652, 112
        %v2659 = vpop.permute.xlu0 %2658
        %2660 = vrot.lane.b32.xlu0 %v2653, 112
        %v2661 = vpop.permute.xlu0 %2660
        %v2664 = vmul.f32 %v2654, %v2659
        %v2665 = vmul.f32 %v2655, %v2661
        %v2666 = vmul.f32 %v2631, %v2534
        %v2667 = vmul.f32 %v2633, %v2535
        %v2668 = vadd.f32 %v2664, %v2666
        %v2669 = vadd.f32 %v2665, %v2667
        %v2670 = vld [vmem:[#allocation2 + $0x6] sm:$0x1]
        %v2671 = vld [vmem:[#allocation2 + $0xe] sm:$0x1]
        %v2674 = vrot.slane %v2669, 7
        %v2675 = vsel %vm2004, %v2674, %v2668
        %2676 = vrot.lane.b32.xlu0 %v2675, 112
        %v2677 = vpop.permute.xlu0 %2676
        %v2678 = vsel %vm608, %v2677, 0
        %2680 = vmatprep.subr.mxu0 0.0
        %2681 = vmatpush1.msra.mxu0 0.0
        %2682 = vmatprep.subr.mxu0 0.0
        %2683 = vmatpush1.msra.mxu0 0.0
        %2684 = vmatprep.subr.mxu0 0.0
        %2685 = vmatpush1.msra.mxu0 0.0
        %2686 = vmatprep.subr.mxu0 0.0
        %2687 = vmatpush1.msra.mxu0 0.0
        %2688 = vmatprep.subr.mxu0 0.0
        %2689 = vmatpush1.msra.mxu0 0.0
        %2690 = vmatprep.subr.mxu0 0.0
        %2691 = vmatpush1.msra.mxu0 0.0
        %2692 = vmatprep.subr.mxu0 0.0
        %2693 = vmatpush1.msra.mxu0 0.0
        %2694 = vmatprep.subr.mxu0 0.0
        %2695 = vmatpush1.msra.mxu0 0.0
        %2696 = vmatprep.subr.mxu0 0.0
        %2697 = vmatpush1.msra.mxu0 0.0
        %2698 = vmatprep.subr.mxu0 0.0
        %2699 = vmatpush1.msra.mxu0 0.0
        %2700 = vmatprep.subr.mxu0 0.0
        %2701 = vmatpush1.msra.mxu0 0.0
        %2702 = vmatprep.subr.mxu0 0.0
        %2703 = vmatpush1.msra.mxu0 0.0
        %2704 = vmatprep.subr.mxu0 0.0
        %2705 = vmatpush1.msra.mxu0 0.0
        %2706 = vmatprep.subr.mxu0 0.0
        %2707 = vmatpush1.msra.mxu0 0.0
        %2708 = vmatprep.subr.mxu0 0.0
        %2709 = vmatpush1.msra.mxu0 %v1862
        %2710 = vmatprep.subr.mxu0 0.0
        %2711 = vmatpush1.msra.mxu0 %v1861
        %2712 = vmatprep.subr.mxu0 0.0
        %2713 = vmatpush2.msra.mxu0 0.0
        %2714 = vmatprep.subr.mxu0 0.0
        %2715 = vmatpush2.msra.mxu0 0.0
        %2716 = vmatprep.subr.mxu0 0.0
        %2717 = vmatpush2.msra.mxu0 0.0
        %2718 = vmatprep.subr.mxu0 0.0
        %2719 = vmatpush2.msra.mxu0 0.0
        %2720 = vmatprep.subr.mxu0 0.0
        %2721 = vmatpush2.msra.mxu0 0.0
        %2722 = vmatprep.subr.mxu0 0.0
        %2723 = vmatpush2.msra.mxu0 0.0
        %2724 = vmatprep.subr.mxu0 0.0
        %2725 = vmatpush2.msra.mxu0 0.0
        %2726 = vmatprep.subr.mxu0 0.0
        %2727 = vmatpush2.msra.mxu0 0.0
        %2728 = vmatprep.subr.mxu0 0.0
        %2729 = vmatpush2.msra.mxu0 0.0
        %2730 = vmatprep.subr.mxu0 0.0
        %2731 = vmatpush2.msra.mxu0 0.0
        %2732 = vmatprep.subr.mxu0 0.0
        %2733 = vmatpush2.msra.mxu0 0.0
        %2734 = vmatprep.subr.mxu0 0.0
        %2735 = vmatpush2.msra.mxu0 0.0
        %2736 = vmatprep.subr.mxu0 0.0
        %2737 = vmatpush2.msra.mxu0 0.0
        %2738 = vmatprep.subr.mxu0 0.0
        %2739 = vmatpush2.msra.mxu0 0.0
        %2740 = vmatprep.subr.mxu0 0.0
        %2741 = vmatpush2.msra.mxu0 0.0
        %2742 = vmatprep.subr.mxu0 0.0
        %2743 = vmatpush2.msra.mxu0 0.0
        %2744 = vmatprep.mubr.f32.mxu0 0.0
        %2745 = vmatmul.mubr.f32.gmra.mxu0 %v2678
        %v2746 = vpop.f32.mrf.mxu0
        %v2747 = vadd.f32 %v1870, %v2746
        %v2748 = vpop.f32.mrf.mxu0
        %2749 = vdwg.mxu0
        %v2751 = vrot.slane %v2747, 1
        %v2754 = vadd.f32 %v2670, %v2747
        %v2755 = vadd.f32 %v2671, %v2751
        %v2756 = vxor.u32 %v2754, 2147483648
        %v2757 = vxor.u32 %v2755, 2147483648
        %v2758 = vmul.f32 %v2756, 1.442695
        %v2759 = vpow.pop %v2758
        %v2760 = vmul.f32 %v2757, 1.442695
        %v2761 = vpow.pop %v2760
        %v2762 = vadd.f32 %v2759, 1.0
        %v2763 = vadd.f32 %v2761, 1.0
        %v2764 = vrcp.pop %v2762
        %v2765 = vmul.f32 1.0, %v2764
        %v2766 = vrcp.pop %v2763
        %v2767 = vmul.f32 1.0, %v2766
        %2768 = vrot.lane.b32.xlu0 %v2747, 96
        %v2769 = vpop.permute.xlu0 %2768
        %2770 = vrot.lane.b32.xlu0 %v2751, 96
        %v2771 = vpop.permute.xlu0 %2770
        %v2774 = vmul.f32 %v2765, %v2769
        %v2775 = vmul.f32 %v2767, %v2771
        %2778 = vrot.lane.b32.xlu0 %v2774, 32
        %v2779 = vpop.permute.xlu0 %2778
        %2780 = vrot.lane.b32.xlu0 %v2775, 32
        %v2781 = vpop.permute.xlu0 %2780
        %v2784 = vadd.f32 %v2670, %v2779
        %v2785 = vadd.f32 %v2671, %v2781
        %v2786 = vtanh.pop %v2784
        %v2787 = vtanh.pop %v2785
        %v2788 = vsub.f32 1.0, %v2765
        %v2789 = vsub.f32 1.0, %v2767
        %2792 = vrot.lane.b32.xlu0 %v2786, 112
        %v2793 = vpop.permute.xlu0 %2792
        %2794 = vrot.lane.b32.xlu0 %v2787, 112
        %v2795 = vpop.permute.xlu0 %2794
        %v2798 = vmul.f32 %v2788, %v2793
        %v2799 = vmul.f32 %v2789, %v2795
        %v2800 = vmul.f32 %v2765, %v2668
        %v2801 = vmul.f32 %v2767, %v2669
        %v2802 = vadd.f32 %v2798, %v2800
        %v2803 = vadd.f32 %v2799, %v2801
        %v2804 = vld [vmem:[#allocation2 + $0x7] sm:$0x1]
        %v2805 = vld [vmem:[#allocation2 + $0xf] sm:$0x1]
        %v2808 = vrot.slane %v2803, 7
        %v2809 = vsel %vm2004, %v2808, %v2802
        %2810 = vrot.lane.b32.xlu0 %v2809, 112
        %v2811 = vpop.permute.xlu0 %2810
        %v2812 = vsel %vm608, %v2811, 0
        %2814 = vmatprep.subr.mxu0 0.0
        %2815 = vmatpush1.msra.mxu0 0.0
        %2816 = vmatprep.subr.mxu0 0.0
        %2817 = vmatpush1.msra.mxu0 0.0
        %2818 = vmatprep.subr.mxu0 0.0
        %2819 = vmatpush1.msra.mxu0 0.0
        %2820 = vmatprep.subr.mxu0 0.0
        %2821 = vmatpush1.msra.mxu0 0.0
        %2822 = vmatprep.subr.mxu0 0.0
        %2823 = vmatpush1.msra.mxu0 0.0
        %2824 = vmatprep.subr.mxu0 0.0
        %2825 = vmatpush1.msra.mxu0 0.0
        %2826 = vmatprep.subr.mxu0 0.0
        %2827 = vmatpush1.msra.mxu0 0.0
        %2828 = vmatprep.subr.mxu0 0.0
        %2829 = vmatpush1.msra.mxu0 0.0
        %2830 = vmatprep.subr.mxu0 0.0
        %2831 = vmatpush1.msra.mxu0 0.0
        %2832 = vmatprep.subr.mxu0 0.0
        %2833 = vmatpush1.msra.mxu0 0.0
        %2834 = vmatprep.subr.mxu0 0.0
        %2835 = vmatpush1.msra.mxu0 0.0
        %2836 = vmatprep.subr.mxu0 0.0
        %2837 = vmatpush1.msra.mxu0 0.0
        %2838 = vmatprep.subr.mxu0 0.0
        %2839 = vmatpush1.msra.mxu0 0.0
        %2840 = vmatprep.subr.mxu0 0.0
        %2841 = vmatpush1.msra.mxu0 0.0
        %2842 = vmatprep.subr.mxu0 0.0
        %2843 = vmatpush1.msra.mxu0 %v1862
        %2844 = vmatprep.subr.mxu0 0.0
        %2845 = vmatpush1.msra.mxu0 %v1861
        %2846 = vmatprep.subr.mxu0 0.0
        %2847 = vmatpush2.msra.mxu0 0.0
        %2848 = vmatprep.subr.mxu0 0.0
        %2849 = vmatpush2.msra.mxu0 0.0
        %2850 = vmatprep.subr.mxu0 0.0
        %2851 = vmatpush2.msra.mxu0 0.0
        %2852 = vmatprep.subr.mxu0 0.0
        %2853 = vmatpush2.msra.mxu0 0.0
        %2854 = vmatprep.subr.mxu0 0.0
        %2855 = vmatpush2.msra.mxu0 0.0
        %2856 = vmatprep.subr.mxu0 0.0
        %2857 = vmatpush2.msra.mxu0 0.0
        %2858 = vmatprep.subr.mxu0 0.0
        %2859 = vmatpush2.msra.mxu0 0.0
        %2860 = vmatprep.subr.mxu0 0.0
        %2861 = vmatpush2.msra.mxu0 0.0
        %2862 = vmatprep.subr.mxu0 0.0
        %2863 = vmatpush2.msra.mxu0 0.0
        %2864 = vmatprep.subr.mxu0 0.0
        %2865 = vmatpush2.msra.mxu0 0.0
        %2866 = vmatprep.subr.mxu0 0.0
        %2867 = vmatpush2.msra.mxu0 0.0
        %2868 = vmatprep.subr.mxu0 0.0
        %2869 = vmatpush2.msra.mxu0 0.0
        %2870 = vmatprep.subr.mxu0 0.0
        %2871 = vmatpush2.msra.mxu0 0.0
        %2872 = vmatprep.subr.mxu0 0.0
        %2873 = vmatpush2.msra.mxu0 0.0
        %2874 = vmatprep.subr.mxu0 0.0
        %2875 = vmatpush2.msra.mxu0 0.0
        %2876 = vmatprep.subr.mxu0 0.0
        %2877 = vmatpush2.msra.mxu0 0.0
        %2878 = vmatprep.mubr.f32.mxu0 0.0
        %2879 = vmatmul.mubr.f32.gmra.mxu0 %v2812
        %v2880 = vpop.f32.mrf.mxu0
        %v2881 = vadd.f32 %v1870, %v2880
        %v2882 = vpop.f32.mrf.mxu0
        %2883 = vdwg.mxu0
        %v2885 = vrot.slane %v2881, 1
        %v2888 = vadd.f32 %v2804, %v2881
        %v2889 = vadd.f32 %v2805, %v2885
        %v2890 = vxor.u32 %v2888, 2147483648
        %v2891 = vxor.u32 %v2889, 2147483648
        %v2892 = vmul.f32 %v2890, 1.442695
        %v2893 = vpow.pop %v2892
        %v2894 = vmul.f32 %v2891, 1.442695
        %v2895 = vpow.pop %v2894
        %v2896 = vadd.f32 %v2893, 1.0
        %v2897 = vadd.f32 %v2895, 1.0
        %v2898 = vrcp.pop %v2896
        %v2899 = vmul.f32 1.0, %v2898
        %v2900 = vrcp.pop %v2897
        %v2901 = vmul.f32 1.0, %v2900
        %2902 = vrot.lane.b32.xlu0 %v2881, 96
        %v2903 = vpop.permute.xlu0 %2902
        %2904 = vrot.lane.b32.xlu0 %v2885, 96
        %v2905 = vpop.permute.xlu0 %2904
        %v2908 = vmul.f32 %v2899, %v2903
        %v2909 = vmul.f32 %v2901, %v2905
        %2912 = vrot.lane.b32.xlu0 %v2908, 32
        %v2913 = vpop.permute.xlu0 %2912
        %2914 = vrot.lane.b32.xlu0 %v2909, 32
        %v2915 = vpop.permute.xlu0 %2914
        %v2918 = vadd.f32 %v2804, %v2913
        %v2919 = vadd.f32 %v2805, %v2915
        %v2920 = vtanh.pop %v2918
        %v2921 = vtanh.pop %v2919
        %v2922 = vsub.f32 1.0, %v2899
        %v2923 = vsub.f32 1.0, %v2901
        %2926 = vrot.lane.b32.xlu0 %v2920, 112
        %v2927 = vpop.permute.xlu0 %2926
        %2928 = vrot.lane.b32.xlu0 %v2921, 112
        %v2929 = vpop.permute.xlu0 %2928
        %v2932 = vmul.f32 %v2922, %v2927
        %v2933 = vmul.f32 %v2923, %v2929
        %v2934 = vmul.f32 %v2899, %v2802
        %v2935 = vmul.f32 %v2901, %v2803
        %v2936 = vadd.f32 %v2932, %v2934
        %v2937 = vadd.f32 %v2933, %v2935
        %v2938 = vld [vmem:[%s11] sm:$0xff]
        %v2939 = vld [vmem:[%s11 + $0x8] sm:$0xff]
        %v2940 = vld [vmem:[%s12] sm:$0x1]
        %v2942 = vlaneseq
        %v2943 = vshrl.u32 %v2942, 7
        %v2944 = vsub.s32 0, %v2943
        %v2945 = vrot.slane %v2940, %v2944
        %v2949 = vrot.slane %v2937, 7
        %v2950 = vsel %vm2004, %v2949, %v2936
        %2951 = vrot.lane.b32.xlu0 %v2950, 112
        %v2952 = vpop.permute.xlu0 %2951
        %v2953 = vsel %vm608, %v2952, 0
        %2955 = vmatprep.subr.mxu0 0.0
        %2956 = vmatpush1.msra.mxu0 0.0
        %2957 = vmatprep.subr.mxu0 0.0
        %2958 = vmatpush1.msra.mxu0 0.0
        %2959 = vmatprep.subr.mxu0 0.0
        %2960 = vmatpush1.msra.mxu0 0.0
        %2961 = vmatprep.subr.mxu0 0.0
        %2962 = vmatpush1.msra.mxu0 0.0
        %2963 = vmatprep.subr.mxu0 0.0
        %2964 = vmatpush1.msra.mxu0 0.0
        %2965 = vmatprep.subr.mxu0 0.0
        %2966 = vmatpush1.msra.mxu0 0.0
        %2967 = vmatprep.subr.mxu0 0.0
        %2968 = vmatpush1.msra.mxu0 0.0
        %2969 = vmatprep.subr.mxu0 0.0
        %2970 = vmatpush1.msra.mxu0 0.0
        %2971 = vmatprep.subr.mxu0 0.0
        %2972 = vmatpush1.msra.mxu0 0.0
        %2973 = vmatprep.subr.mxu0 0.0
        %2974 = vmatpush1.msra.mxu0 0.0
        %2975 = vmatprep.subr.mxu0 0.0
        %2976 = vmatpush1.msra.mxu0 0.0
        %2977 = vmatprep.subr.mxu0 0.0
        %2978 = vmatpush1.msra.mxu0 0.0
        %2979 = vmatprep.subr.mxu0 0.0
        %2980 = vmatpush1.msra.mxu0 0.0
        %2981 = vmatprep.subr.mxu0 0.0
        %2982 = vmatpush1.msra.mxu0 0.0
        %2983 = vmatprep.subr.mxu0 0.0
        %2984 = vmatpush1.msra.mxu0 %v2939
        %2985 = vmatprep.subr.mxu0 0.0
        %2986 = vmatpush1.msra.mxu0 %v2938
        %2987 = vmatprep.subr.mxu0 0.0
        %2988 = vmatpush2.msra.mxu0 0.0
        %2989 = vmatprep.subr.mxu0 0.0
        %2990 = vmatpush2.msra.mxu0 0.0
        %2991 = vmatprep.subr.mxu0 0.0
        %2992 = vmatpush2.msra.mxu0 0.0
        %2993 = vmatprep.subr.mxu0 0.0
        %2994 = vmatpush2.msra.mxu0 0.0
        %2995 = vmatprep.subr.mxu0 0.0
        %2996 = vmatpush2.msra.mxu0 0.0
        %2997 = vmatprep.subr.mxu0 0.0
        %2998 = vmatpush2.msra.mxu0 0.0
        %2999 = vmatprep.subr.mxu0 0.0
        %3000 = vmatpush2.msra.mxu0 0.0
        %3001 = vmatprep.subr.mxu0 0.0
        %3002 = vmatpush2.msra.mxu0 0.0
        %3003 = vmatprep.subr.mxu0 0.0
        %3004 = vmatpush2.msra.mxu0 0.0
        %3005 = vmatprep.subr.mxu0 0.0
        %3006 = vmatpush2.msra.mxu0 0.0
        %3007 = vmatprep.subr.mxu0 0.0
        %3008 = vmatpush2.msra.mxu0 0.0
        %3009 = vmatprep.subr.mxu0 0.0
        %3010 = vmatpush2.msra.mxu0 0.0
        %3011 = vmatprep.subr.mxu0 0.0
        %3012 = vmatpush2.msra.mxu0 0.0
        %3013 = vmatprep.subr.mxu0 0.0
        %3014 = vmatpush2.msra.mxu0 0.0
        %3015 = vmatprep.subr.mxu0 0.0
        %3016 = vmatpush2.msra.mxu0 0.0
        %3017 = vmatprep.subr.mxu0 0.0
        %3018 = vmatpush2.msra.mxu0 0.0
        %3019 = vmatprep.mubr.f32.mxu0 0.0
        %3020 = vmatmul.mubr.f32.gmra.mxu0 %v2953
        %v3021 = vpop.f32.mrf.mxu0
        %v3022 = vadd.f32 %v2945, %v3021
        %v3023 = vpop.f32.mrf.mxu0
        %3024 = vdwg.mxu0
        %vm3025 = vcmask 25600
        %3026 = vst.msk [vmem:[%s478] sm:$0x3] %vm3025, %v3022
        %s3027 = sand.u32 %s320, 1
        %s3028 = scalar_lea.sflag [#allocation5], %s3027
        %s3029 = sand.u32 %s320, 1
        %s3030 = smul.addr %s3029, 2
        %s3031 = scalar_lea.vmem [#allocation8], %s3030
        // Predicated region
        $region81: #{tpu_custom_call.1} parent=71 // pred_check
          %p3032 = pneg %p330
        $region82: #{tpu_custom_call.1} parent=71 // pred_check_branch
          %3034 = sbr.rel (%p3032) target = $region84
        $region83: #{tpu_custom_call.1} parent=71 // pred_region
          %s3036 = ssub.s32 32, 32
          %3037 = vsyncadd %s3028, %s3036
          %s3038 = smul.addr %s29, 32
          %s3039 = scalar_lea.hbm %s13, %s3038
          %s3041 = sshll.u32 %s3031, 4
          %s3042 = int_to_ptr.vmem [resolvable:$true] %s3041
          %3044 = dma.vmem_to_hbm [thread:$0]  %s3042, 32, %s3039, %s3028
        $region84: #{tpu_custom_call.1} parent=71 // pred_fallthru
          _
      $region72: #{tpu_custom_call.1} parent=5 // pred_fallthru
        _
      %p3045 = scmp.le.s32.totalorder 2, %s24
      // Predicated region
      $region85: #{tpu_custom_call.1} parent=5 // pred_check
        %p3046 = pneg %p3045
      $region86: #{tpu_custom_call.1} parent=5 // pred_check_branch
        %3048 = sbr.rel (%p3046) target = $region88
      $region87: #{tpu_custom_call.1} parent=5 // pred_region
        %s3049 = ssub.s32 %s24, 2
        // Predicated region
        $region89: #{tpu_custom_call.1} parent=87 // pred_check
          %p3050 = pneg %p336
        $region90: #{tpu_custom_call.1} parent=87 // pred_check_branch
          %3052 = sbr.rel (%p3050) target = $region92
        $region91: #{tpu_custom_call.1} parent=87 // pred_region
          %s3053 = sand.u32 %s321, 1
          %s3054 = scalar_lea.sflag [#allocation5], %s3053
          %s3055 = sand.u32 %s321, 1
          %s3056 = smul.addr %s3055, 2
          %s3057 = scalar_lea.vmem [#allocation8], %s3056
          %3058 = dma.done %s3054, 32
        $region92: #{tpu_custom_call.1} parent=87 // pred_fallthru
          _
      $region88: #{tpu_custom_call.1} parent=5 // pred_fallthru
        _
    $region6: #{tpu_custom_call.1} parent=1 // loop_footer
      %s28 = sadd.s32 1, %s24
    $region7: #{tpu_custom_call.1} parent=1 // loop_footer_branch
      %23 = sbr.rel target = $region3
    $region8: #{tpu_custom_call.1} parent=1 // loop_exit
      _
    %3059 = vsyncpa [#allocation4], 1
    %s3060 = scalar_lea.sflag [#allocation4], 1
    %3061 = vsyncpa %s3060, 1
    %3062 = vsyncpa [#allocation7], 1
    %3063 = vsyncpa [#allocation5], 1
    %s3064 = scalar_lea.sflag [#allocation5], 1
    %3065 = vsyncpa %s3064, 1

</llo_original>
